<compile_context>
chip_gen: v6e
topology: v6e:2x2x1
jax: 0.10.0
libtpu: 0.0.40
codegen_flags: <defaults>
</compile_context>

<pallas_src>
import jax
import jax.numpy as jnp
from jax import lax
from jax.experimental import pallas as pl
from jax.experimental.pallas import tpu as pltpu


# ---------------------------------------------------------------------------
# Fused kernel: nearest-2x upsample + depthwise 3x3 + BN + SiLU + 1x1 conv
# ---------------------------------------------------------------------------
def _eucb_fused_kernel(xp_ref, wtap_ref, shift_ref, pwt_ref, bias_ref, out_ref):
    # xp_ref   : (H+2, W+2, C)  zero-padded input, one batch element, channels-last
    # wtap_ref : (16, C) f32    BN-scale-folded phase/tap weights
    # shift_ref: (1, C)  f32    folded BN shift
    # pwt_ref  : (C, C)  f32    1x1 conv weights, transposed to [c_in, c_out]
    # bias_ref : (1, C)  f32    1x1 conv bias
    # out_ref  : (4, H*W, C)    phase-layout output, phase p = py*2 + px
    HW, C = out_ref.shape[1], out_ref.shape[2]
    H = xp_ref.shape[0] - 2
    W = xp_ref.shape[1] - 2

    xp = xp_ref[...].astype(jnp.float32)          # (H+2, W+2, C)
    wt = wtap_ref[...]                            # (16, C)
    shift = shift_ref[...]                        # (1, C)  -> broadcasts over (H, W, C)
    pwt = pwt_ref[...]                            # (C, C)
    bias = bias_ref[...]                          # (1, C)

    # The 9 shifted (H, W, C) views, built once and shared by all 4 phases / channels.
    xs = {(s, t): xp[s:s + H, t:t + W, :] for s in range(3) for t in range(3)}

    phases = []
    for py in range(2):
        for px in range(2):
            k0 = (py * 2 + px) * 4
            # Depthwise phase stencil (BN scale already folded into the taps): pure
            # VPU broadcast-MACs, channel-vectorized across lanes.
            d = (xs[(py, px)]             * wt[k0 + 0]
                 + xs[(py, px + 1)]       * wt[k0 + 1]
                 + xs[(py + 1, px)]       * wt[k0 + 2]
                 + xs[(py + 1, px + 1)]   * wt[k0 + 3])
            y = d + shift                          # BN shift
            y = y * jax.nn.sigmoid(y)              # SiLU (EUP)
            phases.append(y.reshape(HW, C))

    # channel_shuffle with groups == C is statically the identity.
    # 1x1 conv for all four phases as ONE MXU matmul, then one contiguous store.
    y_all = jnp.concatenate(phases, axis=0)                      # (4*H*W, C)
    o_all = jnp.dot(y_all, pwt, preferred_element_type=jnp.float32) + bias
    out_ref[...] = o_all.reshape(4, HW, C).astype(out_ref.dtype)


# ---------------------------------------------------------------------------
# Host-side parameter folding
# ---------------------------------------------------------------------------
def _phase_tap_weights(dw_w, bn_scale):
    """Collapse the 3x3 depthwise kernel into 16 = (2x2 phases) * (2x2 taps) per-channel
    weights for the fused upsample+conv, with the BN scale folded in.  Returns (16, C).
    Tap index k = ((py*2 + px)*2 + a)*2 + b reads xp[i+py+a, j+px+b, c] (xp = 1-padded x)."""
    dw_w = dw_w.astype(jnp.float32)                    # (3, 3, C)
    sets = (((0,), (1, 2)), ((0, 1), (2,)))            # kernel row/col groups per phase/tap
    taps = []
    for py in range(2):
        for px in range(2):
            for a in range(2):
                for b in range(2):
                    w = jnp.zeros_like(dw_w[0, 0])
                    for dy in sets[py][a]:
                        for dx in sets[px][b]:
                            w = w + dw_w[dy, dx]
                    taps.append(w)
    return jnp.stack(taps, axis=0) * bn_scale.astype(jnp.float32)[None, :]   # (16, C)


# ---------------------------------------------------------------------------
# Wrapper
# ---------------------------------------------------------------------------
@jax.jit
def eucb_forward(x_nchw, dw_w, bn_scale, bn_shift, pw_w, pw_b):
    B, C, H, W = x_nchw.shape
    Hu, Wu = 2 * H, 2 * W
    dtype = x_nchw.dtype
    bpe = jnp.dtype(dtype).itemsize

    # Channels-last + 1-px zero halo, done once by XLA (keeps the kernel load-only).
    xp = jnp.pad(jnp.transpose(x_nchw, (0, 2, 3, 1)),
                 ((0, 0), (1, 1), (1, 1), (0, 0)))

    wtap = _phase_tap_weights(dw_w, bn_scale)                # (16, C) f32, BN scale folded
    shift = bn_shift.astype(jnp.float32).reshape(1, C)       # (1, C)
    pwt = pw_w.astype(jnp.float32).T                         # (C_in, C_out)
    bias = pw_b.astype(jnp.float32).reshape(1, C)            # (1, C)

    # VMEM / cost budgets derived from the actual block sizes (not hard-coded).
    in_block = (H + 2) * (W + 2) * C * bpe
    out_block = 4 * H * W * C * bpe
    param_bytes = (16 * C + C + C * C + C) * 4
    work_f32 = ((H + 2) * (W + 2) * C + 15 * H * W * C) * 4  # f32 intermediates
    vmem_bytes = int(2 * (in_block + out_block) + param_bytes + work_f32 + (2 << 20))
    vmem_bytes = max(min(vmem_bytes, 64 << 20), 4 << 20)     # stay under v7x per-TC VMEM

    cost = pl.CostEstimate(
        flops=int(B * 4 * H * W * C * (11 + 2 * C)),          # 4 taps + BN/SiLU + 1x1 MACs
        transcendentals=int(B * 4 * H * W * C),               # one sigmoid per out element
        bytes_accessed=int(B * (in_block + out_block) + param_bytes),
    )

    out_phase = pl.pallas_call(
        _eucb_fused_kernel,
        out_shape=jax.ShapeDtypeStruct((B, 4, H * W, C), dtype),
        grid=(B,),
        in_specs=[
            pl.BlockSpec((None, H + 2, W + 2, C), lambda b: (b, 0, 0, 0)),
            pl.BlockSpec((16, C), lambda b: (0, 0)),
            pl.BlockSpec((1, C), lambda b: (0, 0)),
            pl.BlockSpec((C, C), lambda b: (0, 0)),
            pl.BlockSpec((1, C), lambda b: (0, 0)),
        ],
        out_specs=pl.BlockSpec((None, 4, H * W, C), lambda b: (b, 0, 0, 0)),
        compiler_params=pltpu.CompilerParams(
            dimension_semantics=("parallel",),
            vmem_limit_bytes=vmem_bytes,
        ),
        cost_estimate=cost,
    )(xp, wtap, shift, pwt, bias)

    # Phase layout (B, 4, H*W, C) -> NCHW (B, C, 2H, 2W):
    #   out[b, c, 2i+py, 2j+px] = out_phase[b, py*2+px, i*W+j, c]
    out = out_phase.reshape(B, 2, 2, H, W, C)
    out = jnp.transpose(out, (0, 5, 3, 1, 4, 2)).reshape(B, C, Hu, Wu)
    return out


# ---------------------------------------------------------------------------
# Pure-JAX reference (for correctness check)
# ---------------------------------------------------------------------------
def eucb_reference(x_nchw, dw_w, bn_scale, bn_shift, pw_w, pw_b):
    B, C, H, W = x_nchw.shape
    x = jnp.transpose(x_nchw, (0, 2, 3, 1)).astype(jnp.float32)
    x = jnp.repeat(jnp.repeat(x, 2, axis=1), 2, axis=2)            # nearest 2x
    k = dw_w.astype(jnp.float32).reshape(3, 3, 1, C)               # HWIO, depthwise
    y = lax.conv_general_dilated(
        x, k, window_strides=(1, 1), padding="SAME",
        dimension_numbers=("NHWC", "HWIO", "NHWC"), feature_group_count=C)
    y = y * bn_scale[None, None, None, :] + bn_shift[None, None, None, :]
    y = y * jax.nn.sigmoid(y)
    # channel shuffle with groups == C is the identity
    o = jnp.einsum("bhwc,oc->bhwo", y, pw_w.astype(jnp.float32)) + pw_b[None, None, None, :]
    return jnp.transpose(o, (0, 3, 1, 2)).astype(x_nchw.dtype)


if __name__ == "__main__":
    B, C, H, W = 2, 4, 16, 16
    key = jax.random.PRNGKey(0)
    kx, k1, k2, k3, k4, k5, k6, k7 = jax.random.split(key, 8)

    x = jax.random.normal(kx, (B, C, H, W), jnp.float32)

    # Deterministic synthetic parameters (shapes implied by the module's __init__).
    dw_w = jax.random.normal(k1, (3, 3, C), jnp.float32) * 0.1    # depthwise 3x3, groups=C
    bn_gamma = 1.0 + 0.1 * jax.random.normal(k2, (C,), jnp.float32)
    bn_beta = 0.1 * jax.random.normal(k3, (C,), jnp.float32)
    bn_mean = 0.1 * jax.random.normal(k4, (C,), jnp.float32)
    bn_var = 0.5 + jax.random.uniform(k5, (C,), jnp.float32)
    pw_w = jax.random.normal(k6, (C, C), jnp.float32) * 0.1       # 1x1 conv (out, in)
    pw_b = jax.random.normal(k7, (C,), jnp.float32) * 0.1

    eps = 1e-3  # ultralytics-style Conv BN eps
    bn_scale = bn_gamma / jnp.sqrt(bn_var + eps)
    bn_shift = bn_beta - bn_mean * bn_scale

    out = eucb_forward(x, dw_w, bn_scale, bn_shift, pw_w, pw_b)
    out = jax.block_until_ready(out)

    ref = eucb_reference(x, dw_w, bn_scale, bn_shift, pw_w, pw_b)
    assert out.shape == (B, C, 2 * H, 2 * W), out.shape
    assert jnp.allclose(out, ref, atol=1e-4, rtol=1e-4), float(jnp.max(jnp.abs(out - ref)))

    print("KERNEL_OK")
</pallas_src>

<mosaic_0001>
module attributes {stable_mosaic.version = 11 : i64} {
  func.func @_eucb_fused_kernel(%arg0: i32, %arg1: memref<1x18x18x4xf32, #tpu.memory_space<vmem>>, %arg2: memref<16x4xf32, #tpu.memory_space<vmem>>, %arg3: memref<1x4xf32, #tpu.memory_space<vmem>>, %arg4: memref<4x4xf32, #tpu.memory_space<vmem>>, %arg5: memref<1x4xf32, #tpu.memory_space<vmem>>, %arg6: memref<1x4x256x4xf32, #tpu.memory_space<vmem>>) attributes {dimension_semantics = [#tpu.dimension_semantics<parallel>], iteration_bounds = array<i64: 2>, scalar_prefetch = 0 : i64, scratch_operands = 0 : i64, tpu.core_type = #tpu.core_type<tc>, window_params = [{transform_indices = @transform_0, window_bounds = array<i64: 1, 18, 18, 4>}, {pipeline_mode = #tpu.pipeline_mode<synchronous>, transform_indices = @transform_1, window_bounds = array<i64: 16, 4>}, {pipeline_mode = #tpu.pipeline_mode<synchronous>, transform_indices = @transform_2, window_bounds = array<i64: 1, 4>}, {pipeline_mode = #tpu.pipeline_mode<synchronous>, transform_indices = @transform_3, window_bounds = array<i64: 4, 4>}, {pipeline_mode = #tpu.pipeline_mode<synchronous>, transform_indices = @transform_4, window_bounds = array<i64: 1, 4>}, {transform_indices = @transform_5, window_bounds = array<i64: 1, 4, 256, 4>}]} {
    %c0 = arith.constant 0 : index
    %c0_0 = arith.constant 0 : index
    %c0_1 = arith.constant 0 : index
    %c0_2 = arith.constant 0 : index
    %0 = vector.load %arg1[%c0, %c0_0, %c0_1, %c0_2] : memref<1x18x18x4xf32, #tpu.memory_space<vmem>>, vector<1x18x18x4xf32>
    %1 = vector.shape_cast %0 : vector<1x18x18x4xf32> to vector<18x18x4xf32>
    %c0_3 = arith.constant 0 : index
    %c0_4 = arith.constant 0 : index
    %2 = vector.load %arg2[%c0_3, %c0_4] : memref<16x4xf32, #tpu.memory_space<vmem>>, vector<16x4xf32>
    %c0_5 = arith.constant 0 : index
    %c0_6 = arith.constant 0 : index
    %3 = vector.load %arg3[%c0_5, %c0_6] : memref<1x4xf32, #tpu.memory_space<vmem>>, vector<1x4xf32>
    %c0_7 = arith.constant 0 : index
    %c0_8 = arith.constant 0 : index
    %4 = vector.load %arg4[%c0_7, %c0_8] : memref<4x4xf32, #tpu.memory_space<vmem>>, vector<4x4xf32>
    %c0_9 = arith.constant 0 : index
    %c0_10 = arith.constant 0 : index
    %5 = vector.load %arg5[%c0_9, %c0_10] : memref<1x4xf32, #tpu.memory_space<vmem>>, vector<1x4xf32>
    %6 = vector.extract_strided_slice %1 {offsets = [0, 0, 0], sizes = [16, 16, 4], strides = [1, 1, 1]} : vector<18x18x4xf32> to vector<16x16x4xf32>
    %7 = vector.extract_strided_slice %1 {offsets = [0, 1, 0], sizes = [16, 16, 4], strides = [1, 1, 1]} : vector<18x18x4xf32> to vector<16x16x4xf32>
    %8 = vector.extract_strided_slice %1 {offsets = [0, 2, 0], sizes = [16, 16, 4], strides = [1, 1, 1]} : vector<18x18x4xf32> to vector<16x16x4xf32>
    %9 = vector.extract_strided_slice %1 {offsets = [1, 0, 0], sizes = [16, 16, 4], strides = [1, 1, 1]} : vector<18x18x4xf32> to vector<16x16x4xf32>
    %10 = vector.extract_strided_slice %1 {offsets = [1, 1, 0], sizes = [16, 16, 4], strides = [1, 1, 1]} : vector<18x18x4xf32> to vector<16x16x4xf32>
    %11 = vector.extract_strided_slice %1 {offsets = [1, 2, 0], sizes = [16, 16, 4], strides = [1, 1, 1]} : vector<18x18x4xf32> to vector<16x16x4xf32>
    %12 = vector.extract_strided_slice %1 {offsets = [2, 0, 0], sizes = [16, 16, 4], strides = [1, 1, 1]} : vector<18x18x4xf32> to vector<16x16x4xf32>
    %13 = vector.extract_strided_slice %1 {offsets = [2, 1, 0], sizes = [16, 16, 4], strides = [1, 1, 1]} : vector<18x18x4xf32> to vector<16x16x4xf32>
    %14 = vector.extract_strided_slice %1 {offsets = [2, 2, 0], sizes = [16, 16, 4], strides = [1, 1, 1]} : vector<18x18x4xf32> to vector<16x16x4xf32>
    %15 = vector.extract_strided_slice %2 {offsets = [0, 0], sizes = [1, 4], strides = [1, 1]} : vector<16x4xf32> to vector<1x4xf32>
    %16 = vector.shape_cast %15 : vector<1x4xf32> to vector<4xf32>
    %17 = vector.shape_cast %16 : vector<4xf32> to vector<1x1x4xf32>
    %18 = vector.broadcast %17 : vector<1x1x4xf32> to vector<16x16x4xf32>
    %19 = arith.mulf %6, %18 : vector<16x16x4xf32>
    %20 = vector.extract_strided_slice %2 {offsets = [1, 0], sizes = [1, 4], strides = [1, 1]} : vector<16x4xf32> to vector<1x4xf32>
    %21 = vector.shape_cast %20 : vector<1x4xf32> to vector<4xf32>
    %22 = vector.shape_cast %21 : vector<4xf32> to vector<1x1x4xf32>
    %23 = vector.broadcast %22 : vector<1x1x4xf32> to vector<16x16x4xf32>
    %24 = arith.mulf %7, %23 : vector<16x16x4xf32>
    %25 = arith.addf %19, %24 : vector<16x16x4xf32>
    %26 = vector.extract_strided_slice %2 {offsets = [2, 0], sizes = [1, 4], strides = [1, 1]} : vector<16x4xf32> to vector<1x4xf32>
    %27 = vector.shape_cast %26 : vector<1x4xf32> to vector<4xf32>
    %28 = vector.shape_cast %27 : vector<4xf32> to vector<1x1x4xf32>
    %29 = vector.broadcast %28 : vector<1x1x4xf32> to vector<16x16x4xf32>
    %30 = arith.mulf %9, %29 : vector<16x16x4xf32>
    %31 = arith.addf %25, %30 : vector<16x16x4xf32>
    %32 = vector.extract_strided_slice %2 {offsets = [3, 0], sizes = [1, 4], strides = [1, 1]} : vector<16x4xf32> to vector<1x4xf32>
    %33 = vector.shape_cast %32 : vector<1x4xf32> to vector<4xf32>
    %34 = vector.shape_cast %33 : vector<4xf32> to vector<1x1x4xf32>
    %35 = vector.broadcast %34 : vector<1x1x4xf32> to vector<16x16x4xf32>
    %36 = arith.mulf %10, %35 : vector<16x16x4xf32>
    %37 = arith.addf %31, %36 : vector<16x16x4xf32>
    %38 = vector.shape_cast %3 : vector<1x4xf32> to vector<1x1x4xf32>
    %39 = vector.broadcast %38 : vector<1x1x4xf32> to vector<16x16x4xf32>
    %40 = arith.addf %37, %39 : vector<16x16x4xf32>
    %41 = arith.negf %40 : vector<16x16x4xf32>
    %42 = math.exp %41 : vector<16x16x4xf32>
    %cst = arith.constant 1.000000e+00 : f32
    %43 = vector.broadcast %cst : f32 to vector<16x16x4xf32>
    %44 = arith.addf %43, %42 : vector<16x16x4xf32>
    %45 = arith.divf %43, %44 : vector<16x16x4xf32>
    %46 = arith.mulf %40, %45 : vector<16x16x4xf32>
    %47 = vector.shape_cast %46 : vector<16x16x4xf32> to vector<256x4xf32>
    %48 = vector.extract_strided_slice %2 {offsets = [4, 0], sizes = [1, 4], strides = [1, 1]} : vector<16x4xf32> to vector<1x4xf32>
    %49 = vector.shape_cast %48 : vector<1x4xf32> to vector<4xf32>
    %50 = vector.shape_cast %49 : vector<4xf32> to vector<1x1x4xf32>
    %51 = vector.broadcast %50 : vector<1x1x4xf32> to vector<16x16x4xf32>
    %52 = arith.mulf %7, %51 : vector<16x16x4xf32>
    %53 = vector.extract_strided_slice %2 {offsets = [5, 0], sizes = [1, 4], strides = [1, 1]} : vector<16x4xf32> to vector<1x4xf32>
    %54 = vector.shape_cast %53 : vector<1x4xf32> to vector<4xf32>
    %55 = vector.shape_cast %54 : vector<4xf32> to vector<1x1x4xf32>
    %56 = vector.broadcast %55 : vector<1x1x4xf32> to vector<16x16x4xf32>
    %57 = arith.mulf %8, %56 : vector<16x16x4xf32>
    %58 = arith.addf %52, %57 : vector<16x16x4xf32>
    %59 = vector.extract_strided_slice %2 {offsets = [6, 0], sizes = [1, 4], strides = [1, 1]} : vector<16x4xf32> to vector<1x4xf32>
    %60 = vector.shape_cast %59 : vector<1x4xf32> to vector<4xf32>
    %61 = vector.shape_cast %60 : vector<4xf32> to vector<1x1x4xf32>
    %62 = vector.broadcast %61 : vector<1x1x4xf32> to vector<16x16x4xf32>
    %63 = arith.mulf %10, %62 : vector<16x16x4xf32>
    %64 = arith.addf %58, %63 : vector<16x16x4xf32>
    %65 = vector.extract_strided_slice %2 {offsets = [7, 0], sizes = [1, 4], strides = [1, 1]} : vector<16x4xf32> to vector<1x4xf32>
    %66 = vector.shape_cast %65 : vector<1x4xf32> to vector<4xf32>
    %67 = vector.shape_cast %66 : vector<4xf32> to vector<1x1x4xf32>
    %68 = vector.broadcast %67 : vector<1x1x4xf32> to vector<16x16x4xf32>
    %69 = arith.mulf %11, %68 : vector<16x16x4xf32>
    %70 = arith.addf %64, %69 : vector<16x16x4xf32>
    %71 = vector.shape_cast %3 : vector<1x4xf32> to vector<1x1x4xf32>
    %72 = vector.broadcast %71 : vector<1x1x4xf32> to vector<16x16x4xf32>
    %73 = arith.addf %70, %72 : vector<16x16x4xf32>
    %74 = arith.negf %73 : vector<16x16x4xf32>
    %75 = math.exp %74 : vector<16x16x4xf32>
    %cst_11 = arith.constant 1.000000e+00 : f32
    %76 = vector.broadcast %cst_11 : f32 to vector<16x16x4xf32>
    %77 = arith.addf %76, %75 : vector<16x16x4xf32>
    %78 = arith.divf %76, %77 : vector<16x16x4xf32>
    %79 = arith.mulf %73, %78 : vector<16x16x4xf32>
    %80 = vector.shape_cast %79 : vector<16x16x4xf32> to vector<256x4xf32>
    %81 = vector.extract_strided_slice %2 {offsets = [8, 0], sizes = [1, 4], strides = [1, 1]} : vector<16x4xf32> to vector<1x4xf32>
    %82 = vector.shape_cast %81 : vector<1x4xf32> to vector<4xf32>
    %83 = vector.shape_cast %82 : vector<4xf32> to vector<1x1x4xf32>
    %84 = vector.broadcast %83 : vector<1x1x4xf32> to vector<16x16x4xf32>
    %85 = arith.mulf %9, %84 : vector<16x16x4xf32>
    %86 = vector.extract_strided_slice %2 {offsets = [9, 0], sizes = [1, 4], strides = [1, 1]} : vector<16x4xf32> to vector<1x4xf32>
    %87 = vector.shape_cast %86 : vector<1x4xf32> to vector<4xf32>
    %88 = vector.shape_cast %87 : vector<4xf32> to vector<1x1x4xf32>
    %89 = vector.broadcast %88 : vector<1x1x4xf32> to vector<16x16x4xf32>
    %90 = arith.mulf %10, %89 : vector<16x16x4xf32>
    %91 = arith.addf %85, %90 : vector<16x16x4xf32>
    %92 = vector.extract_strided_slice %2 {offsets = [10, 0], sizes = [1, 4], strides = [1, 1]} : vector<16x4xf32> to vector<1x4xf32>
    %93 = vector.shape_cast %92 : vector<1x4xf32> to vector<4xf32>
    %94 = vector.shape_cast %93 : vector<4xf32> to vector<1x1x4xf32>
    %95 = vector.broadcast %94 : vector<1x1x4xf32> to vector<16x16x4xf32>
    %96 = arith.mulf %12, %95 : vector<16x16x4xf32>
    %97 = arith.addf %91, %96 : vector<16x16x4xf32>
    %98 = vector.extract_strided_slice %2 {offsets = [11, 0], sizes = [1, 4], strides = [1, 1]} : vector<16x4xf32> to vector<1x4xf32>
    %99 = vector.shape_cast %98 : vector<1x4xf32> to vector<4xf32>
    %100 = vector.shape_cast %99 : vector<4xf32> to vector<1x1x4xf32>
    %101 = vector.broadcast %100 : vector<1x1x4xf32> to vector<16x16x4xf32>
    %102 = arith.mulf %13, %101 : vector<16x16x4xf32>
    %103 = arith.addf %97, %102 : vector<16x16x4xf32>
    %104 = vector.shape_cast %3 : vector<1x4xf32> to vector<1x1x4xf32>
    %105 = vector.broadcast %104 : vector<1x1x4xf32> to vector<16x16x4xf32>
    %106 = arith.addf %103, %105 : vector<16x16x4xf32>
    %107 = arith.negf %106 : vector<16x16x4xf32>
    %108 = math.exp %107 : vector<16x16x4xf32>
    %cst_12 = arith.constant 1.000000e+00 : f32
    %109 = vector.broadcast %cst_12 : f32 to vector<16x16x4xf32>
    %110 = arith.addf %109, %108 : vector<16x16x4xf32>
    %111 = arith.divf %109, %110 : vector<16x16x4xf32>
    %112 = arith.mulf %106, %111 : vector<16x16x4xf32>
    %113 = vector.shape_cast %112 : vector<16x16x4xf32> to vector<256x4xf32>
    %114 = vector.extract_strided_slice %2 {offsets = [12, 0], sizes = [1, 4], strides = [1, 1]} : vector<16x4xf32> to vector<1x4xf32>
    %115 = vector.shape_cast %114 : vector<1x4xf32> to vector<4xf32>
    %116 = vector.shape_cast %115 : vector<4xf32> to vector<1x1x4xf32>
    %117 = vector.broadcast %116 : vector<1x1x4xf32> to vector<16x16x4xf32>
    %118 = arith.mulf %10, %117 : vector<16x16x4xf32>
    %119 = vector.extract_strided_slice %2 {offsets = [13, 0], sizes = [1, 4], strides = [1, 1]} : vector<16x4xf32> to vector<1x4xf32>
    %120 = vector.shape_cast %119 : vector<1x4xf32> to vector<4xf32>
    %121 = vector.shape_cast %120 : vector<4xf32> to vector<1x1x4xf32>
    %122 = vector.broadcast %121 : vector<1x1x4xf32> to vector<16x16x4xf32>
    %123 = arith.mulf %11, %122 : vector<16x16x4xf32>
    %124 = arith.addf %118, %123 : vector<16x16x4xf32>
    %125 = vector.extract_strided_slice %2 {offsets = [14, 0], sizes = [1, 4], strides = [1, 1]} : vector<16x4xf32> to vector<1x4xf32>
    %126 = vector.shape_cast %125 : vector<1x4xf32> to vector<4xf32>
    %127 = vector.shape_cast %126 : vector<4xf32> to vector<1x1x4xf32>
    %128 = vector.broadcast %127 : vector<1x1x4xf32> to vector<16x16x4xf32>
    %129 = arith.mulf %13, %128 : vector<16x16x4xf32>
    %130 = arith.addf %124, %129 : vector<16x16x4xf32>
    %131 = vector.extract_strided_slice %2 {offsets = [15, 0], sizes = [1, 4], strides = [1, 1]} : vector<16x4xf32> to vector<1x4xf32>
    %132 = vector.shape_cast %131 : vector<1x4xf32> to vector<4xf32>
    %133 = vector.shape_cast %132 : vector<4xf32> to vector<1x1x4xf32>
    %134 = vector.broadcast %133 : vector<1x1x4xf32> to vector<16x16x4xf32>
    %135 = arith.mulf %14, %134 : vector<16x16x4xf32>
    %136 = arith.addf %130, %135 : vector<16x16x4xf32>
    %137 = vector.shape_cast %3 : vector<1x4xf32> to vector<1x1x4xf32>
    %138 = vector.broadcast %137 : vector<1x1x4xf32> to vector<16x16x4xf32>
    %139 = arith.addf %136, %138 : vector<16x16x4xf32>
    %140 = arith.negf %139 : vector<16x16x4xf32>
    %141 = math.exp %140 : vector<16x16x4xf32>
    %cst_13 = arith.constant 1.000000e+00 : f32
    %142 = vector.broadcast %cst_13 : f32 to vector<16x16x4xf32>
    %143 = arith.addf %142, %141 : vector<16x16x4xf32>
    %144 = arith.divf %142, %143 : vector<16x16x4xf32>
    %145 = arith.mulf %139, %144 : vector<16x16x4xf32>
    %146 = vector.shape_cast %145 : vector<16x16x4xf32> to vector<256x4xf32>
    %147 = tpu.concatenate %47, %80, %113, %146 in 0 : vector<256x4xf32>, vector<256x4xf32>, vector<256x4xf32>, vector<256x4xf32> -> vector<1024x4xf32>
    %cst_14 = arith.constant dense<0.000000e+00> : vector<1024x4xf32>
    %148 = tpu.matmul %147, %4, %cst_14 {dimension_numbers = #tpu.dot_dimension_numbers<[1], [0], [0], [1], [0, 0, 1, 1], [], []>} : vector<1024x4xf32>, vector<4x4xf32>, vector<1024x4xf32> -> vector<1024x4xf32>
    %149 = vector.broadcast %5 : vector<1x4xf32> to vector<1024x4xf32>
    %150 = arith.addf %148, %149 : vector<1024x4xf32>
    %151 = vector.shape_cast %150 : vector<1024x4xf32> to vector<4x256x4xf32>
    %c0_15 = arith.constant 0 : index
    %c0_16 = arith.constant 0 : index
    %c0_17 = arith.constant 0 : index
    %c0_18 = arith.constant 0 : index
    %152 = vector.load %arg6[%c0_15, %c0_16, %c0_17, %c0_18] : memref<1x4x256x4xf32, #tpu.memory_space<vmem>>, vector<1x4x256x4xf32>
    %153 = vector.shape_cast %152 : vector<1x4x256x4xf32> to vector<4x256x4xf32>
    %154 = vector.shape_cast %151 : vector<4x256x4xf32> to vector<1x4x256x4xf32>
    tpu.vector_store %arg6[%c0_15, %c0_16, %c0_17, %c0_18], %154 {strides = array<i32>} : memref<1x4x256x4xf32, #tpu.memory_space<vmem>>, vector<1x4x256x4xf32>,
    return
  }
  func.func @transform_0(%arg0: i32) -> (i32, i32, i32, i32) {
    %c0_i32 = arith.constant 0 : i32
    %c0_i32_0 = arith.constant 0 : i32
    %c0_i32_1 = arith.constant 0 : i32
    %c0_i32_2 = arith.constant 0 : i32
    return %arg0, %c0_i32, %c0_i32_0, %c0_i32_1 : i32, i32, i32, i32
  }
  func.func @transform_1(%arg0: i32) -> (i32, i32) {
    %c0_i32 = arith.constant 0 : i32
    %c0_i32_0 = arith.constant 0 : i32
    %c0_i32_1 = arith.constant 0 : i32
    return %c0_i32, %c0_i32_0 : i32, i32
  }
  func.func @transform_2(%arg0: i32) -> (i32, i32) {
    %c0_i32 = arith.constant 0 : i32
    %c0_i32_0 = arith.constant 0 : i32
    %c0_i32_1 = arith.constant 0 : i32
    return %c0_i32, %c0_i32_0 : i32, i32
  }
  func.func @transform_3(%arg0: i32) -> (i32, i32) {
    %c0_i32 = arith.constant 0 : i32
    %c0_i32_0 = arith.constant 0 : i32
    %c0_i32_1 = arith.constant 0 : i32
    return %c0_i32, %c0_i32_0 : i32, i32
  }
  func.func @transform_4(%arg0: i32) -> (i32, i32) {
    %c0_i32 = arith.constant 0 : i32
    %c0_i32_0 = arith.constant 0 : i32
    %c0_i32_1 = arith.constant 0 : i32
    return %c0_i32, %c0_i32_0 : i32, i32
  }
  func.func @transform_5(%arg0: i32) -> (i32, i32, i32, i32) {
    %c0_i32 = arith.constant 0 : i32
    %c0_i32_0 = arith.constant 0 : i32
    %c0_i32_1 = arith.constant 0 : i32
    %c0_i32_2 = arith.constant 0 : i32
    return %arg0, %c0_i32, %c0_i32_0, %c0_i32_1 : i32, i32, i32, i32
  }
}

</mosaic_0001>

<llo_original>
// kernel: eucb_forward.1
$region0: #{eucb_forward.1}
  #allocation0 [shape = 'u32[]', space=smem, size = 0x4, offset = 0x4, fixed_abs, tag = 'smem constant byte address 0x4 - core index']
  #allocation1 [shape = 'u32[144,128]{1,0:T(1,128)}', space=vmem, size = 0x12000, scoped, tag = 'internal scratch']
  %s0 = inlined_call_operand.vmem [shape: f32[2,18,18,4], index: 0, kind: input, shape index: {}]
  %s1 = inlined_call_operand.vmem [shape: f32[16,4], index: 1, kind: input, shape index: {}]
  %s2 = inlined_call_operand.vmem [shape: f32[1,4], index: 2, kind: input, shape index: {}]
  %s3 = inlined_call_operand.vmem [shape: f32[4,4], index: 3, kind: input, shape index: {}]
  %s4 = inlined_call_operand.vmem [shape: f32[1,4], index: 4, kind: input, shape index: {}]
  %s5 = inlined_call_operand.vmem [shape: f32[2,4,256,4], index: 5, kind: output, shape index: {}]
  %s6 = sld [smem:[#allocation0]]
  $region53: #{eucb_forward.1} parent=0
    _
  %s8 = ssub.s32 1, %s6
  %s9 = scalar_select 0, %s8, %s6
  loop: start=0, step=1, limit=4
  $region2: #{eucb_forward.1} parent=0 // loop_pre_header
    _
  $region3: #{eucb_forward.1} parent=0 // loop_header
    %s11 = sphi 0, %s15
    %p12 = scmp.ge.s32.totalorder %s11, 4
    %s21 = sphi 0, %s23
    %s24 = sphi 0, %s21
    %s25 = sphi 0, %s24
    %s41 = sphi 0, %s25
    %s45 = sphi 0, %s45
    %s47 = sphi 0, %s45
    %s48 = sphi 0, %s47
    %s62 = sphi 0, %s48
    %s66 = sphi 0, %s66
    %s68 = sphi 0, %s66
    %s69 = sphi 0, %s68
    %s83 = sphi 0, %s69
    %s87 = sphi 0, %s87
    %s89 = sphi 0, %s87
    %s90 = sphi 0, %s89
    %s104 = sphi 0, %s90
    %s108 = sphi 0, %s108
    %s110 = sphi 0, %s108
    %s111 = sphi 0, %s110
    %s125 = sphi 0, %s111
    %s131 = sphi 0, %s133
    %s134 = sphi 0, %s131
    %s135 = sphi 0, %s134
    %s151 = sphi 0, %s135
  $region4: #{eucb_forward.1} parent=0 // loop_header_branch
    %14 = sbr.rel (%p12) target = $region8
  $region5: #{eucb_forward.1} parent=0 // loop_body
    %s16 = ssub.s32 %s11, 1
    %s17 = ssub.s32 %s11, 2
    %s18 = sadd.s32 %s11, 1
    %s19 = ssub.s32 %s11, %s18
    %p20 = scmp.eq.s32.totalorder %s19, 0
    %s22 = sadd.s32 %s21, 1
    %s23 = scalar_select %p20, %s21, %s22
    %p26 = pneg %p20
    %p27 = scmp.eq.s32.totalorder %s11, 1
    %p28 = por %p26, %p27
    %p29 = scmp.ne.s32.totalorder %s21, %s24
    %p30 = scmp.eq.s32.totalorder %s11, 0
    %p31 = por %p29, %p30
    %p32 = scmp.ne.s32.totalorder %s21, %s24
    %p33 = scmp.eq.s32.totalorder %s16, 1
    %p34 = por %p32, %p33
    %p35 = scmp.ne.s32.totalorder %s24, %s25
    %p36 = scmp.eq.s32.totalorder %s16, 0
    %p37 = por %p35, %p36
    %p38 = scmp.ne.s32.totalorder %s24, %s25
    %p39 = scmp.eq.s32.totalorder %s17, 1
    %p40 = por %p38, %p39
    %p42 = scmp.ne.s32.totalorder %s25, %s41
    %p43 = scmp.eq.s32.totalorder %s17, 0
    %p44 = por %p42, %p43
    %s46 = sadd.s32 %s45, 1
    %p49 = scmp.eq.s32.totalorder %s11, 1
    %p50 = scmp.ne.s32.totalorder %s45, %s47
    %p51 = scmp.eq.s32.totalorder %s11, 0
    %p52 = por %p50, %p51
    %p53 = scmp.ne.s32.totalorder %s45, %s47
    %p54 = scmp.eq.s32.totalorder %s16, 1
    %p55 = por %p53, %p54
    %p56 = scmp.ne.s32.totalorder %s47, %s48
    %p57 = scmp.eq.s32.totalorder %s16, 0
    %p58 = por %p56, %p57
    %p59 = scmp.ne.s32.totalorder %s47, %s48
    %p60 = scmp.eq.s32.totalorder %s17, 1
    %p61 = por %p59, %p60
    %p63 = scmp.ne.s32.totalorder %s48, %s62
    %p64 = scmp.eq.s32.totalorder %s17, 0
    %p65 = por %p63, %p64
    %s67 = sadd.s32 %s66, 1
    %p70 = scmp.eq.s32.totalorder %s11, 1
    %p71 = scmp.ne.s32.totalorder %s66, %s68
    %p72 = scmp.eq.s32.totalorder %s11, 0
    %p73 = por %p71, %p72
    %p74 = scmp.ne.s32.totalorder %s66, %s68
    %p75 = scmp.eq.s32.totalorder %s16, 1
    %p76 = por %p74, %p75
    %p77 = scmp.ne.s32.totalorder %s68, %s69
    %p78 = scmp.eq.s32.totalorder %s16, 0
    %p79 = por %p77, %p78
    %p80 = scmp.ne.s32.totalorder %s68, %s69
    %p81 = scmp.eq.s32.totalorder %s17, 1
    %p82 = por %p80, %p81
    %p84 = scmp.ne.s32.totalorder %s69, %s83
    %p85 = scmp.eq.s32.totalorder %s17, 0
    %p86 = por %p84, %p85
    %s88 = sadd.s32 %s87, 1
    %p91 = scmp.eq.s32.totalorder %s11, 1
    %p92 = scmp.ne.s32.totalorder %s87, %s89
    %p93 = scmp.eq.s32.totalorder %s11, 0
    %p94 = por %p92, %p93
    %p95 = scmp.ne.s32.totalorder %s87, %s89
    %p96 = scmp.eq.s32.totalorder %s16, 1
    %p97 = por %p95, %p96
    %p98 = scmp.ne.s32.totalorder %s89, %s90
    %p99 = scmp.eq.s32.totalorder %s16, 0
    %p100 = por %p98, %p99
    %p101 = scmp.ne.s32.totalorder %s89, %s90
    %p102 = scmp.eq.s32.totalorder %s17, 1
    %p103 = por %p101, %p102
    %p105 = scmp.ne.s32.totalorder %s90, %s104
    %p106 = scmp.eq.s32.totalorder %s17, 0
    %p107 = por %p105, %p106
    %s109 = sadd.s32 %s108, 1
    %p112 = scmp.eq.s32.totalorder %s11, 1
    %p113 = scmp.ne.s32.totalorder %s108, %s110
    %p114 = scmp.eq.s32.totalorder %s11, 0
    %p115 = por %p113, %p114
    %p116 = scmp.ne.s32.totalorder %s108, %s110
    %p117 = scmp.eq.s32.totalorder %s16, 1
    %p118 = por %p116, %p117
    %p119 = scmp.ne.s32.totalorder %s110, %s111
    %p120 = scmp.eq.s32.totalorder %s16, 0
    %p121 = por %p119, %p120
    %p122 = scmp.ne.s32.totalorder %s110, %s111
    %p123 = scmp.eq.s32.totalorder %s17, 1
    %p124 = por %p122, %p123
    %p126 = scmp.ne.s32.totalorder %s111, %s125
    %p127 = scmp.eq.s32.totalorder %s17, 0
    %p128 = por %p126, %p127
    %s129 = ssub.s32 %s11, %s18
    %p130 = scmp.eq.s32.totalorder %s129, 0
    %s132 = sadd.s32 %s131, 1
    %s133 = scalar_select %p130, %s131, %s132
    %p136 = pneg %p130
    %p137 = scmp.eq.s32.totalorder %s11, 1
    %p138 = por %p136, %p137
    %p139 = scmp.ne.s32.totalorder %s131, %s134
    %p140 = scmp.eq.s32.totalorder %s11, 0
    %p141 = por %p139, %p140
    %p142 = scmp.ne.s32.totalorder %s131, %s134
    %p143 = scmp.eq.s32.totalorder %s16, 1
    %p144 = por %p142, %p143
    %p145 = scmp.ne.s32.totalorder %s134, %s135
    %p146 = scmp.eq.s32.totalorder %s16, 0
    %p147 = por %p145, %p146
    %p148 = scmp.ne.s32.totalorder %s134, %s135
    %p149 = scmp.eq.s32.totalorder %s17, 1
    %p150 = por %p148, %p149
    %p152 = scmp.ne.s32.totalorder %s135, %s151
    %p153 = scmp.eq.s32.totalorder %s17, 0
    %p154 = por %p152, %p153
    %p155 = scmp.le.s32.totalorder 1, %s11
    %p156 = scmp.lt.s32.totalorder %s11, 3
    %p157 = pnand %p155, %p156
    %p158 = pneg %p157
    // Predicated region
    $region9: #{eucb_forward.1} parent=5 // pred_check
      _
    $region10: #{eucb_forward.1} parent=5 // pred_check_branch
      %160 = sbr.rel (%p157) target = $region12
    $region11: #{eucb_forward.1} parent=5 // pred_region
      %s161 = ssub.s32 %s11, 1
      // Predicated region
      $region13: #{eucb_forward.1} parent=11 // pred_check
        %p162 = pneg %p58
      $region14: #{eucb_forward.1} parent=11 // pred_check_branch
        %164 = sbr.rel (%p162) target = $region16
      $region15: #{eucb_forward.1} parent=11 // pred_region
        _
      $region16: #{eucb_forward.1} parent=11 // pred_fallthru
        _
      // Predicated region
      $region17: #{eucb_forward.1} parent=11 // pred_check
        %p165 = pneg %p79
      $region18: #{eucb_forward.1} parent=11 // pred_check_branch
        %167 = sbr.rel (%p165) target = $region20
      $region19: #{eucb_forward.1} parent=11 // pred_region
        _
      $region20: #{eucb_forward.1} parent=11 // pred_fallthru
        _
      // Predicated region
      $region21: #{eucb_forward.1} parent=11 // pred_check
        %p168 = pneg %p100
      $region22: #{eucb_forward.1} parent=11 // pred_check_branch
        %170 = sbr.rel (%p168) target = $region24
      $region23: #{eucb_forward.1} parent=11 // pred_region
        _
      $region24: #{eucb_forward.1} parent=11 // pred_fallthru
        _
      // Predicated region
      $region25: #{eucb_forward.1} parent=11 // pred_check
        %p171 = pneg %p121
      $region26: #{eucb_forward.1} parent=11 // pred_check_branch
        %173 = sbr.rel (%p171) target = $region28
      $region27: #{eucb_forward.1} parent=11 // pred_region
        _
      $region28: #{eucb_forward.1} parent=11 // pred_fallthru
        _
    $region12: #{eucb_forward.1} parent=5 // pred_fallthru
      _
    %p174 = scmp.lt.s32.totalorder %s11, 2
    // Predicated region
    $region29: #{eucb_forward.1} parent=5 // pred_check
      %p175 = pneg %p174
    $region30: #{eucb_forward.1} parent=5 // pred_check_branch
      %177 = sbr.rel (%p175) target = $region32
    $region31: #{eucb_forward.1} parent=5 // pred_region
      // Predicated region
      $region33: #{eucb_forward.1} parent=31 // pred_check
        %p178 = pneg %p31
      $region34: #{eucb_forward.1} parent=31 // pred_check_branch
        %180 = sbr.rel (%p178) target = $region36
      $region35: #{eucb_forward.1} parent=31 // pred_region
        %p181 = scmp.lt.s32.totalorder %s11, 1
        %s182 = scalar_select %p181, %s11, 1
        %s183 = smul.addr %s182, 54
        %s184 = smul.addr %s183, 8
        %s185 = scalar_lea.vmem %s0, %s184
      $region36: #{eucb_forward.1} parent=31 // pred_fallthru
        _
    $region32: #{eucb_forward.1} parent=5 // pred_fallthru
      _
    %p186 = scmp.le.s32.totalorder 1, %s11
    %p187 = scmp.lt.s32.totalorder %s11, 3
    %p188 = pnand %p186, %p187
    %p189 = pneg %p188
    // Predicated region
    $region37: #{eucb_forward.1} parent=5 // pred_check
      _
    $region38: #{eucb_forward.1} parent=5 // pred_check_branch
      %191 = sbr.rel (%p188) target = $region40
    $region39: #{eucb_forward.1} parent=5 // pred_region
      %s192 = ssub.s32 %s11, 1
      %p193 = scmp.lt.s32.totalorder %s16, 1
      %s194 = scalar_select %p193, %s16, 1
      %s195 = smul.addr %s194, 54
      %s196 = smul.addr %s195, 8
      %s197 = scalar_lea.vmem %s0, %s196
      %p198 = pneg %p37
      %p199 = pneg %p34
      %p200 = pneg %p58
      %p201 = pneg %p55
      %p202 = pneg %p79
      %p203 = pneg %p76
      %p204 = pneg %p100
      %p205 = pneg %p97
      %p206 = pneg %p121
      %p207 = pneg %p118
      %p208 = pneg %p147
      %p209 = pneg %p144
      %p210 = scmp.lt.s32.totalorder %s16, 1
      %s211 = scalar_select %p210, %s16, 1
      %s212 = smul.addr %s211, 128
      %s213 = smul.addr %s212, 8
      %s214 = scalar_lea.vmem %s5, %s213
      %p215 = scmp.lt.s32.totalorder %s16, 1
      %s216 = scalar_select %p215, %s16, 1
      %s217 = smul.addr %s216, 54
      %s218 = smul.addr %s217, 8
      %s219 = scalar_lea.vmem %s0, %s218
      %p220 = scmp.lt.s32.totalorder %s16, 1
      %s221 = scalar_select %p220, %s16, 1
      %s222 = smul.addr %s221, 128
      %s223 = smul.addr %s222, 8
      %s224 = scalar_lea.vmem %s5, %s223
      %v225 = vld [vmem:[%s219] sm:$0xff]
      %v226 = vld [vmem:[%s219 + $0x8] sm:$0xff]
      %v227 = vld [vmem:[%s219 + $0x10] sm:$0x3]
      %v228 = vld [vmem:[%s219 + $0x18] sm:$0xff]
      %v229 = vld [vmem:[%s219 + $0x20] sm:$0xff]
      %v230 = vld [vmem:[%s219 + $0x28] sm:$0x3]
      %v231 = vld [vmem:[%s219 + $0x30] sm:$0xff]
      %v232 = vld [vmem:[%s219 + $0x38] sm:$0xff]
      %v233 = vld [vmem:[%s219 + $0x40] sm:$0x3]
      %v234 = vld [vmem:[%s219 + $0x48] sm:$0xff]
      %v235 = vld [vmem:[%s219 + $0x50] sm:$0xff]
      %v236 = vld [vmem:[%s219 + $0x58] sm:$0x3]
      %v237 = vld [vmem:[%s219 + $0x60] sm:$0xff]
      %v238 = vld [vmem:[%s219 + $0x68] sm:$0xff]
      %v239 = vld [vmem:[%s219 + $0x70] sm:$0x3]
      %v240 = vld [vmem:[%s219 + $0x78] sm:$0xff]
      %v241 = vld [vmem:[%s219 + $0x80] sm:$0xff]
      %v242 = vld [vmem:[%s219 + $0x88] sm:$0x3]
      %v243 = vld [vmem:[%s219 + $0x90] sm:$0xff]
      %v244 = vld [vmem:[%s219 + $0x98] sm:$0xff]
      %v245 = vld [vmem:[%s219 + $0xa0] sm:$0x3]
      %v246 = vld [vmem:[%s219 + $0xa8] sm:$0xff]
      %v247 = vld [vmem:[%s219 + $0xb0] sm:$0xff]
      %v248 = vld [vmem:[%s219 + $0xb8] sm:$0x3]
      %v249 = vld [vmem:[%s219 + $0xc0] sm:$0xff]
      %v250 = vld [vmem:[%s219 + $0xc8] sm:$0xff]
      %v251 = vld [vmem:[%s219 + $0xd0] sm:$0x3]
      %v252 = vld [vmem:[%s219 + $0xd8] sm:$0xff]
      %v253 = vld [vmem:[%s219 + $0xe0] sm:$0xff]
      %v254 = vld [vmem:[%s219 + $0xe8] sm:$0x3]
      %v255 = vld [vmem:[%s219 + $0xf0] sm:$0xff]
      %v256 = vld [vmem:[%s219 + $0xf8] sm:$0xff]
      %v257 = vld [vmem:[%s219 + $0x100] sm:$0x3]
      %v258 = vld [vmem:[%s219 + $0x108] sm:$0xff]
      %v259 = vld [vmem:[%s219 + $0x110] sm:$0xff]
      %v260 = vld [vmem:[%s219 + $0x118] sm:$0x3]
      %v261 = vld [vmem:[%s219 + $0x120] sm:$0xff]
      %v262 = vld [vmem:[%s219 + $0x128] sm:$0xff]
      %v263 = vld [vmem:[%s219 + $0x130] sm:$0x3]
      %v264 = vld [vmem:[%s219 + $0x138] sm:$0xff]
      %v265 = vld [vmem:[%s219 + $0x140] sm:$0xff]
      %v266 = vld [vmem:[%s219 + $0x148] sm:$0x3]
      %v267 = vld [vmem:[%s219 + $0x150] sm:$0xff]
      %v268 = vld [vmem:[%s219 + $0x158] sm:$0xff]
      %v269 = vld [vmem:[%s219 + $0x160] sm:$0x3]
      %v270 = vld [vmem:[%s219 + $0x168] sm:$0xff]
      %v271 = vld [vmem:[%s219 + $0x170] sm:$0xff]
      %v272 = vld [vmem:[%s219 + $0x178] sm:$0x3]
      %v273 = vld [vmem:[%s219 + $0x180] sm:$0xff]
      %v274 = vld [vmem:[%s219 + $0x188] sm:$0xff]
      %v275 = vld [vmem:[%s219 + $0x190] sm:$0x3]
      %v276 = vld [vmem:[%s219 + $0x198] sm:$0xff]
      %v277 = vld [vmem:[%s219 + $0x1a0] sm:$0xff]
      %v278 = vld [vmem:[%s219 + $0x1a8] sm:$0x3]
      %v279 = vld [vmem:[%s1] sm:$0xff]
      %v280 = vld [vmem:[%s1 + $0x8] sm:$0xff]
      %v281 = vld [vmem:[%s2] sm:$0x1]
      %v282 = vld [vmem:[%s3] sm:$0xf]
      %v283 = vld [vmem:[%s4] sm:$0x1]
      %v284 = vlaneseq
      %v285 = vshrl.u32 %v284, 7
      %v286 = vsub.s32 0, %v285
      %v287 = vrot.slane %v279, %v286
      %v288 = vmul.f32 %v225, %v287
      %v289 = vmul.f32 %v226, %v287
      %v290 = vmul.f32 %v228, %v287
      %v291 = vmul.f32 %v229, %v287
      %v292 = vmul.f32 %v231, %v287
      %v293 = vmul.f32 %v232, %v287
      %v294 = vmul.f32 %v234, %v287
      %v295 = vmul.f32 %v235, %v287
      %v296 = vmul.f32 %v237, %v287
      %v297 = vmul.f32 %v238, %v287
      %v298 = vmul.f32 %v240, %v287
      %v299 = vmul.f32 %v241, %v287
      %v300 = vmul.f32 %v243, %v287
      %v301 = vmul.f32 %v244, %v287
      %v302 = vmul.f32 %v246, %v287
      %v303 = vmul.f32 %v247, %v287
      %v304 = vmul.f32 %v249, %v287
      %v305 = vmul.f32 %v250, %v287
      %v306 = vmul.f32 %v252, %v287
      %v307 = vmul.f32 %v253, %v287
      %v308 = vmul.f32 %v255, %v287
      %v309 = vmul.f32 %v256, %v287
      %v310 = vmul.f32 %v258, %v287
      %v311 = vmul.f32 %v259, %v287
      %v312 = vmul.f32 %v261, %v287
      %v313 = vmul.f32 %v262, %v287
      %v314 = vmul.f32 %v264, %v287
      %v315 = vmul.f32 %v265, %v287
      %v316 = vmul.f32 %v267, %v287
      %v317 = vmul.f32 %v268, %v287
      %v318 = vmul.f32 %v270, %v287
      %v319 = vmul.f32 %v271, %v287
      %v320 = vlaneseq
      %v321 = vshrl.u32 %v320, 7
      %v322 = vsub.s32 1, %v321
      %v323 = vrot.slane %v279, %v322
      %v324 = vmul.f32 %v225, %v323
      %v325 = vmul.f32 %v226, %v323
      %v326 = vmul.f32 %v227, %v323
      %v327 = vmul.f32 %v228, %v323
      %v328 = vmul.f32 %v229, %v323
      %v329 = vmul.f32 %v230, %v323
      %v330 = vmul.f32 %v231, %v323
      %v331 = vmul.f32 %v232, %v323
      %v332 = vmul.f32 %v233, %v323
      %v333 = vmul.f32 %v234, %v323
      %v334 = vmul.f32 %v235, %v323
      %v335 = vmul.f32 %v236, %v323
      %v336 = vmul.f32 %v237, %v323
      %v337 = vmul.f32 %v238, %v323
      %v338 = vmul.f32 %v239, %v323
      %v339 = vmul.f32 %v240, %v323
      %v340 = vmul.f32 %v241, %v323
      %v341 = vmul.f32 %v242, %v323
      %v342 = vmul.f32 %v243, %v323
      %v343 = vmul.f32 %v244, %v323
      %v344 = vmul.f32 %v245, %v323
      %v345 = vmul.f32 %v246, %v323
      %v346 = vmul.f32 %v247, %v323
      %v347 = vmul.f32 %v248, %v323
      %v348 = vmul.f32 %v249, %v323
      %v349 = vmul.f32 %v250, %v323
      %v350 = vmul.f32 %v251, %v323
      %v351 = vmul.f32 %v252, %v323
      %v352 = vmul.f32 %v253, %v323
      %v353 = vmul.f32 %v254, %v323
      %v354 = vmul.f32 %v255, %v323
      %v355 = vmul.f32 %v256, %v323
      %v356 = vmul.f32 %v257, %v323
      %v357 = vmul.f32 %v258, %v323
      %v358 = vmul.f32 %v259, %v323
      %v359 = vmul.f32 %v260, %v323
      %v360 = vmul.f32 %v261, %v323
      %v361 = vmul.f32 %v262, %v323
      %v362 = vmul.f32 %v263, %v323
      %v363 = vmul.f32 %v264, %v323
      %v364 = vmul.f32 %v265, %v323
      %v365 = vmul.f32 %v266, %v323
      %v366 = vmul.f32 %v267, %v323
      %v367 = vmul.f32 %v268, %v323
      %v368 = vmul.f32 %v269, %v323
      %v369 = vmul.f32 %v270, %v323
      %v370 = vmul.f32 %v271, %v323
      %v371 = vmul.f32 %v272, %v323
      %vm420 = vcmask 1046528
      %v421 = vrot.slane %v324, 1
      %v422 = vrot.slane %v325, 1
      %v423 = vsel %vm420, %v421, %v422
      %v424 = vrot.slane %v326, 1
      %v425 = vsel %vm420, %v422, %v424
      %v426 = vrot.slane %v327, 1
      %v427 = vrot.slane %v328, 1
      %v428 = vsel %vm420, %v426, %v427
      %v429 = vrot.slane %v329, 1
      %v430 = vsel %vm420, %v427, %v429
      %v431 = vrot.slane %v330, 1
      %v432 = vrot.slane %v331, 1
      %v433 = vsel %vm420, %v431, %v432
      %v434 = vrot.slane %v332, 1
      %v435 = vsel %vm420, %v432, %v434
      %v436 = vrot.slane %v333, 1
      %v437 = vrot.slane %v334, 1
      %v438 = vsel %vm420, %v436, %v437
      %v439 = vrot.slane %v335, 1
      %v440 = vsel %vm420, %v437, %v439
      %v441 = vrot.slane %v336, 1
      %v442 = vrot.slane %v337, 1
      %v443 = vsel %vm420, %v441, %v442
      %v444 = vrot.slane %v338, 1
      %v445 = vsel %vm420, %v442, %v444
      %v446 = vrot.slane %v339, 1
      %v447 = vrot.slane %v340, 1
      %v448 = vsel %vm420, %v446, %v447
      %v449 = vrot.slane %v341, 1
      %v450 = vsel %vm420, %v447, %v449
      %v451 = vrot.slane %v342, 1
      %v452 = vrot.slane %v343, 1
      %v453 = vsel %vm420, %v451, %v452
      %v454 = vrot.slane %v344, 1
      %v455 = vsel %vm420, %v452, %v454
      %v456 = vrot.slane %v345, 1
      %v457 = vrot.slane %v346, 1
      %v458 = vsel %vm420, %v456, %v457
      %v459 = vrot.slane %v347, 1
      %v460 = vsel %vm420, %v457, %v459
      %v461 = vrot.slane %v348, 1
      %v462 = vrot.slane %v349, 1
      %v463 = vsel %vm420, %v461, %v462
      %v464 = vrot.slane %v350, 1
      %v465 = vsel %vm420, %v462, %v464
      %v466 = vrot.slane %v351, 1
      %v467 = vrot.slane %v352, 1
      %v468 = vsel %vm420, %v466, %v467
      %v469 = vrot.slane %v353, 1
      %v470 = vsel %vm420, %v467, %v469
      %v471 = vrot.slane %v354, 1
      %v472 = vrot.slane %v355, 1
      %v473 = vsel %vm420, %v471, %v472
      %v474 = vrot.slane %v356, 1
      %v475 = vsel %vm420, %v472, %v474
      %v476 = vrot.slane %v357, 1
      %v477 = vrot.slane %v358, 1
      %v478 = vsel %vm420, %v476, %v477
      %v479 = vrot.slane %v359, 1
      %v480 = vsel %vm420, %v477, %v479
      %v481 = vrot.slane %v360, 1
      %v482 = vrot.slane %v361, 1
      %v483 = vsel %vm420, %v481, %v482
      %v484 = vrot.slane %v362, 1
      %v485 = vsel %vm420, %v482, %v484
      %v486 = vrot.slane %v363, 1
      %v487 = vrot.slane %v364, 1
      %v488 = vsel %vm420, %v486, %v487
      %v489 = vrot.slane %v365, 1
      %v490 = vsel %vm420, %v487, %v489
      %v491 = vrot.slane %v366, 1
      %v492 = vrot.slane %v367, 1
      %v493 = vsel %vm420, %v491, %v492
      %v494 = vrot.slane %v368, 1
      %v495 = vsel %vm420, %v492, %v494
      %v496 = vrot.slane %v369, 1
      %v497 = vrot.slane %v370, 1
      %v498 = vsel %vm420, %v496, %v497
      %v499 = vrot.slane %v371, 1
      %v500 = vsel %vm420, %v497, %v499
      %v533 = vadd.f32 %v288, %v423
      %v534 = vadd.f32 %v289, %v425
      %v535 = vadd.f32 %v290, %v428
      %v536 = vadd.f32 %v291, %v430
      %v537 = vadd.f32 %v292, %v433
      %v538 = vadd.f32 %v293, %v435
      %v539 = vadd.f32 %v294, %v438
      %v540 = vadd.f32 %v295, %v440
      %v541 = vadd.f32 %v296, %v443
      %v542 = vadd.f32 %v297, %v445
      %v543 = vadd.f32 %v298, %v448
      %v544 = vadd.f32 %v299, %v450
      %v545 = vadd.f32 %v300, %v453
      %v546 = vadd.f32 %v301, %v455
      %v547 = vadd.f32 %v302, %v458
      %v548 = vadd.f32 %v303, %v460
      %v549 = vadd.f32 %v304, %v463
      %v550 = vadd.f32 %v305, %v465
      %v551 = vadd.f32 %v306, %v468
      %v552 = vadd.f32 %v307, %v470
      %v553 = vadd.f32 %v308, %v473
      %v554 = vadd.f32 %v309, %v475
      %v555 = vadd.f32 %v310, %v478
      %v556 = vadd.f32 %v311, %v480
      %v557 = vadd.f32 %v312, %v483
      %v558 = vadd.f32 %v313, %v485
      %v559 = vadd.f32 %v314, %v488
      %v560 = vadd.f32 %v315, %v490
      %v561 = vadd.f32 %v316, %v493
      %v562 = vadd.f32 %v317, %v495
      %v563 = vadd.f32 %v318, %v498
      %v564 = vadd.f32 %v319, %v500
      %v565 = vlaneseq
      %v566 = vshrl.u32 %v565, 7
      %v567 = vsub.s32 2, %v566
      %v568 = vrot.slane %v279, %v567
      %v569 = vmul.f32 %v228, %v568
      %v570 = vmul.f32 %v229, %v568
      %v571 = vmul.f32 %v231, %v568
      %v572 = vmul.f32 %v232, %v568
      %v573 = vmul.f32 %v234, %v568
      %v574 = vmul.f32 %v235, %v568
      %v575 = vmul.f32 %v237, %v568
      %v576 = vmul.f32 %v238, %v568
      %v577 = vmul.f32 %v240, %v568
      %v578 = vmul.f32 %v241, %v568
      %v579 = vmul.f32 %v243, %v568
      %v580 = vmul.f32 %v244, %v568
      %v581 = vmul.f32 %v246, %v568
      %v582 = vmul.f32 %v247, %v568
      %v583 = vmul.f32 %v249, %v568
      %v584 = vmul.f32 %v250, %v568
      %v585 = vmul.f32 %v252, %v568
      %v586 = vmul.f32 %v253, %v568
      %v587 = vmul.f32 %v255, %v568
      %v588 = vmul.f32 %v256, %v568
      %v589 = vmul.f32 %v258, %v568
      %v590 = vmul.f32 %v259, %v568
      %v591 = vmul.f32 %v261, %v568
      %v592 = vmul.f32 %v262, %v568
      %v593 = vmul.f32 %v264, %v568
      %v594 = vmul.f32 %v265, %v568
      %v595 = vmul.f32 %v267, %v568
      %v596 = vmul.f32 %v268, %v568
      %v597 = vmul.f32 %v270, %v568
      %v598 = vmul.f32 %v271, %v568
      %v599 = vmul.f32 %v273, %v568
      %v600 = vmul.f32 %v274, %v568
      %v601 = vadd.f32 %v533, %v569
      %v602 = vadd.f32 %v534, %v570
      %v603 = vadd.f32 %v535, %v571
      %v604 = vadd.f32 %v536, %v572
      %v605 = vadd.f32 %v537, %v573
      %v606 = vadd.f32 %v538, %v574
      %v607 = vadd.f32 %v539, %v575
      %v608 = vadd.f32 %v540, %v576
      %v609 = vadd.f32 %v541, %v577
      %v610 = vadd.f32 %v542, %v578
      %v611 = vadd.f32 %v543, %v579
      %v612 = vadd.f32 %v544, %v580
      %v613 = vadd.f32 %v545, %v581
      %v614 = vadd.f32 %v546, %v582
      %v615 = vadd.f32 %v547, %v583
      %v616 = vadd.f32 %v548, %v584
      %v617 = vadd.f32 %v549, %v585
      %v618 = vadd.f32 %v550, %v586
      %v619 = vadd.f32 %v551, %v587
      %v620 = vadd.f32 %v552, %v588
      %v621 = vadd.f32 %v553, %v589
      %v622 = vadd.f32 %v554, %v590
      %v623 = vadd.f32 %v555, %v591
      %v624 = vadd.f32 %v556, %v592
      %v625 = vadd.f32 %v557, %v593
      %v626 = vadd.f32 %v558, %v594
      %v627 = vadd.f32 %v559, %v595
      %v628 = vadd.f32 %v560, %v596
      %v629 = vadd.f32 %v561, %v597
      %v630 = vadd.f32 %v562, %v598
      %v631 = vadd.f32 %v563, %v599
      %v632 = vadd.f32 %v564, %v600
      %v633 = vlaneseq
      %v634 = vshrl.u32 %v633, 7
      %v635 = vsub.s32 3, %v634
      %v636 = vrot.slane %v279, %v635
      %v637 = vmul.f32 %v228, %v636
      %v638 = vmul.f32 %v229, %v636
      %v639 = vmul.f32 %v230, %v636
      %v640 = vmul.f32 %v231, %v636
      %v641 = vmul.f32 %v232, %v636
      %v642 = vmul.f32 %v233, %v636
      %v643 = vmul.f32 %v234, %v636
      %v644 = vmul.f32 %v235, %v636
      %v645 = vmul.f32 %v236, %v636
      %v646 = vmul.f32 %v237, %v636
      %v647 = vmul.f32 %v238, %v636
      %v648 = vmul.f32 %v239, %v636
      %v649 = vmul.f32 %v240, %v636
      %v650 = vmul.f32 %v241, %v636
      %v651 = vmul.f32 %v242, %v636
      %v652 = vmul.f32 %v243, %v636
      %v653 = vmul.f32 %v244, %v636
      %v654 = vmul.f32 %v245, %v636
      %v655 = vmul.f32 %v246, %v636
      %v656 = vmul.f32 %v247, %v636
      %v657 = vmul.f32 %v248, %v636
      %v658 = vmul.f32 %v249, %v636
      %v659 = vmul.f32 %v250, %v636
      %v660 = vmul.f32 %v251, %v636
      %v661 = vmul.f32 %v252, %v636
      %v662 = vmul.f32 %v253, %v636
      %v663 = vmul.f32 %v254, %v636
      %v664 = vmul.f32 %v255, %v636
      %v665 = vmul.f32 %v256, %v636
      %v666 = vmul.f32 %v257, %v636
      %v667 = vmul.f32 %v258, %v636
      %v668 = vmul.f32 %v259, %v636
      %v669 = vmul.f32 %v260, %v636
      %v670 = vmul.f32 %v261, %v636
      %v671 = vmul.f32 %v262, %v636
      %v672 = vmul.f32 %v263, %v636
      %v673 = vmul.f32 %v264, %v636
      %v674 = vmul.f32 %v265, %v636
      %v675 = vmul.f32 %v266, %v636
      %v676 = vmul.f32 %v267, %v636
      %v677 = vmul.f32 %v268, %v636
      %v678 = vmul.f32 %v269, %v636
      %v679 = vmul.f32 %v270, %v636
      %v680 = vmul.f32 %v271, %v636
      %v681 = vmul.f32 %v272, %v636
      %v682 = vmul.f32 %v273, %v636
      %v683 = vmul.f32 %v274, %v636
      %v684 = vmul.f32 %v275, %v636
      %v733 = vrot.slane %v637, 1
      %v734 = vrot.slane %v638, 1
      %v735 = vsel %vm420, %v733, %v734
      %v736 = vrot.slane %v639, 1
      %v737 = vsel %vm420, %v734, %v736
      %v738 = vrot.slane %v640, 1
      %v739 = vrot.slane %v641, 1
      %v740 = vsel %vm420, %v738, %v739
      %v741 = vrot.slane %v642, 1
      %v742 = vsel %vm420, %v739, %v741
      %v743 = vrot.slane %v643, 1
      %v744 = vrot.slane %v644, 1
      %v745 = vsel %vm420, %v743, %v744
      %v746 = vrot.slane %v645, 1
      %v747 = vsel %vm420, %v744, %v746
      %v748 = vrot.slane %v646, 1
      %v749 = vrot.slane %v647, 1
      %v750 = vsel %vm420, %v748, %v749
      %v751 = vrot.slane %v648, 1
      %v752 = vsel %vm420, %v749, %v751
      %v753 = vrot.slane %v649, 1
      %v754 = vrot.slane %v650, 1
      %v755 = vsel %vm420, %v753, %v754
      %v756 = vrot.slane %v651, 1
      %v757 = vsel %vm420, %v754, %v756
      %v758 = vrot.slane %v652, 1
      %v759 = vrot.slane %v653, 1
      %v760 = vsel %vm420, %v758, %v759
      %v761 = vrot.slane %v654, 1
      %v762 = vsel %vm420, %v759, %v761
      %v763 = vrot.slane %v655, 1
      %v764 = vrot.slane %v656, 1
      %v765 = vsel %vm420, %v763, %v764
      %v766 = vrot.slane %v657, 1
      %v767 = vsel %vm420, %v764, %v766
      %v768 = vrot.slane %v658, 1
      %v769 = vrot.slane %v659, 1
      %v770 = vsel %vm420, %v768, %v769
      %v771 = vrot.slane %v660, 1
      %v772 = vsel %vm420, %v769, %v771
      %v773 = vrot.slane %v661, 1
      %v774 = vrot.slane %v662, 1
      %v775 = vsel %vm420, %v773, %v774
      %v776 = vrot.slane %v663, 1
      %v777 = vsel %vm420, %v774, %v776
      %v778 = vrot.slane %v664, 1
      %v779 = vrot.slane %v665, 1
      %v780 = vsel %vm420, %v778, %v779
      %v781 = vrot.slane %v666, 1
      %v782 = vsel %vm420, %v779, %v781
      %v783 = vrot.slane %v667, 1
      %v784 = vrot.slane %v668, 1
      %v785 = vsel %vm420, %v783, %v784
      %v786 = vrot.slane %v669, 1
      %v787 = vsel %vm420, %v784, %v786
      %v788 = vrot.slane %v670, 1
      %v789 = vrot.slane %v671, 1
      %v790 = vsel %vm420, %v788, %v789
      %v791 = vrot.slane %v672, 1
      %v792 = vsel %vm420, %v789, %v791
      %v793 = vrot.slane %v673, 1
      %v794 = vrot.slane %v674, 1
      %v795 = vsel %vm420, %v793, %v794
      %v796 = vrot.slane %v675, 1
      %v797 = vsel %vm420, %v794, %v796
      %v798 = vrot.slane %v676, 1
      %v799 = vrot.slane %v677, 1
      %v800 = vsel %vm420, %v798, %v799
      %v801 = vrot.slane %v678, 1
      %v802 = vsel %vm420, %v799, %v801
      %v803 = vrot.slane %v679, 1
      %v804 = vrot.slane %v680, 1
      %v805 = vsel %vm420, %v803, %v804
      %v806 = vrot.slane %v681, 1
      %v807 = vsel %vm420, %v804, %v806
      %v808 = vrot.slane %v682, 1
      %v809 = vrot.slane %v683, 1
      %v810 = vsel %vm420, %v808, %v809
      %v811 = vrot.slane %v684, 1
      %v812 = vsel %vm420, %v809, %v811
      %v845 = vadd.f32 %v601, %v735
      %v846 = vadd.f32 %v602, %v737
      %v847 = vadd.f32 %v603, %v740
      %v848 = vadd.f32 %v604, %v742
      %v849 = vadd.f32 %v605, %v745
      %v850 = vadd.f32 %v606, %v747
      %v851 = vadd.f32 %v607, %v750
      %v852 = vadd.f32 %v608, %v752
      %v853 = vadd.f32 %v609, %v755
      %v854 = vadd.f32 %v610, %v757
      %v855 = vadd.f32 %v611, %v760
      %v856 = vadd.f32 %v612, %v762
      %v857 = vadd.f32 %v613, %v765
      %v858 = vadd.f32 %v614, %v767
      %v859 = vadd.f32 %v615, %v770
      %v860 = vadd.f32 %v616, %v772
      %v861 = vadd.f32 %v617, %v775
      %v862 = vadd.f32 %v618, %v777
      %v863 = vadd.f32 %v619, %v780
      %v864 = vadd.f32 %v620, %v782
      %v865 = vadd.f32 %v621, %v785
      %v866 = vadd.f32 %v622, %v787
      %v867 = vadd.f32 %v623, %v790
      %v868 = vadd.f32 %v624, %v792
      %v869 = vadd.f32 %v625, %v795
      %v870 = vadd.f32 %v626, %v797
      %v871 = vadd.f32 %v627, %v800
      %v872 = vadd.f32 %v628, %v802
      %v873 = vadd.f32 %v629, %v805
      %v874 = vadd.f32 %v630, %v807
      %v875 = vadd.f32 %v631, %v810
      %v876 = vadd.f32 %v632, %v812
      %v878 = vlaneseq
      %v879 = vshrl.u32 %v878, 7
      %v880 = vsub.s32 0, %v879
      %v881 = vrot.slane %v281, %v880
      %v883 = vadd.f32 %v845, %v881
      %v884 = vadd.f32 %v846, %v881
      %v885 = vadd.f32 %v847, %v881
      %v886 = vadd.f32 %v848, %v881
      %v887 = vadd.f32 %v849, %v881
      %v888 = vadd.f32 %v850, %v881
      %v889 = vadd.f32 %v851, %v881
      %v890 = vadd.f32 %v852, %v881
      %v891 = vadd.f32 %v853, %v881
      %v892 = vadd.f32 %v854, %v881
      %v893 = vadd.f32 %v855, %v881
      %v894 = vadd.f32 %v856, %v881
      %v895 = vadd.f32 %v857, %v881
      %v896 = vadd.f32 %v858, %v881
      %v897 = vadd.f32 %v859, %v881
      %v898 = vadd.f32 %v860, %v881
      %v899 = vadd.f32 %v861, %v881
      %v900 = vadd.f32 %v862, %v881
      %v901 = vadd.f32 %v863, %v881
      %v902 = vadd.f32 %v864, %v881
      %v903 = vadd.f32 %v865, %v881
      %v904 = vadd.f32 %v866, %v881
      %v905 = vadd.f32 %v867, %v881
      %v906 = vadd.f32 %v868, %v881
      %v907 = vadd.f32 %v869, %v881
      %v908 = vadd.f32 %v870, %v881
      %v909 = vadd.f32 %v871, %v881
      %v910 = vadd.f32 %v872, %v881
      %v911 = vadd.f32 %v873, %v881
      %v912 = vadd.f32 %v874, %v881
      %v913 = vadd.f32 %v875, %v881
      %v914 = vadd.f32 %v876, %v881
      %v915 = vxor.u32 %v883, 2147483648
      %v916 = vxor.u32 %v884, 2147483648
      %v917 = vxor.u32 %v885, 2147483648
      %v918 = vxor.u32 %v886, 2147483648
      %v919 = vxor.u32 %v887, 2147483648
      %v920 = vxor.u32 %v888, 2147483648
      %v921 = vxor.u32 %v889, 2147483648
      %v922 = vxor.u32 %v890, 2147483648
      %v923 = vxor.u32 %v891, 2147483648
      %v924 = vxor.u32 %v892, 2147483648
      %v925 = vxor.u32 %v893, 2147483648
      %v926 = vxor.u32 %v894, 2147483648
      %v927 = vxor.u32 %v895, 2147483648
      %v928 = vxor.u32 %v896, 2147483648
      %v929 = vxor.u32 %v897, 2147483648
      %v930 = vxor.u32 %v898, 2147483648
      %v931 = vxor.u32 %v899, 2147483648
      %v932 = vxor.u32 %v900, 2147483648
      %v933 = vxor.u32 %v901, 2147483648
      %v934 = vxor.u32 %v902, 2147483648
      %v935 = vxor.u32 %v903, 2147483648
      %v936 = vxor.u32 %v904, 2147483648
      %v937 = vxor.u32 %v905, 2147483648
      %v938 = vxor.u32 %v906, 2147483648
      %v939 = vxor.u32 %v907, 2147483648
      %v940 = vxor.u32 %v908, 2147483648
      %v941 = vxor.u32 %v909, 2147483648
      %v942 = vxor.u32 %v910, 2147483648
      %v943 = vxor.u32 %v911, 2147483648
      %v944 = vxor.u32 %v912, 2147483648
      %v945 = vxor.u32 %v913, 2147483648
      %v946 = vxor.u32 %v914, 2147483648
      %v947 = vmul.f32 %v915, 1.442695
      %v948 = vpow.pop %v947
      %v949 = vmul.f32 %v916, 1.442695
      %v950 = vpow.pop %v949
      %v951 = vmul.f32 %v917, 1.442695
      %v952 = vpow.pop %v951
      %v953 = vmul.f32 %v918, 1.442695
      %v954 = vpow.pop %v953
      %v955 = vmul.f32 %v919, 1.442695
      %v956 = vpow.pop %v955
      %v957 = vmul.f32 %v920, 1.442695
      %v958 = vpow.pop %v957
      %v959 = vmul.f32 %v921, 1.442695
      %v960 = vpow.pop %v959
      %v961 = vmul.f32 %v922, 1.442695
      %v962 = vpow.pop %v961
      %v963 = vmul.f32 %v923, 1.442695
      %v964 = vpow.pop %v963
      %v965 = vmul.f32 %v924, 1.442695
      %v966 = vpow.pop %v965
      %v967 = vmul.f32 %v925, 1.442695
      %v968 = vpow.pop %v967
      %v969 = vmul.f32 %v926, 1.442695
      %v970 = vpow.pop %v969
      %v971 = vmul.f32 %v927, 1.442695
      %v972 = vpow.pop %v971
      %v973 = vmul.f32 %v928, 1.442695
      %v974 = vpow.pop %v973
      %v975 = vmul.f32 %v929, 1.442695
      %v976 = vpow.pop %v975
      %v977 = vmul.f32 %v930, 1.442695
      %v978 = vpow.pop %v977
      %v979 = vmul.f32 %v931, 1.442695
      %v980 = vpow.pop %v979
      %v981 = vmul.f32 %v932, 1.442695
      %v982 = vpow.pop %v981
      %v983 = vmul.f32 %v933, 1.442695
      %v984 = vpow.pop %v983
      %v985 = vmul.f32 %v934, 1.442695
      %v986 = vpow.pop %v985
      %v987 = vmul.f32 %v935, 1.442695
      %v988 = vpow.pop %v987
      %v989 = vmul.f32 %v936, 1.442695
      %v990 = vpow.pop %v989
      %v991 = vmul.f32 %v937, 1.442695
      %v992 = vpow.pop %v991
      %v993 = vmul.f32 %v938, 1.442695
      %v994 = vpow.pop %v993
      %v995 = vmul.f32 %v939, 1.442695
      %v996 = vpow.pop %v995
      %v997 = vmul.f32 %v940, 1.442695
      %v998 = vpow.pop %v997
      %v999 = vmul.f32 %v941, 1.442695
      %v1000 = vpow.pop %v999
      %v1001 = vmul.f32 %v942, 1.442695
      %v1002 = vpow.pop %v1001
      %v1003 = vmul.f32 %v943, 1.442695
      %v1004 = vpow.pop %v1003
      %v1005 = vmul.f32 %v944, 1.442695
      %v1006 = vpow.pop %v1005
      %v1007 = vmul.f32 %v945, 1.442695
      %v1008 = vpow.pop %v1007
      %v1009 = vmul.f32 %v946, 1.442695
      %v1010 = vpow.pop %v1009
      %v1011 = vadd.f32 %v948, 1.0
      %v1012 = vadd.f32 %v950, 1.0
      %v1013 = vadd.f32 %v952, 1.0
      %v1014 = vadd.f32 %v954, 1.0
      %v1015 = vadd.f32 %v956, 1.0
      %v1016 = vadd.f32 %v958, 1.0
      %v1017 = vadd.f32 %v960, 1.0
      %v1018 = vadd.f32 %v962, 1.0
      %v1019 = vadd.f32 %v964, 1.0
      %v1020 = vadd.f32 %v966, 1.0
      %v1021 = vadd.f32 %v968, 1.0
      %v1022 = vadd.f32 %v970, 1.0
      %v1023 = vadd.f32 %v972, 1.0
      %v1024 = vadd.f32 %v974, 1.0
      %v1025 = vadd.f32 %v976, 1.0
      %v1026 = vadd.f32 %v978, 1.0
      %v1027 = vadd.f32 %v980, 1.0
      %v1028 = vadd.f32 %v982, 1.0
      %v1029 = vadd.f32 %v984, 1.0
      %v1030 = vadd.f32 %v986, 1.0
      %v1031 = vadd.f32 %v988, 1.0
      %v1032 = vadd.f32 %v990, 1.0
      %v1033 = vadd.f32 %v992, 1.0
      %v1034 = vadd.f32 %v994, 1.0
      %v1035 = vadd.f32 %v996, 1.0
      %v1036 = vadd.f32 %v998, 1.0
      %v1037 = vadd.f32 %v1000, 1.0
      %v1038 = vadd.f32 %v1002, 1.0
      %v1039 = vadd.f32 %v1004, 1.0
      %v1040 = vadd.f32 %v1006, 1.0
      %v1041 = vadd.f32 %v1008, 1.0
      %v1042 = vadd.f32 %v1010, 1.0
      %v1043 = vrcp.pop %v1011
      %v1044 = vmul.f32 1.0, %v1043
      %v1045 = vrcp.pop %v1012
      %v1046 = vmul.f32 1.0, %v1045
      %v1047 = vrcp.pop %v1013
      %v1048 = vmul.f32 1.0, %v1047
      %v1049 = vrcp.pop %v1014
      %v1050 = vmul.f32 1.0, %v1049
      %v1051 = vrcp.pop %v1015
      %v1052 = vmul.f32 1.0, %v1051
      %v1053 = vrcp.pop %v1016
      %v1054 = vmul.f32 1.0, %v1053
      %v1055 = vrcp.pop %v1017
      %v1056 = vmul.f32 1.0, %v1055
      %v1057 = vrcp.pop %v1018
      %v1058 = vmul.f32 1.0, %v1057
      %v1059 = vrcp.pop %v1019
      %v1060 = vmul.f32 1.0, %v1059
      %v1061 = vrcp.pop %v1020
      %v1062 = vmul.f32 1.0, %v1061
      %v1063 = vrcp.pop %v1021
      %v1064 = vmul.f32 1.0, %v1063
      %v1065 = vrcp.pop %v1022
      %v1066 = vmul.f32 1.0, %v1065
      %v1067 = vrcp.pop %v1023
      %v1068 = vmul.f32 1.0, %v1067
      %v1069 = vrcp.pop %v1024
      %v1070 = vmul.f32 1.0, %v1069
      %v1071 = vrcp.pop %v1025
      %v1072 = vmul.f32 1.0, %v1071
      %v1073 = vrcp.pop %v1026
      %v1074 = vmul.f32 1.0, %v1073
      %v1075 = vrcp.pop %v1027
      %v1076 = vmul.f32 1.0, %v1075
      %v1077 = vrcp.pop %v1028
      %v1078 = vmul.f32 1.0, %v1077
      %v1079 = vrcp.pop %v1029
      %v1080 = vmul.f32 1.0, %v1079
      %v1081 = vrcp.pop %v1030
      %v1082 = vmul.f32 1.0, %v1081
      %v1083 = vrcp.pop %v1031
      %v1084 = vmul.f32 1.0, %v1083
      %v1085 = vrcp.pop %v1032
      %v1086 = vmul.f32 1.0, %v1085
      %v1087 = vrcp.pop %v1033
      %v1088 = vmul.f32 1.0, %v1087
      %v1089 = vrcp.pop %v1034
      %v1090 = vmul.f32 1.0, %v1089
      %v1091 = vrcp.pop %v1035
      %v1092 = vmul.f32 1.0, %v1091
      %v1093 = vrcp.pop %v1036
      %v1094 = vmul.f32 1.0, %v1093
      %v1095 = vrcp.pop %v1037
      %v1096 = vmul.f32 1.0, %v1095
      %v1097 = vrcp.pop %v1038
      %v1098 = vmul.f32 1.0, %v1097
      %v1099 = vrcp.pop %v1039
      %v1100 = vmul.f32 1.0, %v1099
      %v1101 = vrcp.pop %v1040
      %v1102 = vmul.f32 1.0, %v1101
      %v1103 = vrcp.pop %v1041
      %v1104 = vmul.f32 1.0, %v1103
      %v1105 = vrcp.pop %v1042
      %v1106 = vmul.f32 1.0, %v1105
      %v1107 = vmul.f32 %v883, %v1044
      %v1108 = vmul.f32 %v884, %v1046
      %v1109 = vmul.f32 %v885, %v1048
      %v1110 = vmul.f32 %v886, %v1050
      %v1111 = vmul.f32 %v887, %v1052
      %v1112 = vmul.f32 %v888, %v1054
      %v1113 = vmul.f32 %v889, %v1056
      %v1114 = vmul.f32 %v890, %v1058
      %v1115 = vmul.f32 %v891, %v1060
      %v1116 = vmul.f32 %v892, %v1062
      %v1117 = vmul.f32 %v893, %v1064
      %v1118 = vmul.f32 %v894, %v1066
      %v1119 = vmul.f32 %v895, %v1068
      %v1120 = vmul.f32 %v896, %v1070
      %v1121 = vmul.f32 %v897, %v1072
      %v1122 = vmul.f32 %v898, %v1074
      %v1123 = vmul.f32 %v899, %v1076
      %v1124 = vmul.f32 %v900, %v1078
      %v1125 = vmul.f32 %v901, %v1080
      %v1126 = vmul.f32 %v902, %v1082
      %v1127 = vmul.f32 %v903, %v1084
      %v1128 = vmul.f32 %v904, %v1086
      %v1129 = vmul.f32 %v905, %v1088
      %v1130 = vmul.f32 %v906, %v1090
      %v1131 = vmul.f32 %v907, %v1092
      %v1132 = vmul.f32 %v908, %v1094
      %v1133 = vmul.f32 %v909, %v1096
      %v1134 = vmul.f32 %v910, %v1098
      %v1135 = vmul.f32 %v911, %v1100
      %v1136 = vmul.f32 %v912, %v1102
      %v1137 = vmul.f32 %v913, %v1104
      %v1138 = vmul.f32 %v914, %v1106
      %v1139 = vlaneseq
      %v1140 = vshrl.u32 %v1139, 7
      %v1141 = vsub.s32 4, %v1140
      %v1142 = vrot.slane %v279, %v1141
      %v1143 = vmul.f32 %v225, %v1142
      %v1144 = vmul.f32 %v226, %v1142
      %v1145 = vmul.f32 %v227, %v1142
      %v1146 = vmul.f32 %v228, %v1142
      %v1147 = vmul.f32 %v229, %v1142
      %v1148 = vmul.f32 %v230, %v1142
      %v1149 = vmul.f32 %v231, %v1142
      %v1150 = vmul.f32 %v232, %v1142
      %v1151 = vmul.f32 %v233, %v1142
      %v1152 = vmul.f32 %v234, %v1142
      %v1153 = vmul.f32 %v235, %v1142
      %v1154 = vmul.f32 %v236, %v1142
      %v1155 = vmul.f32 %v237, %v1142
      %v1156 = vmul.f32 %v238, %v1142
      %v1157 = vmul.f32 %v239, %v1142
      %v1158 = vmul.f32 %v240, %v1142
      %v1159 = vmul.f32 %v241, %v1142
      %v1160 = vmul.f32 %v242, %v1142
      %v1161 = vmul.f32 %v243, %v1142
      %v1162 = vmul.f32 %v244, %v1142
      %v1163 = vmul.f32 %v245, %v1142
      %v1164 = vmul.f32 %v246, %v1142
      %v1165 = vmul.f32 %v247, %v1142
      %v1166 = vmul.f32 %v248, %v1142
      %v1167 = vmul.f32 %v249, %v1142
      %v1168 = vmul.f32 %v250, %v1142
      %v1169 = vmul.f32 %v251, %v1142
      %v1170 = vmul.f32 %v252, %v1142
      %v1171 = vmul.f32 %v253, %v1142
      %v1172 = vmul.f32 %v254, %v1142
      %v1173 = vmul.f32 %v255, %v1142
      %v1174 = vmul.f32 %v256, %v1142
      %v1175 = vmul.f32 %v257, %v1142
      %v1176 = vmul.f32 %v258, %v1142
      %v1177 = vmul.f32 %v259, %v1142
      %v1178 = vmul.f32 %v260, %v1142
      %v1179 = vmul.f32 %v261, %v1142
      %v1180 = vmul.f32 %v262, %v1142
      %v1181 = vmul.f32 %v263, %v1142
      %v1182 = vmul.f32 %v264, %v1142
      %v1183 = vmul.f32 %v265, %v1142
      %v1184 = vmul.f32 %v266, %v1142
      %v1185 = vmul.f32 %v267, %v1142
      %v1186 = vmul.f32 %v268, %v1142
      %v1187 = vmul.f32 %v269, %v1142
      %v1188 = vmul.f32 %v270, %v1142
      %v1189 = vmul.f32 %v271, %v1142
      %v1190 = vmul.f32 %v272, %v1142
      %v1191 = vlaneseq
      %v1192 = vshrl.u32 %v1191, 7
      %v1193 = vsub.s32 5, %v1192
      %v1194 = vrot.slane %v279, %v1193
      %v1195 = vmul.f32 %v225, %v1194
      %v1196 = vmul.f32 %v226, %v1194
      %v1197 = vmul.f32 %v227, %v1194
      %v1198 = vmul.f32 %v228, %v1194
      %v1199 = vmul.f32 %v229, %v1194
      %v1200 = vmul.f32 %v230, %v1194
      %v1201 = vmul.f32 %v231, %v1194
      %v1202 = vmul.f32 %v232, %v1194
      %v1203 = vmul.f32 %v233, %v1194
      %v1204 = vmul.f32 %v234, %v1194
      %v1205 = vmul.f32 %v235, %v1194
      %v1206 = vmul.f32 %v236, %v1194
      %v1207 = vmul.f32 %v237, %v1194
      %v1208 = vmul.f32 %v238, %v1194
      %v1209 = vmul.f32 %v239, %v1194
      %v1210 = vmul.f32 %v240, %v1194
      %v1211 = vmul.f32 %v241, %v1194
      %v1212 = vmul.f32 %v242, %v1194
      %v1213 = vmul.f32 %v243, %v1194
      %v1214 = vmul.f32 %v244, %v1194
      %v1215 = vmul.f32 %v245, %v1194
      %v1216 = vmul.f32 %v246, %v1194
      %v1217 = vmul.f32 %v247, %v1194
      %v1218 = vmul.f32 %v248, %v1194
      %v1219 = vmul.f32 %v249, %v1194
      %v1220 = vmul.f32 %v250, %v1194
      %v1221 = vmul.f32 %v251, %v1194
      %v1222 = vmul.f32 %v252, %v1194
      %v1223 = vmul.f32 %v253, %v1194
      %v1224 = vmul.f32 %v254, %v1194
      %v1225 = vmul.f32 %v255, %v1194
      %v1226 = vmul.f32 %v256, %v1194
      %v1227 = vmul.f32 %v257, %v1194
      %v1228 = vmul.f32 %v258, %v1194
      %v1229 = vmul.f32 %v259, %v1194
      %v1230 = vmul.f32 %v260, %v1194
      %v1231 = vmul.f32 %v261, %v1194
      %v1232 = vmul.f32 %v262, %v1194
      %v1233 = vmul.f32 %v263, %v1194
      %v1234 = vmul.f32 %v264, %v1194
      %v1235 = vmul.f32 %v265, %v1194
      %v1236 = vmul.f32 %v266, %v1194
      %v1237 = vmul.f32 %v267, %v1194
      %v1238 = vmul.f32 %v268, %v1194
      %v1239 = vmul.f32 %v269, %v1194
      %v1240 = vmul.f32 %v270, %v1194
      %v1241 = vmul.f32 %v271, %v1194
      %v1242 = vmul.f32 %v272, %v1194
      %v1291 = vrot.slane %v1195, 1
      %v1292 = vrot.slane %v1196, 1
      %v1293 = vsel %vm420, %v1291, %v1292
      %v1294 = vrot.slane %v1197, 1
      %v1295 = vsel %vm420, %v1292, %v1294
      %v1296 = vrot.slane %v1198, 1
      %v1297 = vrot.slane %v1199, 1
      %v1298 = vsel %vm420, %v1296, %v1297
      %v1299 = vrot.slane %v1200, 1
      %v1300 = vsel %vm420, %v1297, %v1299
      %v1301 = vrot.slane %v1201, 1
      %v1302 = vrot.slane %v1202, 1
      %v1303 = vsel %vm420, %v1301, %v1302
      %v1304 = vrot.slane %v1203, 1
      %v1305 = vsel %vm420, %v1302, %v1304
      %v1306 = vrot.slane %v1204, 1
      %v1307 = vrot.slane %v1205, 1
      %v1308 = vsel %vm420, %v1306, %v1307
      %v1309 = vrot.slane %v1206, 1
      %v1310 = vsel %vm420, %v1307, %v1309
      %v1311 = vrot.slane %v1207, 1
      %v1312 = vrot.slane %v1208, 1
      %v1313 = vsel %vm420, %v1311, %v1312
      %v1314 = vrot.slane %v1209, 1
      %v1315 = vsel %vm420, %v1312, %v1314
      %v1316 = vrot.slane %v1210, 1
      %v1317 = vrot.slane %v1211, 1
      %v1318 = vsel %vm420, %v1316, %v1317
      %v1319 = vrot.slane %v1212, 1
      %v1320 = vsel %vm420, %v1317, %v1319
      %v1321 = vrot.slane %v1213, 1
      %v1322 = vrot.slane %v1214, 1
      %v1323 = vsel %vm420, %v1321, %v1322
      %v1324 = vrot.slane %v1215, 1
      %v1325 = vsel %vm420, %v1322, %v1324
      %v1326 = vrot.slane %v1216, 1
      %v1327 = vrot.slane %v1217, 1
      %v1328 = vsel %vm420, %v1326, %v1327
      %v1329 = vrot.slane %v1218, 1
      %v1330 = vsel %vm420, %v1327, %v1329
      %v1331 = vrot.slane %v1219, 1
      %v1332 = vrot.slane %v1220, 1
      %v1333 = vsel %vm420, %v1331, %v1332
      %v1334 = vrot.slane %v1221, 1
      %v1335 = vsel %vm420, %v1332, %v1334
      %v1336 = vrot.slane %v1222, 1
      %v1337 = vrot.slane %v1223, 1
      %v1338 = vsel %vm420, %v1336, %v1337
      %v1339 = vrot.slane %v1224, 1
      %v1340 = vsel %vm420, %v1337, %v1339
      %v1341 = vrot.slane %v1225, 1
      %v1342 = vrot.slane %v1226, 1
      %v1343 = vsel %vm420, %v1341, %v1342
      %v1344 = vrot.slane %v1227, 1
      %v1345 = vsel %vm420, %v1342, %v1344
      %v1346 = vrot.slane %v1228, 1
      %v1347 = vrot.slane %v1229, 1
      %v1348 = vsel %vm420, %v1346, %v1347
      %v1349 = vrot.slane %v1230, 1
      %v1350 = vsel %vm420, %v1347, %v1349
      %v1351 = vrot.slane %v1231, 1
      %v1352 = vrot.slane %v1232, 1
      %v1353 = vsel %vm420, %v1351, %v1352
      %v1354 = vrot.slane %v1233, 1
      %v1355 = vsel %vm420, %v1352, %v1354
      %v1356 = vrot.slane %v1234, 1
      %v1357 = vrot.slane %v1235, 1
      %v1358 = vsel %vm420, %v1356, %v1357
      %v1359 = vrot.slane %v1236, 1
      %v1360 = vsel %vm420, %v1357, %v1359
      %v1361 = vrot.slane %v1237, 1
      %v1362 = vrot.slane %v1238, 1
      %v1363 = vsel %vm420, %v1361, %v1362
      %v1364 = vrot.slane %v1239, 1
      %v1365 = vsel %vm420, %v1362, %v1364
      %v1366 = vrot.slane %v1240, 1
      %v1367 = vrot.slane %v1241, 1
      %v1368 = vsel %vm420, %v1366, %v1367
      %v1369 = vrot.slane %v1242, 1
      %v1370 = vsel %vm420, %v1367, %v1369
      %v1419 = vadd.f32 %v1143, %v1293
      %v1420 = vadd.f32 %v1144, %v1295
      %v1421 = vadd.f32 %v1145, %v1294
      %v1422 = vadd.f32 %v1146, %v1298
      %v1423 = vadd.f32 %v1147, %v1300
      %v1424 = vadd.f32 %v1148, %v1299
      %v1425 = vadd.f32 %v1149, %v1303
      %v1426 = vadd.f32 %v1150, %v1305
      %v1427 = vadd.f32 %v1151, %v1304
      %v1428 = vadd.f32 %v1152, %v1308
      %v1429 = vadd.f32 %v1153, %v1310
      %v1430 = vadd.f32 %v1154, %v1309
      %v1431 = vadd.f32 %v1155, %v1313
      %v1432 = vadd.f32 %v1156, %v1315
      %v1433 = vadd.f32 %v1157, %v1314
      %v1434 = vadd.f32 %v1158, %v1318
      %v1435 = vadd.f32 %v1159, %v1320
      %v1436 = vadd.f32 %v1160, %v1319
      %v1437 = vadd.f32 %v1161, %v1323
      %v1438 = vadd.f32 %v1162, %v1325
      %v1439 = vadd.f32 %v1163, %v1324
      %v1440 = vadd.f32 %v1164, %v1328
      %v1441 = vadd.f32 %v1165, %v1330
      %v1442 = vadd.f32 %v1166, %v1329
      %v1443 = vadd.f32 %v1167, %v1333
      %v1444 = vadd.f32 %v1168, %v1335
      %v1445 = vadd.f32 %v1169, %v1334
      %v1446 = vadd.f32 %v1170, %v1338
      %v1447 = vadd.f32 %v1171, %v1340
      %v1448 = vadd.f32 %v1172, %v1339
      %v1449 = vadd.f32 %v1173, %v1343
      %v1450 = vadd.f32 %v1174, %v1345
      %v1451 = vadd.f32 %v1175, %v1344
      %v1452 = vadd.f32 %v1176, %v1348
      %v1453 = vadd.f32 %v1177, %v1350
      %v1454 = vadd.f32 %v1178, %v1349
      %v1455 = vadd.f32 %v1179, %v1353
      %v1456 = vadd.f32 %v1180, %v1355
      %v1457 = vadd.f32 %v1181, %v1354
      %v1458 = vadd.f32 %v1182, %v1358
      %v1459 = vadd.f32 %v1183, %v1360
      %v1460 = vadd.f32 %v1184, %v1359
      %v1461 = vadd.f32 %v1185, %v1363
      %v1462 = vadd.f32 %v1186, %v1365
      %v1463 = vadd.f32 %v1187, %v1364
      %v1464 = vadd.f32 %v1188, %v1368
      %v1465 = vadd.f32 %v1189, %v1370
      %v1466 = vadd.f32 %v1190, %v1369
      %v1467 = vlaneseq
      %v1468 = vshrl.u32 %v1467, 7
      %v1469 = vsub.s32 6, %v1468
      %v1470 = vrot.slane %v279, %v1469
      %v1471 = vmul.f32 %v228, %v1470
      %v1472 = vmul.f32 %v229, %v1470
      %v1473 = vmul.f32 %v230, %v1470
      %v1474 = vmul.f32 %v231, %v1470
      %v1475 = vmul.f32 %v232, %v1470
      %v1476 = vmul.f32 %v233, %v1470
      %v1477 = vmul.f32 %v234, %v1470
      %v1478 = vmul.f32 %v235, %v1470
      %v1479 = vmul.f32 %v236, %v1470
      %v1480 = vmul.f32 %v237, %v1470
      %v1481 = vmul.f32 %v238, %v1470
      %v1482 = vmul.f32 %v239, %v1470
      %v1483 = vmul.f32 %v240, %v1470
      %v1484 = vmul.f32 %v241, %v1470
      %v1485 = vmul.f32 %v242, %v1470
      %v1486 = vmul.f32 %v243, %v1470
      %v1487 = vmul.f32 %v244, %v1470
      %v1488 = vmul.f32 %v245, %v1470
      %v1489 = vmul.f32 %v246, %v1470
      %v1490 = vmul.f32 %v247, %v1470
      %v1491 = vmul.f32 %v248, %v1470
      %v1492 = vmul.f32 %v249, %v1470
      %v1493 = vmul.f32 %v250, %v1470
      %v1494 = vmul.f32 %v251, %v1470
      %v1495 = vmul.f32 %v252, %v1470
      %v1496 = vmul.f32 %v253, %v1470
      %v1497 = vmul.f32 %v254, %v1470
      %v1498 = vmul.f32 %v255, %v1470
      %v1499 = vmul.f32 %v256, %v1470
      %v1500 = vmul.f32 %v257, %v1470
      %v1501 = vmul.f32 %v258, %v1470
      %v1502 = vmul.f32 %v259, %v1470
      %v1503 = vmul.f32 %v260, %v1470
      %v1504 = vmul.f32 %v261, %v1470
      %v1505 = vmul.f32 %v262, %v1470
      %v1506 = vmul.f32 %v263, %v1470
      %v1507 = vmul.f32 %v264, %v1470
      %v1508 = vmul.f32 %v265, %v1470
      %v1509 = vmul.f32 %v266, %v1470
      %v1510 = vmul.f32 %v267, %v1470
      %v1511 = vmul.f32 %v268, %v1470
      %v1512 = vmul.f32 %v269, %v1470
      %v1513 = vmul.f32 %v270, %v1470
      %v1514 = vmul.f32 %v271, %v1470
      %v1515 = vmul.f32 %v272, %v1470
      %v1516 = vmul.f32 %v273, %v1470
      %v1517 = vmul.f32 %v274, %v1470
      %v1518 = vmul.f32 %v275, %v1470
      %v1519 = vadd.f32 %v1419, %v1471
      %v1520 = vadd.f32 %v1420, %v1472
      %v1521 = vadd.f32 %v1421, %v1473
      %v1522 = vadd.f32 %v1422, %v1474
      %v1523 = vadd.f32 %v1423, %v1475
      %v1524 = vadd.f32 %v1424, %v1476
      %v1525 = vadd.f32 %v1425, %v1477
      %v1526 = vadd.f32 %v1426, %v1478
      %v1527 = vadd.f32 %v1427, %v1479
      %v1528 = vadd.f32 %v1428, %v1480
      %v1529 = vadd.f32 %v1429, %v1481
      %v1530 = vadd.f32 %v1430, %v1482
      %v1531 = vadd.f32 %v1431, %v1483
      %v1532 = vadd.f32 %v1432, %v1484
      %v1533 = vadd.f32 %v1433, %v1485
      %v1534 = vadd.f32 %v1434, %v1486
      %v1535 = vadd.f32 %v1435, %v1487
      %v1536 = vadd.f32 %v1436, %v1488
      %v1537 = vadd.f32 %v1437, %v1489
      %v1538 = vadd.f32 %v1438, %v1490
      %v1539 = vadd.f32 %v1439, %v1491
      %v1540 = vadd.f32 %v1440, %v1492
      %v1541 = vadd.f32 %v1441, %v1493
      %v1542 = vadd.f32 %v1442, %v1494
      %v1543 = vadd.f32 %v1443, %v1495
      %v1544 = vadd.f32 %v1444, %v1496
      %v1545 = vadd.f32 %v1445, %v1497
      %v1546 = vadd.f32 %v1446, %v1498
      %v1547 = vadd.f32 %v1447, %v1499
      %v1548 = vadd.f32 %v1448, %v1500
      %v1549 = vadd.f32 %v1449, %v1501
      %v1550 = vadd.f32 %v1450, %v1502
      %v1551 = vadd.f32 %v1451, %v1503
      %v1552 = vadd.f32 %v1452, %v1504
      %v1553 = vadd.f32 %v1453, %v1505
      %v1554 = vadd.f32 %v1454, %v1506
      %v1555 = vadd.f32 %v1455, %v1507
      %v1556 = vadd.f32 %v1456, %v1508
      %v1557 = vadd.f32 %v1457, %v1509
      %v1558 = vadd.f32 %v1458, %v1510
      %v1559 = vadd.f32 %v1459, %v1511
      %v1560 = vadd.f32 %v1460, %v1512
      %v1561 = vadd.f32 %v1461, %v1513
      %v1562 = vadd.f32 %v1462, %v1514
      %v1563 = vadd.f32 %v1463, %v1515
      %v1564 = vadd.f32 %v1464, %v1516
      %v1565 = vadd.f32 %v1465, %v1517
      %v1566 = vadd.f32 %v1466, %v1518
      %v1567 = vlaneseq
      %v1568 = vshrl.u32 %v1567, 7
      %v1569 = vsub.s32 7, %v1568
      %v1570 = vrot.slane %v279, %v1569
      %v1571 = vmul.f32 %v228, %v1570
      %v1572 = vmul.f32 %v229, %v1570
      %v1573 = vmul.f32 %v230, %v1570
      %v1574 = vmul.f32 %v231, %v1570
      %v1575 = vmul.f32 %v232, %v1570
      %v1576 = vmul.f32 %v233, %v1570
      %v1577 = vmul.f32 %v234, %v1570
      %v1578 = vmul.f32 %v235, %v1570
      %v1579 = vmul.f32 %v236, %v1570
      %v1580 = vmul.f32 %v237, %v1570
      %v1581 = vmul.f32 %v238, %v1570
      %v1582 = vmul.f32 %v239, %v1570
      %v1583 = vmul.f32 %v240, %v1570
      %v1584 = vmul.f32 %v241, %v1570
      %v1585 = vmul.f32 %v242, %v1570
      %v1586 = vmul.f32 %v243, %v1570
      %v1587 = vmul.f32 %v244, %v1570
      %v1588 = vmul.f32 %v245, %v1570
      %v1589 = vmul.f32 %v246, %v1570
      %v1590 = vmul.f32 %v247, %v1570
      %v1591 = vmul.f32 %v248, %v1570
      %v1592 = vmul.f32 %v249, %v1570
      %v1593 = vmul.f32 %v250, %v1570
      %v1594 = vmul.f32 %v251, %v1570
      %v1595 = vmul.f32 %v252, %v1570
      %v1596 = vmul.f32 %v253, %v1570
      %v1597 = vmul.f32 %v254, %v1570
      %v1598 = vmul.f32 %v255, %v1570
      %v1599 = vmul.f32 %v256, %v1570
      %v1600 = vmul.f32 %v257, %v1570
      %v1601 = vmul.f32 %v258, %v1570
      %v1602 = vmul.f32 %v259, %v1570
      %v1603 = vmul.f32 %v260, %v1570
      %v1604 = vmul.f32 %v261, %v1570
      %v1605 = vmul.f32 %v262, %v1570
      %v1606 = vmul.f32 %v263, %v1570
      %v1607 = vmul.f32 %v264, %v1570
      %v1608 = vmul.f32 %v265, %v1570
      %v1609 = vmul.f32 %v266, %v1570
      %v1610 = vmul.f32 %v267, %v1570
      %v1611 = vmul.f32 %v268, %v1570
      %v1612 = vmul.f32 %v269, %v1570
      %v1613 = vmul.f32 %v270, %v1570
      %v1614 = vmul.f32 %v271, %v1570
      %v1615 = vmul.f32 %v272, %v1570
      %v1616 = vmul.f32 %v273, %v1570
      %v1617 = vmul.f32 %v274, %v1570
      %v1618 = vmul.f32 %v275, %v1570
      %v1667 = vrot.slane %v1571, 1
      %v1668 = vrot.slane %v1572, 1
      %v1669 = vsel %vm420, %v1667, %v1668
      %v1670 = vrot.slane %v1573, 1
      %v1671 = vsel %vm420, %v1668, %v1670
      %v1672 = vrot.slane %v1574, 1
      %v1673 = vrot.slane %v1575, 1
      %v1674 = vsel %vm420, %v1672, %v1673
      %v1675 = vrot.slane %v1576, 1
      %v1676 = vsel %vm420, %v1673, %v1675
      %v1677 = vrot.slane %v1577, 1
      %v1678 = vrot.slane %v1578, 1
      %v1679 = vsel %vm420, %v1677, %v1678
      %v1680 = vrot.slane %v1579, 1
      %v1681 = vsel %vm420, %v1678, %v1680
      %v1682 = vrot.slane %v1580, 1
      %v1683 = vrot.slane %v1581, 1
      %v1684 = vsel %vm420, %v1682, %v1683
      %v1685 = vrot.slane %v1582, 1
      %v1686 = vsel %vm420, %v1683, %v1685
      %v1687 = vrot.slane %v1583, 1
      %v1688 = vrot.slane %v1584, 1
      %v1689 = vsel %vm420, %v1687, %v1688
      %v1690 = vrot.slane %v1585, 1
      %v1691 = vsel %vm420, %v1688, %v1690
      %v1692 = vrot.slane %v1586, 1
      %v1693 = vrot.slane %v1587, 1
      %v1694 = vsel %vm420, %v1692, %v1693
      %v1695 = vrot.slane %v1588, 1
      %v1696 = vsel %vm420, %v1693, %v1695
      %v1697 = vrot.slane %v1589, 1
      %v1698 = vrot.slane %v1590, 1
      %v1699 = vsel %vm420, %v1697, %v1698
      %v1700 = vrot.slane %v1591, 1
      %v1701 = vsel %vm420, %v1698, %v1700
      %v1702 = vrot.slane %v1592, 1
      %v1703 = vrot.slane %v1593, 1
      %v1704 = vsel %vm420, %v1702, %v1703
      %v1705 = vrot.slane %v1594, 1
      %v1706 = vsel %vm420, %v1703, %v1705
      %v1707 = vrot.slane %v1595, 1
      %v1708 = vrot.slane %v1596, 1
      %v1709 = vsel %vm420, %v1707, %v1708
      %v1710 = vrot.slane %v1597, 1
      %v1711 = vsel %vm420, %v1708, %v1710
      %v1712 = vrot.slane %v1598, 1
      %v1713 = vrot.slane %v1599, 1
      %v1714 = vsel %vm420, %v1712, %v1713
      %v1715 = vrot.slane %v1600, 1
      %v1716 = vsel %vm420, %v1713, %v1715
      %v1717 = vrot.slane %v1601, 1
      %v1718 = vrot.slane %v1602, 1
      %v1719 = vsel %vm420, %v1717, %v1718
      %v1720 = vrot.slane %v1603, 1
      %v1721 = vsel %vm420, %v1718, %v1720
      %v1722 = vrot.slane %v1604, 1
      %v1723 = vrot.slane %v1605, 1
      %v1724 = vsel %vm420, %v1722, %v1723
      %v1725 = vrot.slane %v1606, 1
      %v1726 = vsel %vm420, %v1723, %v1725
      %v1727 = vrot.slane %v1607, 1
      %v1728 = vrot.slane %v1608, 1
      %v1729 = vsel %vm420, %v1727, %v1728
      %v1730 = vrot.slane %v1609, 1
      %v1731 = vsel %vm420, %v1728, %v1730
      %v1732 = vrot.slane %v1610, 1
      %v1733 = vrot.slane %v1611, 1
      %v1734 = vsel %vm420, %v1732, %v1733
      %v1735 = vrot.slane %v1612, 1
      %v1736 = vsel %vm420, %v1733, %v1735
      %v1737 = vrot.slane %v1613, 1
      %v1738 = vrot.slane %v1614, 1
      %v1739 = vsel %vm420, %v1737, %v1738
      %v1740 = vrot.slane %v1615, 1
      %v1741 = vsel %vm420, %v1738, %v1740
      %v1742 = vrot.slane %v1616, 1
      %v1743 = vrot.slane %v1617, 1
      %v1744 = vsel %vm420, %v1742, %v1743
      %v1745 = vrot.slane %v1618, 1
      %v1746 = vsel %vm420, %v1743, %v1745
      %v1795 = vadd.f32 %v1519, %v1669
      %v1796 = vadd.f32 %v1520, %v1671
      %v1797 = vadd.f32 %v1521, %v1670
      %v1798 = vadd.f32 %v1522, %v1674
      %v1799 = vadd.f32 %v1523, %v1676
      %v1800 = vadd.f32 %v1524, %v1675
      %v1801 = vadd.f32 %v1525, %v1679
      %v1802 = vadd.f32 %v1526, %v1681
      %v1803 = vadd.f32 %v1527, %v1680
      %v1804 = vadd.f32 %v1528, %v1684
      %v1805 = vadd.f32 %v1529, %v1686
      %v1806 = vadd.f32 %v1530, %v1685
      %v1807 = vadd.f32 %v1531, %v1689
      %v1808 = vadd.f32 %v1532, %v1691
      %v1809 = vadd.f32 %v1533, %v1690
      %v1810 = vadd.f32 %v1534, %v1694
      %v1811 = vadd.f32 %v1535, %v1696
      %v1812 = vadd.f32 %v1536, %v1695
      %v1813 = vadd.f32 %v1537, %v1699
      %v1814 = vadd.f32 %v1538, %v1701
      %v1815 = vadd.f32 %v1539, %v1700
      %v1816 = vadd.f32 %v1540, %v1704
      %v1817 = vadd.f32 %v1541, %v1706
      %v1818 = vadd.f32 %v1542, %v1705
      %v1819 = vadd.f32 %v1543, %v1709
      %v1820 = vadd.f32 %v1544, %v1711
      %v1821 = vadd.f32 %v1545, %v1710
      %v1822 = vadd.f32 %v1546, %v1714
      %v1823 = vadd.f32 %v1547, %v1716
      %v1824 = vadd.f32 %v1548, %v1715
      %v1825 = vadd.f32 %v1549, %v1719
      %v1826 = vadd.f32 %v1550, %v1721
      %v1827 = vadd.f32 %v1551, %v1720
      %v1828 = vadd.f32 %v1552, %v1724
      %v1829 = vadd.f32 %v1553, %v1726
      %v1830 = vadd.f32 %v1554, %v1725
      %v1831 = vadd.f32 %v1555, %v1729
      %v1832 = vadd.f32 %v1556, %v1731
      %v1833 = vadd.f32 %v1557, %v1730
      %v1834 = vadd.f32 %v1558, %v1734
      %v1835 = vadd.f32 %v1559, %v1736
      %v1836 = vadd.f32 %v1560, %v1735
      %v1837 = vadd.f32 %v1561, %v1739
      %v1838 = vadd.f32 %v1562, %v1741
      %v1839 = vadd.f32 %v1563, %v1740
      %v1840 = vadd.f32 %v1564, %v1744
      %v1841 = vadd.f32 %v1565, %v1746
      %v1842 = vadd.f32 %v1566, %v1745
      %v1843 = vadd.f32 %v1795, %v881
      %v1844 = vadd.f32 %v1796, %v881
      %v1845 = vadd.f32 %v1797, %v881
      %v1846 = vadd.f32 %v1798, %v881
      %v1847 = vadd.f32 %v1799, %v881
      %v1848 = vadd.f32 %v1800, %v881
      %v1849 = vadd.f32 %v1801, %v881
      %v1850 = vadd.f32 %v1802, %v881
      %v1851 = vadd.f32 %v1803, %v881
      %v1852 = vadd.f32 %v1804, %v881
      %v1853 = vadd.f32 %v1805, %v881
      %v1854 = vadd.f32 %v1806, %v881
      %v1855 = vadd.f32 %v1807, %v881
      %v1856 = vadd.f32 %v1808, %v881
      %v1857 = vadd.f32 %v1809, %v881
      %v1858 = vadd.f32 %v1810, %v881
      %v1859 = vadd.f32 %v1811, %v881
      %v1860 = vadd.f32 %v1812, %v881
      %v1861 = vadd.f32 %v1813, %v881
      %v1862 = vadd.f32 %v1814, %v881
      %v1863 = vadd.f32 %v1815, %v881
      %v1864 = vadd.f32 %v1816, %v881
      %v1865 = vadd.f32 %v1817, %v881
      %v1866 = vadd.f32 %v1818, %v881
      %v1867 = vadd.f32 %v1819, %v881
      %v1868 = vadd.f32 %v1820, %v881
      %v1869 = vadd.f32 %v1821, %v881
      %v1870 = vadd.f32 %v1822, %v881
      %v1871 = vadd.f32 %v1823, %v881
      %v1872 = vadd.f32 %v1824, %v881
      %v1873 = vadd.f32 %v1825, %v881
      %v1874 = vadd.f32 %v1826, %v881
      %v1875 = vadd.f32 %v1827, %v881
      %v1876 = vadd.f32 %v1828, %v881
      %v1877 = vadd.f32 %v1829, %v881
      %v1878 = vadd.f32 %v1830, %v881
      %v1879 = vadd.f32 %v1831, %v881
      %v1880 = vadd.f32 %v1832, %v881
      %v1881 = vadd.f32 %v1833, %v881
      %v1882 = vadd.f32 %v1834, %v881
      %v1883 = vadd.f32 %v1835, %v881
      %v1884 = vadd.f32 %v1836, %v881
      %v1885 = vadd.f32 %v1837, %v881
      %v1886 = vadd.f32 %v1838, %v881
      %v1887 = vadd.f32 %v1839, %v881
      %v1888 = vadd.f32 %v1840, %v881
      %v1889 = vadd.f32 %v1841, %v881
      %v1890 = vadd.f32 %v1842, %v881
      %v1891 = vxor.u32 %v1843, 2147483648
      %v1892 = vxor.u32 %v1844, 2147483648
      %v1893 = vxor.u32 %v1845, 2147483648
      %v1894 = vxor.u32 %v1846, 2147483648
      %v1895 = vxor.u32 %v1847, 2147483648
      %v1896 = vxor.u32 %v1848, 2147483648
      %v1897 = vxor.u32 %v1849, 2147483648
      %v1898 = vxor.u32 %v1850, 2147483648
      %v1899 = vxor.u32 %v1851, 2147483648
      %v1900 = vxor.u32 %v1852, 2147483648
      %v1901 = vxor.u32 %v1853, 2147483648
      %v1902 = vxor.u32 %v1854, 2147483648
      %v1903 = vxor.u32 %v1855, 2147483648
      %v1904 = vxor.u32 %v1856, 2147483648
      %v1905 = vxor.u32 %v1857, 2147483648
      %v1906 = vxor.u32 %v1858, 2147483648
      %v1907 = vxor.u32 %v1859, 2147483648
      %v1908 = vxor.u32 %v1860, 2147483648
      %v1909 = vxor.u32 %v1861, 2147483648
      %v1910 = vxor.u32 %v1862, 2147483648
      %v1911 = vxor.u32 %v1863, 2147483648
      %v1912 = vxor.u32 %v1864, 2147483648
      %v1913 = vxor.u32 %v1865, 2147483648
      %v1914 = vxor.u32 %v1866, 2147483648
      %v1915 = vxor.u32 %v1867, 2147483648
      %v1916 = vxor.u32 %v1868, 2147483648
      %v1917 = vxor.u32 %v1869, 2147483648
      %v1918 = vxor.u32 %v1870, 2147483648
      %v1919 = vxor.u32 %v1871, 2147483648
      %v1920 = vxor.u32 %v1872, 2147483648
      %v1921 = vxor.u32 %v1873, 2147483648
      %v1922 = vxor.u32 %v1874, 2147483648
      %v1923 = vxor.u32 %v1875, 2147483648
      %v1924 = vxor.u32 %v1876, 2147483648
      %v1925 = vxor.u32 %v1877, 2147483648
      %v1926 = vxor.u32 %v1878, 2147483648
      %v1927 = vxor.u32 %v1879, 2147483648
      %v1928 = vxor.u32 %v1880, 2147483648
      %v1929 = vxor.u32 %v1881, 2147483648
      %v1930 = vxor.u32 %v1882, 2147483648
      %v1931 = vxor.u32 %v1883, 2147483648
      %v1932 = vxor.u32 %v1884, 2147483648
      %v1933 = vxor.u32 %v1885, 2147483648
      %v1934 = vxor.u32 %v1886, 2147483648
      %v1935 = vxor.u32 %v1887, 2147483648
      %v1936 = vxor.u32 %v1888, 2147483648
      %v1937 = vxor.u32 %v1889, 2147483648
      %v1938 = vxor.u32 %v1890, 2147483648
      %v1939 = vmul.f32 %v1891, 1.442695
      %v1940 = vpow.pop %v1939
      %v1941 = vmul.f32 %v1892, 1.442695
      %v1942 = vpow.pop %v1941
      %v1943 = vmul.f32 %v1893, 1.442695
      %v1944 = vpow.pop %v1943
      %v1945 = vmul.f32 %v1894, 1.442695
      %v1946 = vpow.pop %v1945
      %v1947 = vmul.f32 %v1895, 1.442695
      %v1948 = vpow.pop %v1947
      %v1949 = vmul.f32 %v1896, 1.442695
      %v1950 = vpow.pop %v1949
      %v1951 = vmul.f32 %v1897, 1.442695
      %v1952 = vpow.pop %v1951
      %v1953 = vmul.f32 %v1898, 1.442695
      %v1954 = vpow.pop %v1953
      %v1955 = vmul.f32 %v1899, 1.442695
      %v1956 = vpow.pop %v1955
      %v1957 = vmul.f32 %v1900, 1.442695
      %v1958 = vpow.pop %v1957
      %v1959 = vmul.f32 %v1901, 1.442695
      %v1960 = vpow.pop %v1959
      %v1961 = vmul.f32 %v1902, 1.442695
      %v1962 = vpow.pop %v1961
      %v1963 = vmul.f32 %v1903, 1.442695
      %v1964 = vpow.pop %v1963
      %v1965 = vmul.f32 %v1904, 1.442695
      %v1966 = vpow.pop %v1965
      %v1967 = vmul.f32 %v1905, 1.442695
      %v1968 = vpow.pop %v1967
      %v1969 = vmul.f32 %v1906, 1.442695
      %v1970 = vpow.pop %v1969
      %v1971 = vmul.f32 %v1907, 1.442695
      %v1972 = vpow.pop %v1971
      %v1973 = vmul.f32 %v1908, 1.442695
      %v1974 = vpow.pop %v1973
      %v1975 = vmul.f32 %v1909, 1.442695
      %v1976 = vpow.pop %v1975
      %v1977 = vmul.f32 %v1910, 1.442695
      %v1978 = vpow.pop %v1977
      %v1979 = vmul.f32 %v1911, 1.442695
      %v1980 = vpow.pop %v1979
      %v1981 = vmul.f32 %v1912, 1.442695
      %v1982 = vpow.pop %v1981
      %v1983 = vmul.f32 %v1913, 1.442695
      %v1984 = vpow.pop %v1983
      %v1985 = vmul.f32 %v1914, 1.442695
      %v1986 = vpow.pop %v1985
      %v1987 = vmul.f32 %v1915, 1.442695
      %v1988 = vpow.pop %v1987
      %v1989 = vmul.f32 %v1916, 1.442695
      %v1990 = vpow.pop %v1989
      %v1991 = vmul.f32 %v1917, 1.442695
      %v1992 = vpow.pop %v1991
      %v1993 = vmul.f32 %v1918, 1.442695
      %v1994 = vpow.pop %v1993
      %v1995 = vmul.f32 %v1919, 1.442695
      %v1996 = vpow.pop %v1995
      %v1997 = vmul.f32 %v1920, 1.442695
      %v1998 = vpow.pop %v1997
      %v1999 = vmul.f32 %v1921, 1.442695
      %v2000 = vpow.pop %v1999
      %v2001 = vmul.f32 %v1922, 1.442695
      %v2002 = vpow.pop %v2001
      %v2003 = vmul.f32 %v1923, 1.442695
      %v2004 = vpow.pop %v2003
      %v2005 = vmul.f32 %v1924, 1.442695
      %v2006 = vpow.pop %v2005
      %v2007 = vmul.f32 %v1925, 1.442695
      %v2008 = vpow.pop %v2007
      %v2009 = vmul.f32 %v1926, 1.442695
      %v2010 = vpow.pop %v2009
      %v2011 = vmul.f32 %v1927, 1.442695
      %v2012 = vpow.pop %v2011
      %v2013 = vmul.f32 %v1928, 1.442695
      %v2014 = vpow.pop %v2013
      %v2015 = vmul.f32 %v1929, 1.442695
      %v2016 = vpow.pop %v2015
      %v2017 = vmul.f32 %v1930, 1.442695
      %v2018 = vpow.pop %v2017
      %v2019 = vmul.f32 %v1931, 1.442695
      %v2020 = vpow.pop %v2019
      %v2021 = vmul.f32 %v1932, 1.442695
      %v2022 = vpow.pop %v2021
      %v2023 = vmul.f32 %v1933, 1.442695
      %v2024 = vpow.pop %v2023
      %v2025 = vmul.f32 %v1934, 1.442695
      %v2026 = vpow.pop %v2025
      %v2027 = vmul.f32 %v1935, 1.442695
      %v2028 = vpow.pop %v2027
      %v2029 = vmul.f32 %v1936, 1.442695
      %v2030 = vpow.pop %v2029
      %v2031 = vmul.f32 %v1937, 1.442695
      %v2032 = vpow.pop %v2031
      %v2033 = vmul.f32 %v1938, 1.442695
      %v2034 = vpow.pop %v2033
      %v2035 = vadd.f32 %v1940, 1.0
      %v2036 = vadd.f32 %v1942, 1.0
      %v2037 = vadd.f32 %v1944, 1.0
      %v2038 = vadd.f32 %v1946, 1.0
      %v2039 = vadd.f32 %v1948, 1.0
      %v2040 = vadd.f32 %v1950, 1.0
      %v2041 = vadd.f32 %v1952, 1.0
      %v2042 = vadd.f32 %v1954, 1.0
      %v2043 = vadd.f32 %v1956, 1.0
      %v2044 = vadd.f32 %v1958, 1.0
      %v2045 = vadd.f32 %v1960, 1.0
      %v2046 = vadd.f32 %v1962, 1.0
      %v2047 = vadd.f32 %v1964, 1.0
      %v2048 = vadd.f32 %v1966, 1.0
      %v2049 = vadd.f32 %v1968, 1.0
      %v2050 = vadd.f32 %v1970, 1.0
      %v2051 = vadd.f32 %v1972, 1.0
      %v2052 = vadd.f32 %v1974, 1.0
      %v2053 = vadd.f32 %v1976, 1.0
      %v2054 = vadd.f32 %v1978, 1.0
      %v2055 = vadd.f32 %v1980, 1.0
      %v2056 = vadd.f32 %v1982, 1.0
      %v2057 = vadd.f32 %v1984, 1.0
      %v2058 = vadd.f32 %v1986, 1.0
      %v2059 = vadd.f32 %v1988, 1.0
      %v2060 = vadd.f32 %v1990, 1.0
      %v2061 = vadd.f32 %v1992, 1.0
      %v2062 = vadd.f32 %v1994, 1.0
      %v2063 = vadd.f32 %v1996, 1.0
      %v2064 = vadd.f32 %v1998, 1.0
      %v2065 = vadd.f32 %v2000, 1.0
      %v2066 = vadd.f32 %v2002, 1.0
      %v2067 = vadd.f32 %v2004, 1.0
      %v2068 = vadd.f32 %v2006, 1.0
      %v2069 = vadd.f32 %v2008, 1.0
      %v2070 = vadd.f32 %v2010, 1.0
      %v2071 = vadd.f32 %v2012, 1.0
      %v2072 = vadd.f32 %v2014, 1.0
      %v2073 = vadd.f32 %v2016, 1.0
      %v2074 = vadd.f32 %v2018, 1.0
      %v2075 = vadd.f32 %v2020, 1.0
      %v2076 = vadd.f32 %v2022, 1.0
      %v2077 = vadd.f32 %v2024, 1.0
      %v2078 = vadd.f32 %v2026, 1.0
      %v2079 = vadd.f32 %v2028, 1.0
      %v2080 = vadd.f32 %v2030, 1.0
      %v2081 = vadd.f32 %v2032, 1.0
      %v2082 = vadd.f32 %v2034, 1.0
      %v2083 = vrcp.pop %v2035
      %v2084 = vmul.f32 1.0, %v2083
      %v2085 = vrcp.pop %v2036
      %v2086 = vmul.f32 1.0, %v2085
      %v2087 = vrcp.pop %v2037
      %v2088 = vmul.f32 1.0, %v2087
      %v2089 = vrcp.pop %v2038
      %v2090 = vmul.f32 1.0, %v2089
      %v2091 = vrcp.pop %v2039
      %v2092 = vmul.f32 1.0, %v2091
      %v2093 = vrcp.pop %v2040
      %v2094 = vmul.f32 1.0, %v2093
      %v2095 = vrcp.pop %v2041
      %v2096 = vmul.f32 1.0, %v2095
      %v2097 = vrcp.pop %v2042
      %v2098 = vmul.f32 1.0, %v2097
      %v2099 = vrcp.pop %v2043
      %v2100 = vmul.f32 1.0, %v2099
      %v2101 = vrcp.pop %v2044
      %v2102 = vmul.f32 1.0, %v2101
      %v2103 = vrcp.pop %v2045
      %v2104 = vmul.f32 1.0, %v2103
      %v2105 = vrcp.pop %v2046
      %v2106 = vmul.f32 1.0, %v2105
      %v2107 = vrcp.pop %v2047
      %v2108 = vmul.f32 1.0, %v2107
      %v2109 = vrcp.pop %v2048
      %v2110 = vmul.f32 1.0, %v2109
      %v2111 = vrcp.pop %v2049
      %v2112 = vmul.f32 1.0, %v2111
      %v2113 = vrcp.pop %v2050
      %v2114 = vmul.f32 1.0, %v2113
      %v2115 = vrcp.pop %v2051
      %v2116 = vmul.f32 1.0, %v2115
      %v2117 = vrcp.pop %v2052
      %v2118 = vmul.f32 1.0, %v2117
      %v2119 = vrcp.pop %v2053
      %v2120 = vmul.f32 1.0, %v2119
      %v2121 = vrcp.pop %v2054
      %v2122 = vmul.f32 1.0, %v2121
      %v2123 = vrcp.pop %v2055
      %v2124 = vmul.f32 1.0, %v2123
      %v2125 = vrcp.pop %v2056
      %v2126 = vmul.f32 1.0, %v2125
      %v2127 = vrcp.pop %v2057
      %v2128 = vmul.f32 1.0, %v2127
      %v2129 = vrcp.pop %v2058
      %v2130 = vmul.f32 1.0, %v2129
      %v2131 = vrcp.pop %v2059
      %v2132 = vmul.f32 1.0, %v2131
      %v2133 = vrcp.pop %v2060
      %v2134 = vmul.f32 1.0, %v2133
      %v2135 = vrcp.pop %v2061
      %v2136 = vmul.f32 1.0, %v2135
      %v2137 = vrcp.pop %v2062
      %v2138 = vmul.f32 1.0, %v2137
      %v2139 = vrcp.pop %v2063
      %v2140 = vmul.f32 1.0, %v2139
      %v2141 = vrcp.pop %v2064
      %v2142 = vmul.f32 1.0, %v2141
      %v2143 = vrcp.pop %v2065
      %v2144 = vmul.f32 1.0, %v2143
      %v2145 = vrcp.pop %v2066
      %v2146 = vmul.f32 1.0, %v2145
      %v2147 = vrcp.pop %v2067
      %v2148 = vmul.f32 1.0, %v2147
      %v2149 = vrcp.pop %v2068
      %v2150 = vmul.f32 1.0, %v2149
      %v2151 = vrcp.pop %v2069
      %v2152 = vmul.f32 1.0, %v2151
      %v2153 = vrcp.pop %v2070
      %v2154 = vmul.f32 1.0, %v2153
      %v2155 = vrcp.pop %v2071
      %v2156 = vmul.f32 1.0, %v2155
      %v2157 = vrcp.pop %v2072
      %v2158 = vmul.f32 1.0, %v2157
      %v2159 = vrcp.pop %v2073
      %v2160 = vmul.f32 1.0, %v2159
      %v2161 = vrcp.pop %v2074
      %v2162 = vmul.f32 1.0, %v2161
      %v2163 = vrcp.pop %v2075
      %v2164 = vmul.f32 1.0, %v2163
      %v2165 = vrcp.pop %v2076
      %v2166 = vmul.f32 1.0, %v2165
      %v2167 = vrcp.pop %v2077
      %v2168 = vmul.f32 1.0, %v2167
      %v2169 = vrcp.pop %v2078
      %v2170 = vmul.f32 1.0, %v2169
      %v2171 = vrcp.pop %v2079
      %v2172 = vmul.f32 1.0, %v2171
      %v2173 = vrcp.pop %v2080
      %v2174 = vmul.f32 1.0, %v2173
      %v2175 = vrcp.pop %v2081
      %v2176 = vmul.f32 1.0, %v2175
      %v2177 = vrcp.pop %v2082
      %v2178 = vmul.f32 1.0, %v2177
      %v2179 = vmul.f32 %v1843, %v2084
      %v2180 = vmul.f32 %v1844, %v2086
      %v2181 = vmul.f32 %v1845, %v2088
      %v2182 = vmul.f32 %v1846, %v2090
      %v2183 = vmul.f32 %v1847, %v2092
      %v2184 = vmul.f32 %v1848, %v2094
      %v2185 = vmul.f32 %v1849, %v2096
      %v2186 = vmul.f32 %v1850, %v2098
      %v2187 = vmul.f32 %v1851, %v2100
      %v2188 = vmul.f32 %v1852, %v2102
      %v2189 = vmul.f32 %v1853, %v2104
      %v2190 = vmul.f32 %v1854, %v2106
      %v2191 = vmul.f32 %v1855, %v2108
      %v2192 = vmul.f32 %v1856, %v2110
      %v2193 = vmul.f32 %v1857, %v2112
      %v2194 = vmul.f32 %v1858, %v2114
      %v2195 = vmul.f32 %v1859, %v2116
      %v2196 = vmul.f32 %v1860, %v2118
      %v2197 = vmul.f32 %v1861, %v2120
      %v2198 = vmul.f32 %v1862, %v2122
      %v2199 = vmul.f32 %v1863, %v2124
      %v2200 = vmul.f32 %v1864, %v2126
      %v2201 = vmul.f32 %v1865, %v2128
      %v2202 = vmul.f32 %v1866, %v2130
      %v2203 = vmul.f32 %v1867, %v2132
      %v2204 = vmul.f32 %v1868, %v2134
      %v2205 = vmul.f32 %v1869, %v2136
      %v2206 = vmul.f32 %v1870, %v2138
      %v2207 = vmul.f32 %v1871, %v2140
      %v2208 = vmul.f32 %v1872, %v2142
      %v2209 = vmul.f32 %v1873, %v2144
      %v2210 = vmul.f32 %v1874, %v2146
      %v2211 = vmul.f32 %v1875, %v2148
      %v2212 = vmul.f32 %v1876, %v2150
      %v2213 = vmul.f32 %v1877, %v2152
      %v2214 = vmul.f32 %v1878, %v2154
      %v2215 = vmul.f32 %v1879, %v2156
      %v2216 = vmul.f32 %v1880, %v2158
      %v2217 = vmul.f32 %v1881, %v2160
      %v2218 = vmul.f32 %v1882, %v2162
      %v2219 = vmul.f32 %v1883, %v2164
      %v2220 = vmul.f32 %v1884, %v2166
      %v2221 = vmul.f32 %v1885, %v2168
      %v2222 = vmul.f32 %v1886, %v2170
      %v2223 = vmul.f32 %v1887, %v2172
      %v2224 = vmul.f32 %v1888, %v2174
      %v2225 = vmul.f32 %v1889, %v2176
      %v2226 = vmul.f32 %v1890, %v2178
      %v2275 = vrot.slane %v2179, 1
      %v2276 = vrot.slane %v2180, 1
      %v2277 = vsel %vm420, %v2275, %v2276
      %v2278 = vrot.slane %v2181, 1
      %v2279 = vsel %vm420, %v2276, %v2278
      %v2280 = vrot.slane %v2182, 1
      %v2281 = vrot.slane %v2183, 1
      %v2282 = vsel %vm420, %v2280, %v2281
      %v2283 = vrot.slane %v2184, 1
      %v2284 = vsel %vm420, %v2281, %v2283
      %v2285 = vrot.slane %v2185, 1
      %v2286 = vrot.slane %v2186, 1
      %v2287 = vsel %vm420, %v2285, %v2286
      %v2288 = vrot.slane %v2187, 1
      %v2289 = vsel %vm420, %v2286, %v2288
      %v2290 = vrot.slane %v2188, 1
      %v2291 = vrot.slane %v2189, 1
      %v2292 = vsel %vm420, %v2290, %v2291
      %v2293 = vrot.slane %v2190, 1
      %v2294 = vsel %vm420, %v2291, %v2293
      %v2295 = vrot.slane %v2191, 1
      %v2296 = vrot.slane %v2192, 1
      %v2297 = vsel %vm420, %v2295, %v2296
      %v2298 = vrot.slane %v2193, 1
      %v2299 = vsel %vm420, %v2296, %v2298
      %v2300 = vrot.slane %v2194, 1
      %v2301 = vrot.slane %v2195, 1
      %v2302 = vsel %vm420, %v2300, %v2301
      %v2303 = vrot.slane %v2196, 1
      %v2304 = vsel %vm420, %v2301, %v2303
      %v2305 = vrot.slane %v2197, 1
      %v2306 = vrot.slane %v2198, 1
      %v2307 = vsel %vm420, %v2305, %v2306
      %v2308 = vrot.slane %v2199, 1
      %v2309 = vsel %vm420, %v2306, %v2308
      %v2310 = vrot.slane %v2200, 1
      %v2311 = vrot.slane %v2201, 1
      %v2312 = vsel %vm420, %v2310, %v2311
      %v2313 = vrot.slane %v2202, 1
      %v2314 = vsel %vm420, %v2311, %v2313
      %v2315 = vrot.slane %v2203, 1
      %v2316 = vrot.slane %v2204, 1
      %v2317 = vsel %vm420, %v2315, %v2316
      %v2318 = vrot.slane %v2205, 1
      %v2319 = vsel %vm420, %v2316, %v2318
      %v2320 = vrot.slane %v2206, 1
      %v2321 = vrot.slane %v2207, 1
      %v2322 = vsel %vm420, %v2320, %v2321
      %v2323 = vrot.slane %v2208, 1
      %v2324 = vsel %vm420, %v2321, %v2323
      %v2325 = vrot.slane %v2209, 1
      %v2326 = vrot.slane %v2210, 1
      %v2327 = vsel %vm420, %v2325, %v2326
      %v2328 = vrot.slane %v2211, 1
      %v2329 = vsel %vm420, %v2326, %v2328
      %v2330 = vrot.slane %v2212, 1
      %v2331 = vrot.slane %v2213, 1
      %v2332 = vsel %vm420, %v2330, %v2331
      %v2333 = vrot.slane %v2214, 1
      %v2334 = vsel %vm420, %v2331, %v2333
      %v2335 = vrot.slane %v2215, 1
      %v2336 = vrot.slane %v2216, 1
      %v2337 = vsel %vm420, %v2335, %v2336
      %v2338 = vrot.slane %v2217, 1
      %v2339 = vsel %vm420, %v2336, %v2338
      %v2340 = vrot.slane %v2218, 1
      %v2341 = vrot.slane %v2219, 1
      %v2342 = vsel %vm420, %v2340, %v2341
      %v2343 = vrot.slane %v2220, 1
      %v2344 = vsel %vm420, %v2341, %v2343
      %v2345 = vrot.slane %v2221, 1
      %v2346 = vrot.slane %v2222, 1
      %v2347 = vsel %vm420, %v2345, %v2346
      %v2348 = vrot.slane %v2223, 1
      %v2349 = vsel %vm420, %v2346, %v2348
      %v2350 = vrot.slane %v2224, 1
      %v2351 = vrot.slane %v2225, 1
      %v2352 = vsel %vm420, %v2350, %v2351
      %v2353 = vrot.slane %v2226, 1
      %v2354 = vsel %vm420, %v2351, %v2353
      %v2355 = vlaneseq
      %v2356 = vshrl.u32 %v2355, 7
      %v2357 = vsub.s32 0, %v2356
      %v2358 = vrot.slane %v280, %v2357
      %v2359 = vmul.f32 %v228, %v2358
      %v2360 = vmul.f32 %v229, %v2358
      %v2361 = vmul.f32 %v231, %v2358
      %v2362 = vmul.f32 %v232, %v2358
      %v2363 = vmul.f32 %v234, %v2358
      %v2364 = vmul.f32 %v235, %v2358
      %v2365 = vmul.f32 %v237, %v2358
      %v2366 = vmul.f32 %v238, %v2358
      %v2367 = vmul.f32 %v240, %v2358
      %v2368 = vmul.f32 %v241, %v2358
      %v2369 = vmul.f32 %v243, %v2358
      %v2370 = vmul.f32 %v244, %v2358
      %v2371 = vmul.f32 %v246, %v2358
      %v2372 = vmul.f32 %v247, %v2358
      %v2373 = vmul.f32 %v249, %v2358
      %v2374 = vmul.f32 %v250, %v2358
      %v2375 = vmul.f32 %v252, %v2358
      %v2376 = vmul.f32 %v253, %v2358
      %v2377 = vmul.f32 %v255, %v2358
      %v2378 = vmul.f32 %v256, %v2358
      %v2379 = vmul.f32 %v258, %v2358
      %v2380 = vmul.f32 %v259, %v2358
      %v2381 = vmul.f32 %v261, %v2358
      %v2382 = vmul.f32 %v262, %v2358
      %v2383 = vmul.f32 %v264, %v2358
      %v2384 = vmul.f32 %v265, %v2358
      %v2385 = vmul.f32 %v267, %v2358
      %v2386 = vmul.f32 %v268, %v2358
      %v2387 = vmul.f32 %v270, %v2358
      %v2388 = vmul.f32 %v271, %v2358
      %v2389 = vmul.f32 %v273, %v2358
      %v2390 = vmul.f32 %v274, %v2358
      %v2391 = vlaneseq
      %v2392 = vshrl.u32 %v2391, 7
      %v2393 = vsub.s32 1, %v2392
      %v2394 = vrot.slane %v280, %v2393
      %v2395 = vmul.f32 %v228, %v2394
      %v2396 = vmul.f32 %v229, %v2394
      %v2397 = vmul.f32 %v230, %v2394
      %v2398 = vmul.f32 %v231, %v2394
      %v2399 = vmul.f32 %v232, %v2394
      %v2400 = vmul.f32 %v233, %v2394
      %v2401 = vmul.f32 %v234, %v2394
      %v2402 = vmul.f32 %v235, %v2394
      %v2403 = vmul.f32 %v236, %v2394
      %v2404 = vmul.f32 %v237, %v2394
      %v2405 = vmul.f32 %v238, %v2394
      %v2406 = vmul.f32 %v239, %v2394
      %v2407 = vmul.f32 %v240, %v2394
      %v2408 = vmul.f32 %v241, %v2394
      %v2409 = vmul.f32 %v242, %v2394
      %v2410 = vmul.f32 %v243, %v2394
      %v2411 = vmul.f32 %v244, %v2394
      %v2412 = vmul.f32 %v245, %v2394
      %v2413 = vmul.f32 %v246, %v2394
      %v2414 = vmul.f32 %v247, %v2394
      %v2415 = vmul.f32 %v248, %v2394
      %v2416 = vmul.f32 %v249, %v2394
      %v2417 = vmul.f32 %v250, %v2394
      %v2418 = vmul.f32 %v251, %v2394
      %v2419 = vmul.f32 %v252, %v2394
      %v2420 = vmul.f32 %v253, %v2394
      %v2421 = vmul.f32 %v254, %v2394
      %v2422 = vmul.f32 %v255, %v2394
      %v2423 = vmul.f32 %v256, %v2394
      %v2424 = vmul.f32 %v257, %v2394
      %v2425 = vmul.f32 %v258, %v2394
      %v2426 = vmul.f32 %v259, %v2394
      %v2427 = vmul.f32 %v260, %v2394
      %v2428 = vmul.f32 %v261, %v2394
      %v2429 = vmul.f32 %v262, %v2394
      %v2430 = vmul.f32 %v263, %v2394
      %v2431 = vmul.f32 %v264, %v2394
      %v2432 = vmul.f32 %v265, %v2394
      %v2433 = vmul.f32 %v266, %v2394
      %v2434 = vmul.f32 %v267, %v2394
      %v2435 = vmul.f32 %v268, %v2394
      %v2436 = vmul.f32 %v269, %v2394
      %v2437 = vmul.f32 %v270, %v2394
      %v2438 = vmul.f32 %v271, %v2394
      %v2439 = vmul.f32 %v272, %v2394
      %v2440 = vmul.f32 %v273, %v2394
      %v2441 = vmul.f32 %v274, %v2394
      %v2442 = vmul.f32 %v275, %v2394
      %v2491 = vrot.slane %v2395, 1
      %v2492 = vrot.slane %v2396, 1
      %v2493 = vsel %vm420, %v2491, %v2492
      %v2494 = vrot.slane %v2397, 1
      %v2495 = vsel %vm420, %v2492, %v2494
      %v2496 = vrot.slane %v2398, 1
      %v2497 = vrot.slane %v2399, 1
      %v2498 = vsel %vm420, %v2496, %v2497
      %v2499 = vrot.slane %v2400, 1
      %v2500 = vsel %vm420, %v2497, %v2499
      %v2501 = vrot.slane %v2401, 1
      %v2502 = vrot.slane %v2402, 1
      %v2503 = vsel %vm420, %v2501, %v2502
      %v2504 = vrot.slane %v2403, 1
      %v2505 = vsel %vm420, %v2502, %v2504
      %v2506 = vrot.slane %v2404, 1
      %v2507 = vrot.slane %v2405, 1
      %v2508 = vsel %vm420, %v2506, %v2507
      %v2509 = vrot.slane %v2406, 1
      %v2510 = vsel %vm420, %v2507, %v2509
      %v2511 = vrot.slane %v2407, 1
      %v2512 = vrot.slane %v2408, 1
      %v2513 = vsel %vm420, %v2511, %v2512
      %v2514 = vrot.slane %v2409, 1
      %v2515 = vsel %vm420, %v2512, %v2514
      %v2516 = vrot.slane %v2410, 1
      %v2517 = vrot.slane %v2411, 1
      %v2518 = vsel %vm420, %v2516, %v2517
      %v2519 = vrot.slane %v2412, 1
      %v2520 = vsel %vm420, %v2517, %v2519
      %v2521 = vrot.slane %v2413, 1
      %v2522 = vrot.slane %v2414, 1
      %v2523 = vsel %vm420, %v2521, %v2522
      %v2524 = vrot.slane %v2415, 1
      %v2525 = vsel %vm420, %v2522, %v2524
      %v2526 = vrot.slane %v2416, 1
      %v2527 = vrot.slane %v2417, 1
      %v2528 = vsel %vm420, %v2526, %v2527
      %v2529 = vrot.slane %v2418, 1
      %v2530 = vsel %vm420, %v2527, %v2529
      %v2531 = vrot.slane %v2419, 1
      %v2532 = vrot.slane %v2420, 1
      %v2533 = vsel %vm420, %v2531, %v2532
      %v2534 = vrot.slane %v2421, 1
      %v2535 = vsel %vm420, %v2532, %v2534
      %v2536 = vrot.slane %v2422, 1
      %v2537 = vrot.slane %v2423, 1
      %v2538 = vsel %vm420, %v2536, %v2537
      %v2539 = vrot.slane %v2424, 1
      %v2540 = vsel %vm420, %v2537, %v2539
      %v2541 = vrot.slane %v2425, 1
      %v2542 = vrot.slane %v2426, 1
      %v2543 = vsel %vm420, %v2541, %v2542
      %v2544 = vrot.slane %v2427, 1
      %v2545 = vsel %vm420, %v2542, %v2544
      %v2546 = vrot.slane %v2428, 1
      %v2547 = vrot.slane %v2429, 1
      %v2548 = vsel %vm420, %v2546, %v2547
      %v2549 = vrot.slane %v2430, 1
      %v2550 = vsel %vm420, %v2547, %v2549
      %v2551 = vrot.slane %v2431, 1
      %v2552 = vrot.slane %v2432, 1
      %v2553 = vsel %vm420, %v2551, %v2552
      %v2554 = vrot.slane %v2433, 1
      %v2555 = vsel %vm420, %v2552, %v2554
      %v2556 = vrot.slane %v2434, 1
      %v2557 = vrot.slane %v2435, 1
      %v2558 = vsel %vm420, %v2556, %v2557
      %v2559 = vrot.slane %v2436, 1
      %v2560 = vsel %vm420, %v2557, %v2559
      %v2561 = vrot.slane %v2437, 1
      %v2562 = vrot.slane %v2438, 1
      %v2563 = vsel %vm420, %v2561, %v2562
      %v2564 = vrot.slane %v2439, 1
      %v2565 = vsel %vm420, %v2562, %v2564
      %v2566 = vrot.slane %v2440, 1
      %v2567 = vrot.slane %v2441, 1
      %v2568 = vsel %vm420, %v2566, %v2567
      %v2569 = vrot.slane %v2442, 1
      %v2570 = vsel %vm420, %v2567, %v2569
      %v2603 = vadd.f32 %v2359, %v2493
      %v2604 = vadd.f32 %v2360, %v2495
      %v2605 = vadd.f32 %v2361, %v2498
      %v2606 = vadd.f32 %v2362, %v2500
      %v2607 = vadd.f32 %v2363, %v2503
      %v2608 = vadd.f32 %v2364, %v2505
      %v2609 = vadd.f32 %v2365, %v2508
      %v2610 = vadd.f32 %v2366, %v2510
      %v2611 = vadd.f32 %v2367, %v2513
      %v2612 = vadd.f32 %v2368, %v2515
      %v2613 = vadd.f32 %v2369, %v2518
      %v2614 = vadd.f32 %v2370, %v2520
      %v2615 = vadd.f32 %v2371, %v2523
      %v2616 = vadd.f32 %v2372, %v2525
      %v2617 = vadd.f32 %v2373, %v2528
      %v2618 = vadd.f32 %v2374, %v2530
      %v2619 = vadd.f32 %v2375, %v2533
      %v2620 = vadd.f32 %v2376, %v2535
      %v2621 = vadd.f32 %v2377, %v2538
      %v2622 = vadd.f32 %v2378, %v2540
      %v2623 = vadd.f32 %v2379, %v2543
      %v2624 = vadd.f32 %v2380, %v2545
      %v2625 = vadd.f32 %v2381, %v2548
      %v2626 = vadd.f32 %v2382, %v2550
      %v2627 = vadd.f32 %v2383, %v2553
      %v2628 = vadd.f32 %v2384, %v2555
      %v2629 = vadd.f32 %v2385, %v2558
      %v2630 = vadd.f32 %v2386, %v2560
      %v2631 = vadd.f32 %v2387, %v2563
      %v2632 = vadd.f32 %v2388, %v2565
      %v2633 = vadd.f32 %v2389, %v2568
      %v2634 = vadd.f32 %v2390, %v2570
      %v2635 = vlaneseq
      %v2636 = vshrl.u32 %v2635, 7
      %v2637 = vsub.s32 2, %v2636
      %v2638 = vrot.slane %v280, %v2637
      %v2639 = vmul.f32 %v231, %v2638
      %v2640 = vmul.f32 %v232, %v2638
      %v2641 = vmul.f32 %v234, %v2638
      %v2642 = vmul.f32 %v235, %v2638
      %v2643 = vmul.f32 %v237, %v2638
      %v2644 = vmul.f32 %v238, %v2638
      %v2645 = vmul.f32 %v240, %v2638
      %v2646 = vmul.f32 %v241, %v2638
      %v2647 = vmul.f32 %v243, %v2638
      %v2648 = vmul.f32 %v244, %v2638
      %v2649 = vmul.f32 %v246, %v2638
      %v2650 = vmul.f32 %v247, %v2638
      %v2651 = vmul.f32 %v249, %v2638
      %v2652 = vmul.f32 %v250, %v2638
      %v2653 = vmul.f32 %v252, %v2638
      %v2654 = vmul.f32 %v253, %v2638
      %v2655 = vmul.f32 %v255, %v2638
      %v2656 = vmul.f32 %v256, %v2638
      %v2657 = vmul.f32 %v258, %v2638
      %v2658 = vmul.f32 %v259, %v2638
      %v2659 = vmul.f32 %v261, %v2638
      %v2660 = vmul.f32 %v262, %v2638
      %v2661 = vmul.f32 %v264, %v2638
      %v2662 = vmul.f32 %v265, %v2638
      %v2663 = vmul.f32 %v267, %v2638
      %v2664 = vmul.f32 %v268, %v2638
      %v2665 = vmul.f32 %v270, %v2638
      %v2666 = vmul.f32 %v271, %v2638
      %v2667 = vmul.f32 %v273, %v2638
      %v2668 = vmul.f32 %v274, %v2638
      %v2669 = vmul.f32 %v276, %v2638
      %v2670 = vmul.f32 %v277, %v2638
      %v2671 = vadd.f32 %v2603, %v2639
      %v2672 = vadd.f32 %v2604, %v2640
      %v2673 = vadd.f32 %v2605, %v2641
      %v2674 = vadd.f32 %v2606, %v2642
      %v2675 = vadd.f32 %v2607, %v2643
      %v2676 = vadd.f32 %v2608, %v2644
      %v2677 = vadd.f32 %v2609, %v2645
      %v2678 = vadd.f32 %v2610, %v2646
      %v2679 = vadd.f32 %v2611, %v2647
      %v2680 = vadd.f32 %v2612, %v2648
      %v2681 = vadd.f32 %v2613, %v2649
      %v2682 = vadd.f32 %v2614, %v2650
      %v2683 = vadd.f32 %v2615, %v2651
      %v2684 = vadd.f32 %v2616, %v2652
      %v2685 = vadd.f32 %v2617, %v2653
      %v2686 = vadd.f32 %v2618, %v2654
      %v2687 = vadd.f32 %v2619, %v2655
      %v2688 = vadd.f32 %v2620, %v2656
      %v2689 = vadd.f32 %v2621, %v2657
      %v2690 = vadd.f32 %v2622, %v2658
      %v2691 = vadd.f32 %v2623, %v2659
      %v2692 = vadd.f32 %v2624, %v2660
      %v2693 = vadd.f32 %v2625, %v2661
      %v2694 = vadd.f32 %v2626, %v2662
      %v2695 = vadd.f32 %v2627, %v2663
      %v2696 = vadd.f32 %v2628, %v2664
      %v2697 = vadd.f32 %v2629, %v2665
      %v2698 = vadd.f32 %v2630, %v2666
      %v2699 = vadd.f32 %v2631, %v2667
      %v2700 = vadd.f32 %v2632, %v2668
      %v2701 = vadd.f32 %v2633, %v2669
      %v2702 = vadd.f32 %v2634, %v2670
      %v2703 = vlaneseq
      %v2704 = vshrl.u32 %v2703, 7
      %v2705 = vsub.s32 3, %v2704
      %v2706 = vrot.slane %v280, %v2705
      %v2707 = vmul.f32 %v231, %v2706
      %v2708 = vmul.f32 %v232, %v2706
      %v2709 = vmul.f32 %v233, %v2706
      %v2710 = vmul.f32 %v234, %v2706
      %v2711 = vmul.f32 %v235, %v2706
      %v2712 = vmul.f32 %v236, %v2706
      %v2713 = vmul.f32 %v237, %v2706
      %v2714 = vmul.f32 %v238, %v2706
      %v2715 = vmul.f32 %v239, %v2706
      %v2716 = vmul.f32 %v240, %v2706
      %v2717 = vmul.f32 %v241, %v2706
      %v2718 = vmul.f32 %v242, %v2706
      %v2719 = vmul.f32 %v243, %v2706
      %v2720 = vmul.f32 %v244, %v2706
      %v2721 = vmul.f32 %v245, %v2706
      %v2722 = vmul.f32 %v246, %v2706
      %v2723 = vmul.f32 %v247, %v2706
      %v2724 = vmul.f32 %v248, %v2706
      %v2725 = vmul.f32 %v249, %v2706
      %v2726 = vmul.f32 %v250, %v2706
      %v2727 = vmul.f32 %v251, %v2706
      %v2728 = vmul.f32 %v252, %v2706
      %v2729 = vmul.f32 %v253, %v2706
      %v2730 = vmul.f32 %v254, %v2706
      %v2731 = vmul.f32 %v255, %v2706
      %v2732 = vmul.f32 %v256, %v2706
      %v2733 = vmul.f32 %v257, %v2706
      %v2734 = vmul.f32 %v258, %v2706
      %v2735 = vmul.f32 %v259, %v2706
      %v2736 = vmul.f32 %v260, %v2706
      %v2737 = vmul.f32 %v261, %v2706
      %v2738 = vmul.f32 %v262, %v2706
      %v2739 = vmul.f32 %v263, %v2706
      %v2740 = vmul.f32 %v264, %v2706
      %v2741 = vmul.f32 %v265, %v2706
      %v2742 = vmul.f32 %v266, %v2706
      %v2743 = vmul.f32 %v267, %v2706
      %v2744 = vmul.f32 %v268, %v2706
      %v2745 = vmul.f32 %v269, %v2706
      %v2746 = vmul.f32 %v270, %v2706
      %v2747 = vmul.f32 %v271, %v2706
      %v2748 = vmul.f32 %v272, %v2706
      %v2749 = vmul.f32 %v273, %v2706
      %v2750 = vmul.f32 %v274, %v2706
      %v2751 = vmul.f32 %v275, %v2706
      %v2752 = vmul.f32 %v276, %v2706
      %v2753 = vmul.f32 %v277, %v2706
      %v2754 = vmul.f32 %v278, %v2706
      %v2803 = vrot.slane %v2707, 1
      %v2804 = vrot.slane %v2708, 1
      %v2805 = vsel %vm420, %v2803, %v2804
      %v2806 = vrot.slane %v2709, 1
      %v2807 = vsel %vm420, %v2804, %v2806
      %v2808 = vrot.slane %v2710, 1
      %v2809 = vrot.slane %v2711, 1
      %v2810 = vsel %vm420, %v2808, %v2809
      %v2811 = vrot.slane %v2712, 1
      %v2812 = vsel %vm420, %v2809, %v2811
      %v2813 = vrot.slane %v2713, 1
      %v2814 = vrot.slane %v2714, 1
      %v2815 = vsel %vm420, %v2813, %v2814
      %v2816 = vrot.slane %v2715, 1
      %v2817 = vsel %vm420, %v2814, %v2816
      %v2818 = vrot.slane %v2716, 1
      %v2819 = vrot.slane %v2717, 1
      %v2820 = vsel %vm420, %v2818, %v2819
      %v2821 = vrot.slane %v2718, 1
      %v2822 = vsel %vm420, %v2819, %v2821
      %v2823 = vrot.slane %v2719, 1
      %v2824 = vrot.slane %v2720, 1
      %v2825 = vsel %vm420, %v2823, %v2824
      %v2826 = vrot.slane %v2721, 1
      %v2827 = vsel %vm420, %v2824, %v2826
      %v2828 = vrot.slane %v2722, 1
      %v2829 = vrot.slane %v2723, 1
      %v2830 = vsel %vm420, %v2828, %v2829
      %v2831 = vrot.slane %v2724, 1
      %v2832 = vsel %vm420, %v2829, %v2831
      %v2833 = vrot.slane %v2725, 1
      %v2834 = vrot.slane %v2726, 1
      %v2835 = vsel %vm420, %v2833, %v2834
      %v2836 = vrot.slane %v2727, 1
      %v2837 = vsel %vm420, %v2834, %v2836
      %v2838 = vrot.slane %v2728, 1
      %v2839 = vrot.slane %v2729, 1
      %v2840 = vsel %vm420, %v2838, %v2839
      %v2841 = vrot.slane %v2730, 1
      %v2842 = vsel %vm420, %v2839, %v2841
      %v2843 = vrot.slane %v2731, 1
      %v2844 = vrot.slane %v2732, 1
      %v2845 = vsel %vm420, %v2843, %v2844
      %v2846 = vrot.slane %v2733, 1
      %v2847 = vsel %vm420, %v2844, %v2846
      %v2848 = vrot.slane %v2734, 1
      %v2849 = vrot.slane %v2735, 1
      %v2850 = vsel %vm420, %v2848, %v2849
      %v2851 = vrot.slane %v2736, 1
      %v2852 = vsel %vm420, %v2849, %v2851
      %v2853 = vrot.slane %v2737, 1
      %v2854 = vrot.slane %v2738, 1
      %v2855 = vsel %vm420, %v2853, %v2854
      %v2856 = vrot.slane %v2739, 1
      %v2857 = vsel %vm420, %v2854, %v2856
      %v2858 = vrot.slane %v2740, 1
      %v2859 = vrot.slane %v2741, 1
      %v2860 = vsel %vm420, %v2858, %v2859
      %v2861 = vrot.slane %v2742, 1
      %v2862 = vsel %vm420, %v2859, %v2861
      %v2863 = vrot.slane %v2743, 1
      %v2864 = vrot.slane %v2744, 1
      %v2865 = vsel %vm420, %v2863, %v2864
      %v2866 = vrot.slane %v2745, 1
      %v2867 = vsel %vm420, %v2864, %v2866
      %v2868 = vrot.slane %v2746, 1
      %v2869 = vrot.slane %v2747, 1
      %v2870 = vsel %vm420, %v2868, %v2869
      %v2871 = vrot.slane %v2748, 1
      %v2872 = vsel %vm420, %v2869, %v2871
      %v2873 = vrot.slane %v2749, 1
      %v2874 = vrot.slane %v2750, 1
      %v2875 = vsel %vm420, %v2873, %v2874
      %v2876 = vrot.slane %v2751, 1
      %v2877 = vsel %vm420, %v2874, %v2876
      %v2878 = vrot.slane %v2752, 1
      %v2879 = vrot.slane %v2753, 1
      %v2880 = vsel %vm420, %v2878, %v2879
      %v2881 = vrot.slane %v2754, 1
      %v2882 = vsel %vm420, %v2879, %v2881
      %v2915 = vadd.f32 %v2671, %v2805
      %v2916 = vadd.f32 %v2672, %v2807
      %v2917 = vadd.f32 %v2673, %v2810
      %v2918 = vadd.f32 %v2674, %v2812
      %v2919 = vadd.f32 %v2675, %v2815
      %v2920 = vadd.f32 %v2676, %v2817
      %v2921 = vadd.f32 %v2677, %v2820
      %v2922 = vadd.f32 %v2678, %v2822
      %v2923 = vadd.f32 %v2679, %v2825
      %v2924 = vadd.f32 %v2680, %v2827
      %v2925 = vadd.f32 %v2681, %v2830
      %v2926 = vadd.f32 %v2682, %v2832
      %v2927 = vadd.f32 %v2683, %v2835
      %v2928 = vadd.f32 %v2684, %v2837
      %v2929 = vadd.f32 %v2685, %v2840
      %v2930 = vadd.f32 %v2686, %v2842
      %v2931 = vadd.f32 %v2687, %v2845
      %v2932 = vadd.f32 %v2688, %v2847
      %v2933 = vadd.f32 %v2689, %v2850
      %v2934 = vadd.f32 %v2690, %v2852
      %v2935 = vadd.f32 %v2691, %v2855
      %v2936 = vadd.f32 %v2692, %v2857
      %v2937 = vadd.f32 %v2693, %v2860
      %v2938 = vadd.f32 %v2694, %v2862
      %v2939 = vadd.f32 %v2695, %v2865
      %v2940 = vadd.f32 %v2696, %v2867
      %v2941 = vadd.f32 %v2697, %v2870
      %v2942 = vadd.f32 %v2698, %v2872
      %v2943 = vadd.f32 %v2699, %v2875
      %v2944 = vadd.f32 %v2700, %v2877
      %v2945 = vadd.f32 %v2701, %v2880
      %v2946 = vadd.f32 %v2702, %v2882
      %v2947 = vadd.f32 %v2915, %v881
      %v2948 = vadd.f32 %v2916, %v881
      %v2949 = vadd.f32 %v2917, %v881
      %v2950 = vadd.f32 %v2918, %v881
      %v2951 = vadd.f32 %v2919, %v881
      %v2952 = vadd.f32 %v2920, %v881
      %v2953 = vadd.f32 %v2921, %v881
      %v2954 = vadd.f32 %v2922, %v881
      %v2955 = vadd.f32 %v2923, %v881
      %v2956 = vadd.f32 %v2924, %v881
      %v2957 = vadd.f32 %v2925, %v881
      %v2958 = vadd.f32 %v2926, %v881
      %v2959 = vadd.f32 %v2927, %v881
      %v2960 = vadd.f32 %v2928, %v881
      %v2961 = vadd.f32 %v2929, %v881
      %v2962 = vadd.f32 %v2930, %v881
      %v2963 = vadd.f32 %v2931, %v881
      %v2964 = vadd.f32 %v2932, %v881
      %v2965 = vadd.f32 %v2933, %v881
      %v2966 = vadd.f32 %v2934, %v881
      %v2967 = vadd.f32 %v2935, %v881
      %v2968 = vadd.f32 %v2936, %v881
      %v2969 = vadd.f32 %v2937, %v881
      %v2970 = vadd.f32 %v2938, %v881
      %v2971 = vadd.f32 %v2939, %v881
      %v2972 = vadd.f32 %v2940, %v881
      %v2973 = vadd.f32 %v2941, %v881
      %v2974 = vadd.f32 %v2942, %v881
      %v2975 = vadd.f32 %v2943, %v881
      %v2976 = vadd.f32 %v2944, %v881
      %v2977 = vadd.f32 %v2945, %v881
      %v2978 = vadd.f32 %v2946, %v881
      %v2979 = vxor.u32 %v2947, 2147483648
      %v2980 = vxor.u32 %v2948, 2147483648
      %v2981 = vxor.u32 %v2949, 2147483648
      %v2982 = vxor.u32 %v2950, 2147483648
      %v2983 = vxor.u32 %v2951, 2147483648
      %v2984 = vxor.u32 %v2952, 2147483648
      %v2985 = vxor.u32 %v2953, 2147483648
      %v2986 = vxor.u32 %v2954, 2147483648
      %v2987 = vxor.u32 %v2955, 2147483648
      %v2988 = vxor.u32 %v2956, 2147483648
      %v2989 = vxor.u32 %v2957, 2147483648
      %v2990 = vxor.u32 %v2958, 2147483648
      %v2991 = vxor.u32 %v2959, 2147483648
      %v2992 = vxor.u32 %v2960, 2147483648
      %v2993 = vxor.u32 %v2961, 2147483648
      %v2994 = vxor.u32 %v2962, 2147483648
      %v2995 = vxor.u32 %v2963, 2147483648
      %v2996 = vxor.u32 %v2964, 2147483648
      %v2997 = vxor.u32 %v2965, 2147483648
      %v2998 = vxor.u32 %v2966, 2147483648
      %v2999 = vxor.u32 %v2967, 2147483648
      %v3000 = vxor.u32 %v2968, 2147483648
      %v3001 = vxor.u32 %v2969, 2147483648
      %v3002 = vxor.u32 %v2970, 2147483648
      %v3003 = vxor.u32 %v2971, 2147483648
      %v3004 = vxor.u32 %v2972, 2147483648
      %v3005 = vxor.u32 %v2973, 2147483648
      %v3006 = vxor.u32 %v2974, 2147483648
      %v3007 = vxor.u32 %v2975, 2147483648
      %v3008 = vxor.u32 %v2976, 2147483648
      %v3009 = vxor.u32 %v2977, 2147483648
      %v3010 = vxor.u32 %v2978, 2147483648
      %v3011 = vmul.f32 %v2979, 1.442695
      %v3012 = vpow.pop %v3011
      %v3013 = vmul.f32 %v2980, 1.442695
      %v3014 = vpow.pop %v3013
      %v3015 = vmul.f32 %v2981, 1.442695
      %v3016 = vpow.pop %v3015
      %v3017 = vmul.f32 %v2982, 1.442695
      %v3018 = vpow.pop %v3017
      %v3019 = vmul.f32 %v2983, 1.442695
      %v3020 = vpow.pop %v3019
      %v3021 = vmul.f32 %v2984, 1.442695
      %v3022 = vpow.pop %v3021
      %v3023 = vmul.f32 %v2985, 1.442695
      %v3024 = vpow.pop %v3023
      %v3025 = vmul.f32 %v2986, 1.442695
      %v3026 = vpow.pop %v3025
      %v3027 = vmul.f32 %v2987, 1.442695
      %v3028 = vpow.pop %v3027
      %v3029 = vmul.f32 %v2988, 1.442695
      %v3030 = vpow.pop %v3029
      %v3031 = vmul.f32 %v2989, 1.442695
      %v3032 = vpow.pop %v3031
      %v3033 = vmul.f32 %v2990, 1.442695
      %v3034 = vpow.pop %v3033
      %v3035 = vmul.f32 %v2991, 1.442695
      %v3036 = vpow.pop %v3035
      %v3037 = vmul.f32 %v2992, 1.442695
      %v3038 = vpow.pop %v3037
      %v3039 = vmul.f32 %v2993, 1.442695
      %v3040 = vpow.pop %v3039
      %v3041 = vmul.f32 %v2994, 1.442695
      %v3042 = vpow.pop %v3041
      %v3043 = vmul.f32 %v2995, 1.442695
      %v3044 = vpow.pop %v3043
      %v3045 = vmul.f32 %v2996, 1.442695
      %v3046 = vpow.pop %v3045
      %v3047 = vmul.f32 %v2997, 1.442695
      %v3048 = vpow.pop %v3047
      %v3049 = vmul.f32 %v2998, 1.442695
      %v3050 = vpow.pop %v3049
      %v3051 = vmul.f32 %v2999, 1.442695
      %v3052 = vpow.pop %v3051
      %v3053 = vmul.f32 %v3000, 1.442695
      %v3054 = vpow.pop %v3053
      %v3055 = vmul.f32 %v3001, 1.442695
      %v3056 = vpow.pop %v3055
      %v3057 = vmul.f32 %v3002, 1.442695
      %v3058 = vpow.pop %v3057
      %v3059 = vmul.f32 %v3003, 1.442695
      %v3060 = vpow.pop %v3059
      %v3061 = vmul.f32 %v3004, 1.442695
      %v3062 = vpow.pop %v3061
      %v3063 = vmul.f32 %v3005, 1.442695
      %v3064 = vpow.pop %v3063
      %v3065 = vmul.f32 %v3006, 1.442695
      %v3066 = vpow.pop %v3065
      %v3067 = vmul.f32 %v3007, 1.442695
      %v3068 = vpow.pop %v3067
      %v3069 = vmul.f32 %v3008, 1.442695
      %v3070 = vpow.pop %v3069
      %v3071 = vmul.f32 %v3009, 1.442695
      %v3072 = vpow.pop %v3071
      %v3073 = vmul.f32 %v3010, 1.442695
      %v3074 = vpow.pop %v3073
      %v3075 = vadd.f32 %v3012, 1.0
      %v3076 = vadd.f32 %v3014, 1.0
      %v3077 = vadd.f32 %v3016, 1.0
      %v3078 = vadd.f32 %v3018, 1.0
      %v3079 = vadd.f32 %v3020, 1.0
      %v3080 = vadd.f32 %v3022, 1.0
      %v3081 = vadd.f32 %v3024, 1.0
      %v3082 = vadd.f32 %v3026, 1.0
      %v3083 = vadd.f32 %v3028, 1.0
      %v3084 = vadd.f32 %v3030, 1.0
      %v3085 = vadd.f32 %v3032, 1.0
      %v3086 = vadd.f32 %v3034, 1.0
      %v3087 = vadd.f32 %v3036, 1.0
      %v3088 = vadd.f32 %v3038, 1.0
      %v3089 = vadd.f32 %v3040, 1.0
      %v3090 = vadd.f32 %v3042, 1.0
      %v3091 = vadd.f32 %v3044, 1.0
      %v3092 = vadd.f32 %v3046, 1.0
      %v3093 = vadd.f32 %v3048, 1.0
      %v3094 = vadd.f32 %v3050, 1.0
      %v3095 = vadd.f32 %v3052, 1.0
      %v3096 = vadd.f32 %v3054, 1.0
      %v3097 = vadd.f32 %v3056, 1.0
      %v3098 = vadd.f32 %v3058, 1.0
      %v3099 = vadd.f32 %v3060, 1.0
      %v3100 = vadd.f32 %v3062, 1.0
      %v3101 = vadd.f32 %v3064, 1.0
      %v3102 = vadd.f32 %v3066, 1.0
      %v3103 = vadd.f32 %v3068, 1.0
      %v3104 = vadd.f32 %v3070, 1.0
      %v3105 = vadd.f32 %v3072, 1.0
      %v3106 = vadd.f32 %v3074, 1.0
      %v3107 = vrcp.pop %v3075
      %v3108 = vmul.f32 1.0, %v3107
      %v3109 = vrcp.pop %v3076
      %v3110 = vmul.f32 1.0, %v3109
      %v3111 = vrcp.pop %v3077
      %v3112 = vmul.f32 1.0, %v3111
      %v3113 = vrcp.pop %v3078
      %v3114 = vmul.f32 1.0, %v3113
      %v3115 = vrcp.pop %v3079
      %v3116 = vmul.f32 1.0, %v3115
      %v3117 = vrcp.pop %v3080
      %v3118 = vmul.f32 1.0, %v3117
      %v3119 = vrcp.pop %v3081
      %v3120 = vmul.f32 1.0, %v3119
      %v3121 = vrcp.pop %v3082
      %v3122 = vmul.f32 1.0, %v3121
      %v3123 = vrcp.pop %v3083
      %v3124 = vmul.f32 1.0, %v3123
      %v3125 = vrcp.pop %v3084
      %v3126 = vmul.f32 1.0, %v3125
      %v3127 = vrcp.pop %v3085
      %v3128 = vmul.f32 1.0, %v3127
      %v3129 = vrcp.pop %v3086
      %v3130 = vmul.f32 1.0, %v3129
      %v3131 = vrcp.pop %v3087
      %v3132 = vmul.f32 1.0, %v3131
      %v3133 = vrcp.pop %v3088
      %v3134 = vmul.f32 1.0, %v3133
      %v3135 = vrcp.pop %v3089
      %v3136 = vmul.f32 1.0, %v3135
      %v3137 = vrcp.pop %v3090
      %v3138 = vmul.f32 1.0, %v3137
      %v3139 = vrcp.pop %v3091
      %v3140 = vmul.f32 1.0, %v3139
      %v3141 = vrcp.pop %v3092
      %v3142 = vmul.f32 1.0, %v3141
      %v3143 = vrcp.pop %v3093
      %v3144 = vmul.f32 1.0, %v3143
      %v3145 = vrcp.pop %v3094
      %v3146 = vmul.f32 1.0, %v3145
      %v3147 = vrcp.pop %v3095
      %v3148 = vmul.f32 1.0, %v3147
      %v3149 = vrcp.pop %v3096
      %v3150 = vmul.f32 1.0, %v3149
      %v3151 = vrcp.pop %v3097
      %v3152 = vmul.f32 1.0, %v3151
      %v3153 = vrcp.pop %v3098
      %v3154 = vmul.f32 1.0, %v3153
      %v3155 = vrcp.pop %v3099
      %v3156 = vmul.f32 1.0, %v3155
      %v3157 = vrcp.pop %v3100
      %v3158 = vmul.f32 1.0, %v3157
      %v3159 = vrcp.pop %v3101
      %v3160 = vmul.f32 1.0, %v3159
      %v3161 = vrcp.pop %v3102
      %v3162 = vmul.f32 1.0, %v3161
      %v3163 = vrcp.pop %v3103
      %v3164 = vmul.f32 1.0, %v3163
      %v3165 = vrcp.pop %v3104
      %v3166 = vmul.f32 1.0, %v3165
      %v3167 = vrcp.pop %v3105
      %v3168 = vmul.f32 1.0, %v3167
      %v3169 = vrcp.pop %v3106
      %v3170 = vmul.f32 1.0, %v3169
      %v3171 = vmul.f32 %v2947, %v3108
      %v3172 = vmul.f32 %v2948, %v3110
      %v3173 = vmul.f32 %v2949, %v3112
      %v3174 = vmul.f32 %v2950, %v3114
      %v3175 = vmul.f32 %v2951, %v3116
      %v3176 = vmul.f32 %v2952, %v3118
      %v3177 = vmul.f32 %v2953, %v3120
      %v3178 = vmul.f32 %v2954, %v3122
      %v3179 = vmul.f32 %v2955, %v3124
      %v3180 = vmul.f32 %v2956, %v3126
      %v3181 = vmul.f32 %v2957, %v3128
      %v3182 = vmul.f32 %v2958, %v3130
      %v3183 = vmul.f32 %v2959, %v3132
      %v3184 = vmul.f32 %v2960, %v3134
      %v3185 = vmul.f32 %v2961, %v3136
      %v3186 = vmul.f32 %v2962, %v3138
      %v3187 = vmul.f32 %v2963, %v3140
      %v3188 = vmul.f32 %v2964, %v3142
      %v3189 = vmul.f32 %v2965, %v3144
      %v3190 = vmul.f32 %v2966, %v3146
      %v3191 = vmul.f32 %v2967, %v3148
      %v3192 = vmul.f32 %v2968, %v3150
      %v3193 = vmul.f32 %v2969, %v3152
      %v3194 = vmul.f32 %v2970, %v3154
      %v3195 = vmul.f32 %v2971, %v3156
      %v3196 = vmul.f32 %v2972, %v3158
      %v3197 = vmul.f32 %v2973, %v3160
      %v3198 = vmul.f32 %v2974, %v3162
      %v3199 = vmul.f32 %v2975, %v3164
      %v3200 = vmul.f32 %v2976, %v3166
      %v3201 = vmul.f32 %v2977, %v3168
      %v3202 = vmul.f32 %v2978, %v3170
      %v3203 = vlaneseq
      %v3204 = vshrl.u32 %v3203, 7
      %v3205 = vsub.s32 4, %v3204
      %v3206 = vrot.slane %v280, %v3205
      %v3207 = vmul.f32 %v228, %v3206
      %v3208 = vmul.f32 %v229, %v3206
      %v3209 = vmul.f32 %v230, %v3206
      %v3210 = vmul.f32 %v231, %v3206
      %v3211 = vmul.f32 %v232, %v3206
      %v3212 = vmul.f32 %v233, %v3206
      %v3213 = vmul.f32 %v234, %v3206
      %v3214 = vmul.f32 %v235, %v3206
      %v3215 = vmul.f32 %v236, %v3206
      %v3216 = vmul.f32 %v237, %v3206
      %v3217 = vmul.f32 %v238, %v3206
      %v3218 = vmul.f32 %v239, %v3206
      %v3219 = vmul.f32 %v240, %v3206
      %v3220 = vmul.f32 %v241, %v3206
      %v3221 = vmul.f32 %v242, %v3206
      %v3222 = vmul.f32 %v243, %v3206
      %v3223 = vmul.f32 %v244, %v3206
      %v3224 = vmul.f32 %v245, %v3206
      %v3225 = vmul.f32 %v246, %v3206
      %v3226 = vmul.f32 %v247, %v3206
      %v3227 = vmul.f32 %v248, %v3206
      %v3228 = vmul.f32 %v249, %v3206
      %v3229 = vmul.f32 %v250, %v3206
      %v3230 = vmul.f32 %v251, %v3206
      %v3231 = vmul.f32 %v252, %v3206
      %v3232 = vmul.f32 %v253, %v3206
      %v3233 = vmul.f32 %v254, %v3206
      %v3234 = vmul.f32 %v255, %v3206
      %v3235 = vmul.f32 %v256, %v3206
      %v3236 = vmul.f32 %v257, %v3206
      %v3237 = vmul.f32 %v258, %v3206
      %v3238 = vmul.f32 %v259, %v3206
      %v3239 = vmul.f32 %v260, %v3206
      %v3240 = vmul.f32 %v261, %v3206
      %v3241 = vmul.f32 %v262, %v3206
      %v3242 = vmul.f32 %v263, %v3206
      %v3243 = vmul.f32 %v264, %v3206
      %v3244 = vmul.f32 %v265, %v3206
      %v3245 = vmul.f32 %v266, %v3206
      %v3246 = vmul.f32 %v267, %v3206
      %v3247 = vmul.f32 %v268, %v3206
      %v3248 = vmul.f32 %v269, %v3206
      %v3249 = vmul.f32 %v270, %v3206
      %v3250 = vmul.f32 %v271, %v3206
      %v3251 = vmul.f32 %v272, %v3206
      %v3252 = vmul.f32 %v273, %v3206
      %v3253 = vmul.f32 %v274, %v3206
      %v3254 = vmul.f32 %v275, %v3206
      %v3255 = vlaneseq
      %v3256 = vshrl.u32 %v3255, 7
      %v3257 = vsub.s32 5, %v3256
      %v3258 = vrot.slane %v280, %v3257
      %v3259 = vmul.f32 %v228, %v3258
      %v3260 = vmul.f32 %v229, %v3258
      %v3261 = vmul.f32 %v230, %v3258
      %v3262 = vmul.f32 %v231, %v3258
      %v3263 = vmul.f32 %v232, %v3258
      %v3264 = vmul.f32 %v233, %v3258
      %v3265 = vmul.f32 %v234, %v3258
      %v3266 = vmul.f32 %v235, %v3258
      %v3267 = vmul.f32 %v236, %v3258
      %v3268 = vmul.f32 %v237, %v3258
      %v3269 = vmul.f32 %v238, %v3258
      %v3270 = vmul.f32 %v239, %v3258
      %v3271 = vmul.f32 %v240, %v3258
      %v3272 = vmul.f32 %v241, %v3258
      %v3273 = vmul.f32 %v242, %v3258
      %v3274 = vmul.f32 %v243, %v3258
      %v3275 = vmul.f32 %v244, %v3258
      %v3276 = vmul.f32 %v245, %v3258
      %v3277 = vmul.f32 %v246, %v3258
      %v3278 = vmul.f32 %v247, %v3258
      %v3279 = vmul.f32 %v248, %v3258
      %v3280 = vmul.f32 %v249, %v3258
      %v3281 = vmul.f32 %v250, %v3258
      %v3282 = vmul.f32 %v251, %v3258
      %v3283 = vmul.f32 %v252, %v3258
      %v3284 = vmul.f32 %v253, %v3258
      %v3285 = vmul.f32 %v254, %v3258
      %v3286 = vmul.f32 %v255, %v3258
      %v3287 = vmul.f32 %v256, %v3258
      %v3288 = vmul.f32 %v257, %v3258
      %v3289 = vmul.f32 %v258, %v3258
      %v3290 = vmul.f32 %v259, %v3258
      %v3291 = vmul.f32 %v260, %v3258
      %v3292 = vmul.f32 %v261, %v3258
      %v3293 = vmul.f32 %v262, %v3258
      %v3294 = vmul.f32 %v263, %v3258
      %v3295 = vmul.f32 %v264, %v3258
      %v3296 = vmul.f32 %v265, %v3258
      %v3297 = vmul.f32 %v266, %v3258
      %v3298 = vmul.f32 %v267, %v3258
      %v3299 = vmul.f32 %v268, %v3258
      %v3300 = vmul.f32 %v269, %v3258
      %v3301 = vmul.f32 %v270, %v3258
      %v3302 = vmul.f32 %v271, %v3258
      %v3303 = vmul.f32 %v272, %v3258
      %v3304 = vmul.f32 %v273, %v3258
      %v3305 = vmul.f32 %v274, %v3258
      %v3306 = vmul.f32 %v275, %v3258
      %v3355 = vrot.slane %v3259, 1
      %v3356 = vrot.slane %v3260, 1
      %v3357 = vsel %vm420, %v3355, %v3356
      %v3358 = vrot.slane %v3261, 1
      %v3359 = vsel %vm420, %v3356, %v3358
      %v3360 = vrot.slane %v3262, 1
      %v3361 = vrot.slane %v3263, 1
      %v3362 = vsel %vm420, %v3360, %v3361
      %v3363 = vrot.slane %v3264, 1
      %v3364 = vsel %vm420, %v3361, %v3363
      %v3365 = vrot.slane %v3265, 1
      %v3366 = vrot.slane %v3266, 1
      %v3367 = vsel %vm420, %v3365, %v3366
      %v3368 = vrot.slane %v3267, 1
      %v3369 = vsel %vm420, %v3366, %v3368
      %v3370 = vrot.slane %v3268, 1
      %v3371 = vrot.slane %v3269, 1
      %v3372 = vsel %vm420, %v3370, %v3371
      %v3373 = vrot.slane %v3270, 1
      %v3374 = vsel %vm420, %v3371, %v3373
      %v3375 = vrot.slane %v3271, 1
      %v3376 = vrot.slane %v3272, 1
      %v3377 = vsel %vm420, %v3375, %v3376
      %v3378 = vrot.slane %v3273, 1
      %v3379 = vsel %vm420, %v3376, %v3378
      %v3380 = vrot.slane %v3274, 1
      %v3381 = vrot.slane %v3275, 1
      %v3382 = vsel %vm420, %v3380, %v3381
      %v3383 = vrot.slane %v3276, 1
      %v3384 = vsel %vm420, %v3381, %v3383
      %v3385 = vrot.slane %v3277, 1
      %v3386 = vrot.slane %v3278, 1
      %v3387 = vsel %vm420, %v3385, %v3386
      %v3388 = vrot.slane %v3279, 1
      %v3389 = vsel %vm420, %v3386, %v3388
      %v3390 = vrot.slane %v3280, 1
      %v3391 = vrot.slane %v3281, 1
      %v3392 = vsel %vm420, %v3390, %v3391
      %v3393 = vrot.slane %v3282, 1
      %v3394 = vsel %vm420, %v3391, %v3393
      %v3395 = vrot.slane %v3283, 1
      %v3396 = vrot.slane %v3284, 1
      %v3397 = vsel %vm420, %v3395, %v3396
      %v3398 = vrot.slane %v3285, 1
      %v3399 = vsel %vm420, %v3396, %v3398
      %v3400 = vrot.slane %v3286, 1
      %v3401 = vrot.slane %v3287, 1
      %v3402 = vsel %vm420, %v3400, %v3401
      %v3403 = vrot.slane %v3288, 1
      %v3404 = vsel %vm420, %v3401, %v3403
      %v3405 = vrot.slane %v3289, 1
      %v3406 = vrot.slane %v3290, 1
      %v3407 = vsel %vm420, %v3405, %v3406
      %v3408 = vrot.slane %v3291, 1
      %v3409 = vsel %vm420, %v3406, %v3408
      %v3410 = vrot.slane %v3292, 1
      %v3411 = vrot.slane %v3293, 1
      %v3412 = vsel %vm420, %v3410, %v3411
      %v3413 = vrot.slane %v3294, 1
      %v3414 = vsel %vm420, %v3411, %v3413
      %v3415 = vrot.slane %v3295, 1
      %v3416 = vrot.slane %v3296, 1
      %v3417 = vsel %vm420, %v3415, %v3416
      %v3418 = vrot.slane %v3297, 1
      %v3419 = vsel %vm420, %v3416, %v3418
      %v3420 = vrot.slane %v3298, 1
      %v3421 = vrot.slane %v3299, 1
      %v3422 = vsel %vm420, %v3420, %v3421
      %v3423 = vrot.slane %v3300, 1
      %v3424 = vsel %vm420, %v3421, %v3423
      %v3425 = vrot.slane %v3301, 1
      %v3426 = vrot.slane %v3302, 1
      %v3427 = vsel %vm420, %v3425, %v3426
      %v3428 = vrot.slane %v3303, 1
      %v3429 = vsel %vm420, %v3426, %v3428
      %v3430 = vrot.slane %v3304, 1
      %v3431 = vrot.slane %v3305, 1
      %v3432 = vsel %vm420, %v3430, %v3431
      %v3433 = vrot.slane %v3306, 1
      %v3434 = vsel %vm420, %v3431, %v3433
      %v3483 = vadd.f32 %v3207, %v3357
      %v3484 = vadd.f32 %v3208, %v3359
      %v3485 = vadd.f32 %v3209, %v3358
      %v3486 = vadd.f32 %v3210, %v3362
      %v3487 = vadd.f32 %v3211, %v3364
      %v3488 = vadd.f32 %v3212, %v3363
      %v3489 = vadd.f32 %v3213, %v3367
      %v3490 = vadd.f32 %v3214, %v3369
      %v3491 = vadd.f32 %v3215, %v3368
      %v3492 = vadd.f32 %v3216, %v3372
      %v3493 = vadd.f32 %v3217, %v3374
      %v3494 = vadd.f32 %v3218, %v3373
      %v3495 = vadd.f32 %v3219, %v3377
      %v3496 = vadd.f32 %v3220, %v3379
      %v3497 = vadd.f32 %v3221, %v3378
      %v3498 = vadd.f32 %v3222, %v3382
      %v3499 = vadd.f32 %v3223, %v3384
      %v3500 = vadd.f32 %v3224, %v3383
      %v3501 = vadd.f32 %v3225, %v3387
      %v3502 = vadd.f32 %v3226, %v3389
      %v3503 = vadd.f32 %v3227, %v3388
      %v3504 = vadd.f32 %v3228, %v3392
      %v3505 = vadd.f32 %v3229, %v3394
      %v3506 = vadd.f32 %v3230, %v3393
      %v3507 = vadd.f32 %v3231, %v3397
      %v3508 = vadd.f32 %v3232, %v3399
      %v3509 = vadd.f32 %v3233, %v3398
      %v3510 = vadd.f32 %v3234, %v3402
      %v3511 = vadd.f32 %v3235, %v3404
      %v3512 = vadd.f32 %v3236, %v3403
      %v3513 = vadd.f32 %v3237, %v3407
      %v3514 = vadd.f32 %v3238, %v3409
      %v3515 = vadd.f32 %v3239, %v3408
      %v3516 = vadd.f32 %v3240, %v3412
      %v3517 = vadd.f32 %v3241, %v3414
      %v3518 = vadd.f32 %v3242, %v3413
      %v3519 = vadd.f32 %v3243, %v3417
      %v3520 = vadd.f32 %v3244, %v3419
      %v3521 = vadd.f32 %v3245, %v3418
      %v3522 = vadd.f32 %v3246, %v3422
      %v3523 = vadd.f32 %v3247, %v3424
      %v3524 = vadd.f32 %v3248, %v3423
      %v3525 = vadd.f32 %v3249, %v3427
      %v3526 = vadd.f32 %v3250, %v3429
      %v3527 = vadd.f32 %v3251, %v3428
      %v3528 = vadd.f32 %v3252, %v3432
      %v3529 = vadd.f32 %v3253, %v3434
      %v3530 = vadd.f32 %v3254, %v3433
      %v3531 = vlaneseq
      %v3532 = vshrl.u32 %v3531, 7
      %v3533 = vsub.s32 6, %v3532
      %v3534 = vrot.slane %v280, %v3533
      %v3535 = vmul.f32 %v231, %v3534
      %v3536 = vmul.f32 %v232, %v3534
      %v3537 = vmul.f32 %v233, %v3534
      %v3538 = vmul.f32 %v234, %v3534
      %v3539 = vmul.f32 %v235, %v3534
      %v3540 = vmul.f32 %v236, %v3534
      %v3541 = vmul.f32 %v237, %v3534
      %v3542 = vmul.f32 %v238, %v3534
      %v3543 = vmul.f32 %v239, %v3534
      %v3544 = vmul.f32 %v240, %v3534
      %v3545 = vmul.f32 %v241, %v3534
      %v3546 = vmul.f32 %v242, %v3534
      %v3547 = vmul.f32 %v243, %v3534
      %v3548 = vmul.f32 %v244, %v3534
      %v3549 = vmul.f32 %v245, %v3534
      %v3550 = vmul.f32 %v246, %v3534
      %v3551 = vmul.f32 %v247, %v3534
      %v3552 = vmul.f32 %v248, %v3534
      %v3553 = vmul.f32 %v249, %v3534
      %v3554 = vmul.f32 %v250, %v3534
      %v3555 = vmul.f32 %v251, %v3534
      %v3556 = vmul.f32 %v252, %v3534
      %v3557 = vmul.f32 %v253, %v3534
      %v3558 = vmul.f32 %v254, %v3534
      %v3559 = vmul.f32 %v255, %v3534
      %v3560 = vmul.f32 %v256, %v3534
      %v3561 = vmul.f32 %v257, %v3534
      %v3562 = vmul.f32 %v258, %v3534
      %v3563 = vmul.f32 %v259, %v3534
      %v3564 = vmul.f32 %v260, %v3534
      %v3565 = vmul.f32 %v261, %v3534
      %v3566 = vmul.f32 %v262, %v3534
      %v3567 = vmul.f32 %v263, %v3534
      %v3568 = vmul.f32 %v264, %v3534
      %v3569 = vmul.f32 %v265, %v3534
      %v3570 = vmul.f32 %v266, %v3534
      %v3571 = vmul.f32 %v267, %v3534
      %v3572 = vmul.f32 %v268, %v3534
      %v3573 = vmul.f32 %v269, %v3534
      %v3574 = vmul.f32 %v270, %v3534
      %v3575 = vmul.f32 %v271, %v3534
      %v3576 = vmul.f32 %v272, %v3534
      %v3577 = vmul.f32 %v273, %v3534
      %v3578 = vmul.f32 %v274, %v3534
      %v3579 = vmul.f32 %v275, %v3534
      %v3580 = vmul.f32 %v276, %v3534
      %v3581 = vmul.f32 %v277, %v3534
      %v3582 = vmul.f32 %v278, %v3534
      %v3583 = vadd.f32 %v3483, %v3535
      %v3584 = vadd.f32 %v3484, %v3536
      %v3585 = vadd.f32 %v3485, %v3537
      %v3586 = vadd.f32 %v3486, %v3538
      %v3587 = vadd.f32 %v3487, %v3539
      %v3588 = vadd.f32 %v3488, %v3540
      %v3589 = vadd.f32 %v3489, %v3541
      %v3590 = vadd.f32 %v3490, %v3542
      %v3591 = vadd.f32 %v3491, %v3543
      %v3592 = vadd.f32 %v3492, %v3544
      %v3593 = vadd.f32 %v3493, %v3545
      %v3594 = vadd.f32 %v3494, %v3546
      %v3595 = vadd.f32 %v3495, %v3547
      %v3596 = vadd.f32 %v3496, %v3548
      %v3597 = vadd.f32 %v3497, %v3549
      %v3598 = vadd.f32 %v3498, %v3550
      %v3599 = vadd.f32 %v3499, %v3551
      %v3600 = vadd.f32 %v3500, %v3552
      %v3601 = vadd.f32 %v3501, %v3553
      %v3602 = vadd.f32 %v3502, %v3554
      %v3603 = vadd.f32 %v3503, %v3555
      %v3604 = vadd.f32 %v3504, %v3556
      %v3605 = vadd.f32 %v3505, %v3557
      %v3606 = vadd.f32 %v3506, %v3558
      %v3607 = vadd.f32 %v3507, %v3559
      %v3608 = vadd.f32 %v3508, %v3560
      %v3609 = vadd.f32 %v3509, %v3561
      %v3610 = vadd.f32 %v3510, %v3562
      %v3611 = vadd.f32 %v3511, %v3563
      %v3612 = vadd.f32 %v3512, %v3564
      %v3613 = vadd.f32 %v3513, %v3565
      %v3614 = vadd.f32 %v3514, %v3566
      %v3615 = vadd.f32 %v3515, %v3567
      %v3616 = vadd.f32 %v3516, %v3568
      %v3617 = vadd.f32 %v3517, %v3569
      %v3618 = vadd.f32 %v3518, %v3570
      %v3619 = vadd.f32 %v3519, %v3571
      %v3620 = vadd.f32 %v3520, %v3572
      %v3621 = vadd.f32 %v3521, %v3573
      %v3622 = vadd.f32 %v3522, %v3574
      %v3623 = vadd.f32 %v3523, %v3575
      %v3624 = vadd.f32 %v3524, %v3576
      %v3625 = vadd.f32 %v3525, %v3577
      %v3626 = vadd.f32 %v3526, %v3578
      %v3627 = vadd.f32 %v3527, %v3579
      %v3628 = vadd.f32 %v3528, %v3580
      %v3629 = vadd.f32 %v3529, %v3581
      %v3630 = vadd.f32 %v3530, %v3582
      %v3631 = vlaneseq
      %v3632 = vshrl.u32 %v3631, 7
      %v3633 = vsub.s32 7, %v3632
      %v3634 = vrot.slane %v280, %v3633
      %v3635 = vmul.f32 %v231, %v3634
      %v3636 = vmul.f32 %v232, %v3634
      %v3637 = vmul.f32 %v233, %v3634
      %v3638 = vmul.f32 %v234, %v3634
      %v3639 = vmul.f32 %v235, %v3634
      %v3640 = vmul.f32 %v236, %v3634
      %v3641 = vmul.f32 %v237, %v3634
      %v3642 = vmul.f32 %v238, %v3634
      %v3643 = vmul.f32 %v239, %v3634
      %v3644 = vmul.f32 %v240, %v3634
      %v3645 = vmul.f32 %v241, %v3634
      %v3646 = vmul.f32 %v242, %v3634
      %v3647 = vmul.f32 %v243, %v3634
      %v3648 = vmul.f32 %v244, %v3634
      %v3649 = vmul.f32 %v245, %v3634
      %v3650 = vmul.f32 %v246, %v3634
      %v3651 = vmul.f32 %v247, %v3634
      %v3652 = vmul.f32 %v248, %v3634
      %v3653 = vmul.f32 %v249, %v3634
      %v3654 = vmul.f32 %v250, %v3634
      %v3655 = vmul.f32 %v251, %v3634
      %v3656 = vmul.f32 %v252, %v3634
      %v3657 = vmul.f32 %v253, %v3634
      %v3658 = vmul.f32 %v254, %v3634
      %v3659 = vmul.f32 %v255, %v3634
      %v3660 = vmul.f32 %v256, %v3634
      %v3661 = vmul.f32 %v257, %v3634
      %v3662 = vmul.f32 %v258, %v3634
      %v3663 = vmul.f32 %v259, %v3634
      %v3664 = vmul.f32 %v260, %v3634
      %v3665 = vmul.f32 %v261, %v3634
      %v3666 = vmul.f32 %v262, %v3634
      %v3667 = vmul.f32 %v263, %v3634
      %v3668 = vmul.f32 %v264, %v3634
      %v3669 = vmul.f32 %v265, %v3634
      %v3670 = vmul.f32 %v266, %v3634
      %v3671 = vmul.f32 %v267, %v3634
      %v3672 = vmul.f32 %v268, %v3634
      %v3673 = vmul.f32 %v269, %v3634
      %v3674 = vmul.f32 %v270, %v3634
      %v3675 = vmul.f32 %v271, %v3634
      %v3676 = vmul.f32 %v272, %v3634
      %v3677 = vmul.f32 %v273, %v3634
      %v3678 = vmul.f32 %v274, %v3634
      %v3679 = vmul.f32 %v275, %v3634
      %v3680 = vmul.f32 %v276, %v3634
      %v3681 = vmul.f32 %v277, %v3634
      %v3682 = vmul.f32 %v278, %v3634
      %v3731 = vrot.slane %v3635, 1
      %v3732 = vrot.slane %v3636, 1
      %v3733 = vsel %vm420, %v3731, %v3732
      %v3734 = vrot.slane %v3637, 1
      %v3735 = vsel %vm420, %v3732, %v3734
      %v3736 = vrot.slane %v3638, 1
      %v3737 = vrot.slane %v3639, 1
      %v3738 = vsel %vm420, %v3736, %v3737
      %v3739 = vrot.slane %v3640, 1
      %v3740 = vsel %vm420, %v3737, %v3739
      %v3741 = vrot.slane %v3641, 1
      %v3742 = vrot.slane %v3642, 1
      %v3743 = vsel %vm420, %v3741, %v3742
      %v3744 = vrot.slane %v3643, 1
      %v3745 = vsel %vm420, %v3742, %v3744
      %v3746 = vrot.slane %v3644, 1
      %v3747 = vrot.slane %v3645, 1
      %v3748 = vsel %vm420, %v3746, %v3747
      %v3749 = vrot.slane %v3646, 1
      %v3750 = vsel %vm420, %v3747, %v3749
      %v3751 = vrot.slane %v3647, 1
      %v3752 = vrot.slane %v3648, 1
      %v3753 = vsel %vm420, %v3751, %v3752
      %v3754 = vrot.slane %v3649, 1
      %v3755 = vsel %vm420, %v3752, %v3754
      %v3756 = vrot.slane %v3650, 1
      %v3757 = vrot.slane %v3651, 1
      %v3758 = vsel %vm420, %v3756, %v3757
      %v3759 = vrot.slane %v3652, 1
      %v3760 = vsel %vm420, %v3757, %v3759
      %v3761 = vrot.slane %v3653, 1
      %v3762 = vrot.slane %v3654, 1
      %v3763 = vsel %vm420, %v3761, %v3762
      %v3764 = vrot.slane %v3655, 1
      %v3765 = vsel %vm420, %v3762, %v3764
      %v3766 = vrot.slane %v3656, 1
      %v3767 = vrot.slane %v3657, 1
      %v3768 = vsel %vm420, %v3766, %v3767
      %v3769 = vrot.slane %v3658, 1
      %v3770 = vsel %vm420, %v3767, %v3769
      %v3771 = vrot.slane %v3659, 1
      %v3772 = vrot.slane %v3660, 1
      %v3773 = vsel %vm420, %v3771, %v3772
      %v3774 = vrot.slane %v3661, 1
      %v3775 = vsel %vm420, %v3772, %v3774
      %v3776 = vrot.slane %v3662, 1
      %v3777 = vrot.slane %v3663, 1
      %v3778 = vsel %vm420, %v3776, %v3777
      %v3779 = vrot.slane %v3664, 1
      %v3780 = vsel %vm420, %v3777, %v3779
      %v3781 = vrot.slane %v3665, 1
      %v3782 = vrot.slane %v3666, 1
      %v3783 = vsel %vm420, %v3781, %v3782
      %v3784 = vrot.slane %v3667, 1
      %v3785 = vsel %vm420, %v3782, %v3784
      %v3786 = vrot.slane %v3668, 1
      %v3787 = vrot.slane %v3669, 1
      %v3788 = vsel %vm420, %v3786, %v3787
      %v3789 = vrot.slane %v3670, 1
      %v3790 = vsel %vm420, %v3787, %v3789
      %v3791 = vrot.slane %v3671, 1
      %v3792 = vrot.slane %v3672, 1
      %v3793 = vsel %vm420, %v3791, %v3792
      %v3794 = vrot.slane %v3673, 1
      %v3795 = vsel %vm420, %v3792, %v3794
      %v3796 = vrot.slane %v3674, 1
      %v3797 = vrot.slane %v3675, 1
      %v3798 = vsel %vm420, %v3796, %v3797
      %v3799 = vrot.slane %v3676, 1
      %v3800 = vsel %vm420, %v3797, %v3799
      %v3801 = vrot.slane %v3677, 1
      %v3802 = vrot.slane %v3678, 1
      %v3803 = vsel %vm420, %v3801, %v3802
      %v3804 = vrot.slane %v3679, 1
      %v3805 = vsel %vm420, %v3802, %v3804
      %v3806 = vrot.slane %v3680, 1
      %v3807 = vrot.slane %v3681, 1
      %v3808 = vsel %vm420, %v3806, %v3807
      %v3809 = vrot.slane %v3682, 1
      %v3810 = vsel %vm420, %v3807, %v3809
      %v3859 = vadd.f32 %v3583, %v3733
      %v3860 = vadd.f32 %v3584, %v3735
      %v3861 = vadd.f32 %v3585, %v3734
      %v3862 = vadd.f32 %v3586, %v3738
      %v3863 = vadd.f32 %v3587, %v3740
      %v3864 = vadd.f32 %v3588, %v3739
      %v3865 = vadd.f32 %v3589, %v3743
      %v3866 = vadd.f32 %v3590, %v3745
      %v3867 = vadd.f32 %v3591, %v3744
      %v3868 = vadd.f32 %v3592, %v3748
      %v3869 = vadd.f32 %v3593, %v3750
      %v3870 = vadd.f32 %v3594, %v3749
      %v3871 = vadd.f32 %v3595, %v3753
      %v3872 = vadd.f32 %v3596, %v3755
      %v3873 = vadd.f32 %v3597, %v3754
      %v3874 = vadd.f32 %v3598, %v3758
      %v3875 = vadd.f32 %v3599, %v3760
      %v3876 = vadd.f32 %v3600, %v3759
      %v3877 = vadd.f32 %v3601, %v3763
      %v3878 = vadd.f32 %v3602, %v3765
      %v3879 = vadd.f32 %v3603, %v3764
      %v3880 = vadd.f32 %v3604, %v3768
      %v3881 = vadd.f32 %v3605, %v3770
      %v3882 = vadd.f32 %v3606, %v3769
      %v3883 = vadd.f32 %v3607, %v3773
      %v3884 = vadd.f32 %v3608, %v3775
      %v3885 = vadd.f32 %v3609, %v3774
      %v3886 = vadd.f32 %v3610, %v3778
      %v3887 = vadd.f32 %v3611, %v3780
      %v3888 = vadd.f32 %v3612, %v3779
      %v3889 = vadd.f32 %v3613, %v3783
      %v3890 = vadd.f32 %v3614, %v3785
      %v3891 = vadd.f32 %v3615, %v3784
      %v3892 = vadd.f32 %v3616, %v3788
      %v3893 = vadd.f32 %v3617, %v3790
      %v3894 = vadd.f32 %v3618, %v3789
      %v3895 = vadd.f32 %v3619, %v3793
      %v3896 = vadd.f32 %v3620, %v3795
      %v3897 = vadd.f32 %v3621, %v3794
      %v3898 = vadd.f32 %v3622, %v3798
      %v3899 = vadd.f32 %v3623, %v3800
      %v3900 = vadd.f32 %v3624, %v3799
      %v3901 = vadd.f32 %v3625, %v3803
      %v3902 = vadd.f32 %v3626, %v3805
      %v3903 = vadd.f32 %v3627, %v3804
      %v3904 = vadd.f32 %v3628, %v3808
      %v3905 = vadd.f32 %v3629, %v3810
      %v3906 = vadd.f32 %v3630, %v3809
      %v3907 = vadd.f32 %v3859, %v881
      %v3908 = vadd.f32 %v3860, %v881
      %v3909 = vadd.f32 %v3861, %v881
      %v3910 = vadd.f32 %v3862, %v881
      %v3911 = vadd.f32 %v3863, %v881
      %v3912 = vadd.f32 %v3864, %v881
      %v3913 = vadd.f32 %v3865, %v881
      %v3914 = vadd.f32 %v3866, %v881
      %v3915 = vadd.f32 %v3867, %v881
      %v3916 = vadd.f32 %v3868, %v881
      %v3917 = vadd.f32 %v3869, %v881
      %v3918 = vadd.f32 %v3870, %v881
      %v3919 = vadd.f32 %v3871, %v881
      %v3920 = vadd.f32 %v3872, %v881
      %v3921 = vadd.f32 %v3873, %v881
      %v3922 = vadd.f32 %v3874, %v881
      %v3923 = vadd.f32 %v3875, %v881
      %v3924 = vadd.f32 %v3876, %v881
      %v3925 = vadd.f32 %v3877, %v881
      %v3926 = vadd.f32 %v3878, %v881
      %v3927 = vadd.f32 %v3879, %v881
      %v3928 = vadd.f32 %v3880, %v881
      %v3929 = vadd.f32 %v3881, %v881
      %v3930 = vadd.f32 %v3882, %v881
      %v3931 = vadd.f32 %v3883, %v881
      %v3932 = vadd.f32 %v3884, %v881
      %v3933 = vadd.f32 %v3885, %v881
      %v3934 = vadd.f32 %v3886, %v881
      %v3935 = vadd.f32 %v3887, %v881
      %v3936 = vadd.f32 %v3888, %v881
      %v3937 = vadd.f32 %v3889, %v881
      %v3938 = vadd.f32 %v3890, %v881
      %v3939 = vadd.f32 %v3891, %v881
      %v3940 = vadd.f32 %v3892, %v881
      %v3941 = vadd.f32 %v3893, %v881
      %v3942 = vadd.f32 %v3894, %v881
      %v3943 = vadd.f32 %v3895, %v881
      %v3944 = vadd.f32 %v3896, %v881
      %v3945 = vadd.f32 %v3897, %v881
      %v3946 = vadd.f32 %v3898, %v881
      %v3947 = vadd.f32 %v3899, %v881
      %v3948 = vadd.f32 %v3900, %v881
      %v3949 = vadd.f32 %v3901, %v881
      %v3950 = vadd.f32 %v3902, %v881
      %v3951 = vadd.f32 %v3903, %v881
      %v3952 = vadd.f32 %v3904, %v881
      %v3953 = vadd.f32 %v3905, %v881
      %v3954 = vadd.f32 %v3906, %v881
      %v3955 = vxor.u32 %v3907, 2147483648
      %v3956 = vxor.u32 %v3908, 2147483648
      %v3957 = vxor.u32 %v3909, 2147483648
      %v3958 = vxor.u32 %v3910, 2147483648
      %v3959 = vxor.u32 %v3911, 2147483648
      %v3960 = vxor.u32 %v3912, 2147483648
      %v3961 = vxor.u32 %v3913, 2147483648
      %v3962 = vxor.u32 %v3914, 2147483648
      %v3963 = vxor.u32 %v3915, 2147483648
      %v3964 = vxor.u32 %v3916, 2147483648
      %v3965 = vxor.u32 %v3917, 2147483648
      %v3966 = vxor.u32 %v3918, 2147483648
      %v3967 = vxor.u32 %v3919, 2147483648
      %v3968 = vxor.u32 %v3920, 2147483648
      %v3969 = vxor.u32 %v3921, 2147483648
      %v3970 = vxor.u32 %v3922, 2147483648
      %v3971 = vxor.u32 %v3923, 2147483648
      %v3972 = vxor.u32 %v3924, 2147483648
      %v3973 = vxor.u32 %v3925, 2147483648
      %v3974 = vxor.u32 %v3926, 2147483648
      %v3975 = vxor.u32 %v3927, 2147483648
      %v3976 = vxor.u32 %v3928, 2147483648
      %v3977 = vxor.u32 %v3929, 2147483648
      %v3978 = vxor.u32 %v3930, 2147483648
      %v3979 = vxor.u32 %v3931, 2147483648
      %v3980 = vxor.u32 %v3932, 2147483648
      %v3981 = vxor.u32 %v3933, 2147483648
      %v3982 = vxor.u32 %v3934, 2147483648
      %v3983 = vxor.u32 %v3935, 2147483648
      %v3984 = vxor.u32 %v3936, 2147483648
      %v3985 = vxor.u32 %v3937, 2147483648
      %v3986 = vxor.u32 %v3938, 2147483648
      %v3987 = vxor.u32 %v3939, 2147483648
      %v3988 = vxor.u32 %v3940, 2147483648
      %v3989 = vxor.u32 %v3941, 2147483648
      %v3990 = vxor.u32 %v3942, 2147483648
      %v3991 = vxor.u32 %v3943, 2147483648
      %v3992 = vxor.u32 %v3944, 2147483648
      %v3993 = vxor.u32 %v3945, 2147483648
      %v3994 = vxor.u32 %v3946, 2147483648
      %v3995 = vxor.u32 %v3947, 2147483648
      %v3996 = vxor.u32 %v3948, 2147483648
      %v3997 = vxor.u32 %v3949, 2147483648
      %v3998 = vxor.u32 %v3950, 2147483648
      %v3999 = vxor.u32 %v3951, 2147483648
      %v4000 = vxor.u32 %v3952, 2147483648
      %v4001 = vxor.u32 %v3953, 2147483648
      %v4002 = vxor.u32 %v3954, 2147483648
      %v4003 = vmul.f32 %v3955, 1.442695
      %v4004 = vpow.pop %v4003
      %v4005 = vmul.f32 %v3956, 1.442695
      %v4006 = vpow.pop %v4005
      %v4007 = vmul.f32 %v3957, 1.442695
      %v4008 = vpow.pop %v4007
      %v4009 = vmul.f32 %v3958, 1.442695
      %v4010 = vpow.pop %v4009
      %v4011 = vmul.f32 %v3959, 1.442695
      %v4012 = vpow.pop %v4011
      %v4013 = vmul.f32 %v3960, 1.442695
      %v4014 = vpow.pop %v4013
      %v4015 = vmul.f32 %v3961, 1.442695
      %v4016 = vpow.pop %v4015
      %v4017 = vmul.f32 %v3962, 1.442695
      %v4018 = vpow.pop %v4017
      %v4019 = vmul.f32 %v3963, 1.442695
      %v4020 = vpow.pop %v4019
      %v4021 = vmul.f32 %v3964, 1.442695
      %v4022 = vpow.pop %v4021
      %v4023 = vmul.f32 %v3965, 1.442695
      %v4024 = vpow.pop %v4023
      %v4025 = vmul.f32 %v3966, 1.442695
      %v4026 = vpow.pop %v4025
      %v4027 = vmul.f32 %v3967, 1.442695
      %v4028 = vpow.pop %v4027
      %v4029 = vmul.f32 %v3968, 1.442695
      %v4030 = vpow.pop %v4029
      %v4031 = vmul.f32 %v3969, 1.442695
      %v4032 = vpow.pop %v4031
      %v4033 = vmul.f32 %v3970, 1.442695
      %v4034 = vpow.pop %v4033
      %v4035 = vmul.f32 %v3971, 1.442695
      %v4036 = vpow.pop %v4035
      %v4037 = vmul.f32 %v3972, 1.442695
      %v4038 = vpow.pop %v4037
      %v4039 = vmul.f32 %v3973, 1.442695
      %v4040 = vpow.pop %v4039
      %v4041 = vmul.f32 %v3974, 1.442695
      %v4042 = vpow.pop %v4041
      %v4043 = vmul.f32 %v3975, 1.442695
      %v4044 = vpow.pop %v4043
      %v4045 = vmul.f32 %v3976, 1.442695
      %v4046 = vpow.pop %v4045
      %v4047 = vmul.f32 %v3977, 1.442695
      %v4048 = vpow.pop %v4047
      %v4049 = vmul.f32 %v3978, 1.442695
      %v4050 = vpow.pop %v4049
      %v4051 = vmul.f32 %v3979, 1.442695
      %v4052 = vpow.pop %v4051
      %v4053 = vmul.f32 %v3980, 1.442695
      %v4054 = vpow.pop %v4053
      %v4055 = vmul.f32 %v3981, 1.442695
      %v4056 = vpow.pop %v4055
      %v4057 = vmul.f32 %v3982, 1.442695
      %v4058 = vpow.pop %v4057
      %v4059 = vmul.f32 %v3983, 1.442695
      %v4060 = vpow.pop %v4059
      %v4061 = vmul.f32 %v3984, 1.442695
      %v4062 = vpow.pop %v4061
      %v4063 = vmul.f32 %v3985, 1.442695
      %v4064 = vpow.pop %v4063
      %v4065 = vmul.f32 %v3986, 1.442695
      %v4066 = vpow.pop %v4065
      %v4067 = vmul.f32 %v3987, 1.442695
      %v4068 = vpow.pop %v4067
      %v4069 = vmul.f32 %v3988, 1.442695
      %v4070 = vpow.pop %v4069
      %v4071 = vmul.f32 %v3989, 1.442695
      %v4072 = vpow.pop %v4071
      %v4073 = vmul.f32 %v3990, 1.442695
      %v4074 = vpow.pop %v4073
      %v4075 = vmul.f32 %v3991, 1.442695
      %v4076 = vpow.pop %v4075
      %v4077 = vmul.f32 %v3992, 1.442695
      %v4078 = vpow.pop %v4077
      %v4079 = vmul.f32 %v3993, 1.442695
      %v4080 = vpow.pop %v4079
      %v4081 = vmul.f32 %v3994, 1.442695
      %v4082 = vpow.pop %v4081
      %v4083 = vmul.f32 %v3995, 1.442695
      %v4084 = vpow.pop %v4083
      %v4085 = vmul.f32 %v3996, 1.442695
      %v4086 = vpow.pop %v4085
      %v4087 = vmul.f32 %v3997, 1.442695
      %v4088 = vpow.pop %v4087
      %v4089 = vmul.f32 %v3998, 1.442695
      %v4090 = vpow.pop %v4089
      %v4091 = vmul.f32 %v3999, 1.442695
      %v4092 = vpow.pop %v4091
      %v4093 = vmul.f32 %v4000, 1.442695
      %v4094 = vpow.pop %v4093
      %v4095 = vmul.f32 %v4001, 1.442695
      %v4096 = vpow.pop %v4095
      %v4097 = vmul.f32 %v4002, 1.442695
      %v4098 = vpow.pop %v4097
      %v4099 = vadd.f32 %v4004, 1.0
      %v4100 = vadd.f32 %v4006, 1.0
      %v4101 = vadd.f32 %v4008, 1.0
      %v4102 = vadd.f32 %v4010, 1.0
      %v4103 = vadd.f32 %v4012, 1.0
      %v4104 = vadd.f32 %v4014, 1.0
      %v4105 = vadd.f32 %v4016, 1.0
      %v4106 = vadd.f32 %v4018, 1.0
      %v4107 = vadd.f32 %v4020, 1.0
      %v4108 = vadd.f32 %v4022, 1.0
      %v4109 = vadd.f32 %v4024, 1.0
      %v4110 = vadd.f32 %v4026, 1.0
      %v4111 = vadd.f32 %v4028, 1.0
      %v4112 = vadd.f32 %v4030, 1.0
      %v4113 = vadd.f32 %v4032, 1.0
      %v4114 = vadd.f32 %v4034, 1.0
      %v4115 = vadd.f32 %v4036, 1.0
      %v4116 = vadd.f32 %v4038, 1.0
      %v4117 = vadd.f32 %v4040, 1.0
      %v4118 = vadd.f32 %v4042, 1.0
      %v4119 = vadd.f32 %v4044, 1.0
      %v4120 = vadd.f32 %v4046, 1.0
      %v4121 = vadd.f32 %v4048, 1.0
      %v4122 = vadd.f32 %v4050, 1.0
      %v4123 = vadd.f32 %v4052, 1.0
      %v4124 = vadd.f32 %v4054, 1.0
      %v4125 = vadd.f32 %v4056, 1.0
      %v4126 = vadd.f32 %v4058, 1.0
      %v4127 = vadd.f32 %v4060, 1.0
      %v4128 = vadd.f32 %v4062, 1.0
      %v4129 = vadd.f32 %v4064, 1.0
      %v4130 = vadd.f32 %v4066, 1.0
      %v4131 = vadd.f32 %v4068, 1.0
      %v4132 = vadd.f32 %v4070, 1.0
      %v4133 = vadd.f32 %v4072, 1.0
      %v4134 = vadd.f32 %v4074, 1.0
      %v4135 = vadd.f32 %v4076, 1.0
      %v4136 = vadd.f32 %v4078, 1.0
      %v4137 = vadd.f32 %v4080, 1.0
      %v4138 = vadd.f32 %v4082, 1.0
      %v4139 = vadd.f32 %v4084, 1.0
      %v4140 = vadd.f32 %v4086, 1.0
      %v4141 = vadd.f32 %v4088, 1.0
      %v4142 = vadd.f32 %v4090, 1.0
      %v4143 = vadd.f32 %v4092, 1.0
      %v4144 = vadd.f32 %v4094, 1.0
      %v4145 = vadd.f32 %v4096, 1.0
      %v4146 = vadd.f32 %v4098, 1.0
      %v4147 = vrcp.pop %v4099
      %v4148 = vmul.f32 1.0, %v4147
      %v4149 = vrcp.pop %v4100
      %v4150 = vmul.f32 1.0, %v4149
      %v4151 = vrcp.pop %v4101
      %v4152 = vmul.f32 1.0, %v4151
      %v4153 = vrcp.pop %v4102
      %v4154 = vmul.f32 1.0, %v4153
      %v4155 = vrcp.pop %v4103
      %v4156 = vmul.f32 1.0, %v4155
      %v4157 = vrcp.pop %v4104
      %v4158 = vmul.f32 1.0, %v4157
      %v4159 = vrcp.pop %v4105
      %v4160 = vmul.f32 1.0, %v4159
      %v4161 = vrcp.pop %v4106
      %v4162 = vmul.f32 1.0, %v4161
      %v4163 = vrcp.pop %v4107
      %v4164 = vmul.f32 1.0, %v4163
      %v4165 = vrcp.pop %v4108
      %v4166 = vmul.f32 1.0, %v4165
      %v4167 = vrcp.pop %v4109
      %v4168 = vmul.f32 1.0, %v4167
      %v4169 = vrcp.pop %v4110
      %v4170 = vmul.f32 1.0, %v4169
      %v4171 = vrcp.pop %v4111
      %v4172 = vmul.f32 1.0, %v4171
      %v4173 = vrcp.pop %v4112
      %v4174 = vmul.f32 1.0, %v4173
      %v4175 = vrcp.pop %v4113
      %v4176 = vmul.f32 1.0, %v4175
      %v4177 = vrcp.pop %v4114
      %v4178 = vmul.f32 1.0, %v4177
      %v4179 = vrcp.pop %v4115
      %v4180 = vmul.f32 1.0, %v4179
      %v4181 = vrcp.pop %v4116
      %v4182 = vmul.f32 1.0, %v4181
      %v4183 = vrcp.pop %v4117
      %v4184 = vmul.f32 1.0, %v4183
      %v4185 = vrcp.pop %v4118
      %v4186 = vmul.f32 1.0, %v4185
      %v4187 = vrcp.pop %v4119
      %v4188 = vmul.f32 1.0, %v4187
      %v4189 = vrcp.pop %v4120
      %v4190 = vmul.f32 1.0, %v4189
      %v4191 = vrcp.pop %v4121
      %v4192 = vmul.f32 1.0, %v4191
      %v4193 = vrcp.pop %v4122
      %v4194 = vmul.f32 1.0, %v4193
      %v4195 = vrcp.pop %v4123
      %v4196 = vmul.f32 1.0, %v4195
      %v4197 = vrcp.pop %v4124
      %v4198 = vmul.f32 1.0, %v4197
      %v4199 = vrcp.pop %v4125
      %v4200 = vmul.f32 1.0, %v4199
      %v4201 = vrcp.pop %v4126
      %v4202 = vmul.f32 1.0, %v4201
      %v4203 = vrcp.pop %v4127
      %v4204 = vmul.f32 1.0, %v4203
      %v4205 = vrcp.pop %v4128
      %v4206 = vmul.f32 1.0, %v4205
      %v4207 = vrcp.pop %v4129
      %v4208 = vmul.f32 1.0, %v4207
      %v4209 = vrcp.pop %v4130
      %v4210 = vmul.f32 1.0, %v4209
      %v4211 = vrcp.pop %v4131
      %v4212 = vmul.f32 1.0, %v4211
      %v4213 = vrcp.pop %v4132
      %v4214 = vmul.f32 1.0, %v4213
      %v4215 = vrcp.pop %v4133
      %v4216 = vmul.f32 1.0, %v4215
      %v4217 = vrcp.pop %v4134
      %v4218 = vmul.f32 1.0, %v4217
      %v4219 = vrcp.pop %v4135
      %v4220 = vmul.f32 1.0, %v4219
      %v4221 = vrcp.pop %v4136
      %v4222 = vmul.f32 1.0, %v4221
      %v4223 = vrcp.pop %v4137
      %v4224 = vmul.f32 1.0, %v4223
      %v4225 = vrcp.pop %v4138
      %v4226 = vmul.f32 1.0, %v4225
      %v4227 = vrcp.pop %v4139
      %v4228 = vmul.f32 1.0, %v4227
      %v4229 = vrcp.pop %v4140
      %v4230 = vmul.f32 1.0, %v4229
      %v4231 = vrcp.pop %v4141
      %v4232 = vmul.f32 1.0, %v4231
      %v4233 = vrcp.pop %v4142
      %v4234 = vmul.f32 1.0, %v4233
      %v4235 = vrcp.pop %v4143
      %v4236 = vmul.f32 1.0, %v4235
      %v4237 = vrcp.pop %v4144
      %v4238 = vmul.f32 1.0, %v4237
      %v4239 = vrcp.pop %v4145
      %v4240 = vmul.f32 1.0, %v4239
      %v4241 = vrcp.pop %v4146
      %v4242 = vmul.f32 1.0, %v4241
      %v4243 = vmul.f32 %v3907, %v4148
      %v4244 = vmul.f32 %v3908, %v4150
      %v4245 = vmul.f32 %v3909, %v4152
      %v4246 = vmul.f32 %v3910, %v4154
      %v4247 = vmul.f32 %v3911, %v4156
      %v4248 = vmul.f32 %v3912, %v4158
      %v4249 = vmul.f32 %v3913, %v4160
      %v4250 = vmul.f32 %v3914, %v4162
      %v4251 = vmul.f32 %v3915, %v4164
      %v4252 = vmul.f32 %v3916, %v4166
      %v4253 = vmul.f32 %v3917, %v4168
      %v4254 = vmul.f32 %v3918, %v4170
      %v4255 = vmul.f32 %v3919, %v4172
      %v4256 = vmul.f32 %v3920, %v4174
      %v4257 = vmul.f32 %v3921, %v4176
      %v4258 = vmul.f32 %v3922, %v4178
      %v4259 = vmul.f32 %v3923, %v4180
      %v4260 = vmul.f32 %v3924, %v4182
      %v4261 = vmul.f32 %v3925, %v4184
      %v4262 = vmul.f32 %v3926, %v4186
      %v4263 = vmul.f32 %v3927, %v4188
      %v4264 = vmul.f32 %v3928, %v4190
      %v4265 = vmul.f32 %v3929, %v4192
      %v4266 = vmul.f32 %v3930, %v4194
      %v4267 = vmul.f32 %v3931, %v4196
      %v4268 = vmul.f32 %v3932, %v4198
      %v4269 = vmul.f32 %v3933, %v4200
      %v4270 = vmul.f32 %v3934, %v4202
      %v4271 = vmul.f32 %v3935, %v4204
      %v4272 = vmul.f32 %v3936, %v4206
      %v4273 = vmul.f32 %v3937, %v4208
      %v4274 = vmul.f32 %v3938, %v4210
      %v4275 = vmul.f32 %v3939, %v4212
      %v4276 = vmul.f32 %v3940, %v4214
      %v4277 = vmul.f32 %v3941, %v4216
      %v4278 = vmul.f32 %v3942, %v4218
      %v4279 = vmul.f32 %v3943, %v4220
      %v4280 = vmul.f32 %v3944, %v4222
      %v4281 = vmul.f32 %v3945, %v4224
      %v4282 = vmul.f32 %v3946, %v4226
      %v4283 = vmul.f32 %v3947, %v4228
      %v4284 = vmul.f32 %v3948, %v4230
      %v4285 = vmul.f32 %v3949, %v4232
      %v4286 = vmul.f32 %v3950, %v4234
      %v4287 = vmul.f32 %v3951, %v4236
      %v4288 = vmul.f32 %v3952, %v4238
      %v4289 = vmul.f32 %v3953, %v4240
      %v4290 = vmul.f32 %v3954, %v4242
      %v4339 = vrot.slane %v4243, 1
      %v4340 = vrot.slane %v4244, 1
      %v4341 = vsel %vm420, %v4339, %v4340
      %v4342 = vrot.slane %v4245, 1
      %v4343 = vsel %vm420, %v4340, %v4342
      %v4344 = vrot.slane %v4246, 1
      %v4345 = vrot.slane %v4247, 1
      %v4346 = vsel %vm420, %v4344, %v4345
      %v4347 = vrot.slane %v4248, 1
      %v4348 = vsel %vm420, %v4345, %v4347
      %v4349 = vrot.slane %v4249, 1
      %v4350 = vrot.slane %v4250, 1
      %v4351 = vsel %vm420, %v4349, %v4350
      %v4352 = vrot.slane %v4251, 1
      %v4353 = vsel %vm420, %v4350, %v4352
      %v4354 = vrot.slane %v4252, 1
      %v4355 = vrot.slane %v4253, 1
      %v4356 = vsel %vm420, %v4354, %v4355
      %v4357 = vrot.slane %v4254, 1
      %v4358 = vsel %vm420, %v4355, %v4357
      %v4359 = vrot.slane %v4255, 1
      %v4360 = vrot.slane %v4256, 1
      %v4361 = vsel %vm420, %v4359, %v4360
      %v4362 = vrot.slane %v4257, 1
      %v4363 = vsel %vm420, %v4360, %v4362
      %v4364 = vrot.slane %v4258, 1
      %v4365 = vrot.slane %v4259, 1
      %v4366 = vsel %vm420, %v4364, %v4365
      %v4367 = vrot.slane %v4260, 1
      %v4368 = vsel %vm420, %v4365, %v4367
      %v4369 = vrot.slane %v4261, 1
      %v4370 = vrot.slane %v4262, 1
      %v4371 = vsel %vm420, %v4369, %v4370
      %v4372 = vrot.slane %v4263, 1
      %v4373 = vsel %vm420, %v4370, %v4372
      %v4374 = vrot.slane %v4264, 1
      %v4375 = vrot.slane %v4265, 1
      %v4376 = vsel %vm420, %v4374, %v4375
      %v4377 = vrot.slane %v4266, 1
      %v4378 = vsel %vm420, %v4375, %v4377
      %v4379 = vrot.slane %v4267, 1
      %v4380 = vrot.slane %v4268, 1
      %v4381 = vsel %vm420, %v4379, %v4380
      %v4382 = vrot.slane %v4269, 1
      %v4383 = vsel %vm420, %v4380, %v4382
      %v4384 = vrot.slane %v4270, 1
      %v4385 = vrot.slane %v4271, 1
      %v4386 = vsel %vm420, %v4384, %v4385
      %v4387 = vrot.slane %v4272, 1
      %v4388 = vsel %vm420, %v4385, %v4387
      %v4389 = vrot.slane %v4273, 1
      %v4390 = vrot.slane %v4274, 1
      %v4391 = vsel %vm420, %v4389, %v4390
      %v4392 = vrot.slane %v4275, 1
      %v4393 = vsel %vm420, %v4390, %v4392
      %v4394 = vrot.slane %v4276, 1
      %v4395 = vrot.slane %v4277, 1
      %v4396 = vsel %vm420, %v4394, %v4395
      %v4397 = vrot.slane %v4278, 1
      %v4398 = vsel %vm420, %v4395, %v4397
      %v4399 = vrot.slane %v4279, 1
      %v4400 = vrot.slane %v4280, 1
      %v4401 = vsel %vm420, %v4399, %v4400
      %v4402 = vrot.slane %v4281, 1
      %v4403 = vsel %vm420, %v4400, %v4402
      %v4404 = vrot.slane %v4282, 1
      %v4405 = vrot.slane %v4283, 1
      %v4406 = vsel %vm420, %v4404, %v4405
      %v4407 = vrot.slane %v4284, 1
      %v4408 = vsel %vm420, %v4405, %v4407
      %v4409 = vrot.slane %v4285, 1
      %v4410 = vrot.slane %v4286, 1
      %v4411 = vsel %vm420, %v4409, %v4410
      %v4412 = vrot.slane %v4287, 1
      %v4413 = vsel %vm420, %v4410, %v4412
      %v4414 = vrot.slane %v4288, 1
      %v4415 = vrot.slane %v4289, 1
      %v4416 = vsel %vm420, %v4414, %v4415
      %v4417 = vrot.slane %v4290, 1
      %v4418 = vsel %vm420, %v4415, %v4417
      %v4420 = vlaneseq
      %v4421 = vshrl.u32 %v4420, 7
      %v4422 = vsub.s32 0, %v4421
      %v4423 = vrot.slane %v283, %v4422
      %vm4425 = vcmask 31744
      %v4427 = vsel %vm4425, %v1107, 0
      %v4430 = vsel %vm4425, %v1108, 0
      %v4433 = vsel %vm4425, %v1109, 0
      %v4436 = vsel %vm4425, %v1110, 0
      %v4439 = vsel %vm4425, %v1111, 0
      %v4442 = vsel %vm4425, %v1112, 0
      %v4445 = vsel %vm4425, %v1113, 0
      %v4448 = vsel %vm4425, %v1114, 0
      %v4451 = vsel %vm4425, %v1115, 0
      %v4454 = vsel %vm4425, %v1116, 0
      %v4457 = vsel %vm4425, %v1117, 0
      %v4460 = vsel %vm4425, %v1118, 0
      %v4463 = vsel %vm4425, %v1119, 0
      %v4466 = vsel %vm4425, %v1120, 0
      %v4469 = vsel %vm4425, %v1121, 0
      %v4472 = vsel %vm4425, %v1122, 0
      %v4475 = vsel %vm4425, %v1123, 0
      %v4478 = vsel %vm4425, %v1124, 0
      %v4481 = vsel %vm4425, %v1125, 0
      %v4484 = vsel %vm4425, %v1126, 0
      %v4487 = vsel %vm4425, %v1127, 0
      %v4490 = vsel %vm4425, %v1128, 0
      %v4493 = vsel %vm4425, %v1129, 0
      %v4496 = vsel %vm4425, %v1130, 0
      %v4499 = vsel %vm4425, %v1131, 0
      %v4502 = vsel %vm4425, %v1132, 0
      %v4505 = vsel %vm4425, %v1133, 0
      %v4508 = vsel %vm4425, %v1134, 0
      %v4511 = vsel %vm4425, %v1135, 0
      %v4514 = vsel %vm4425, %v1136, 0
      %v4517 = vsel %vm4425, %v1137, 0
      %v4520 = vsel %vm4425, %v1138, 0
      %v4522 = vsel %vm4425, %v2277, 0
      %v4524 = vsel %vm4425, %v2279, 0
      %v4526 = vsel %vm4425, %v2282, 0
      %v4528 = vsel %vm4425, %v2284, 0
      %v4530 = vsel %vm4425, %v2287, 0
      %v4532 = vsel %vm4425, %v2289, 0
      %v4534 = vsel %vm4425, %v2292, 0
      %v4536 = vsel %vm4425, %v2294, 0
      %v4538 = vsel %vm4425, %v2297, 0
      %v4540 = vsel %vm4425, %v2299, 0
      %v4542 = vsel %vm4425, %v2302, 0
      %v4544 = vsel %vm4425, %v2304, 0
      %v4546 = vsel %vm4425, %v2307, 0
      %v4548 = vsel %vm4425, %v2309, 0
      %v4550 = vsel %vm4425, %v2312, 0
      %v4552 = vsel %vm4425, %v2314, 0
      %v4554 = vsel %vm4425, %v2317, 0
      %v4556 = vsel %vm4425, %v2319, 0
      %v4558 = vsel %vm4425, %v2322, 0
      %v4560 = vsel %vm4425, %v2324, 0
      %v4562 = vsel %vm4425, %v2327, 0
      %v4564 = vsel %vm4425, %v2329, 0
      %v4566 = vsel %vm4425, %v2332, 0
      %v4568 = vsel %vm4425, %v2334, 0
      %v4570 = vsel %vm4425, %v2337, 0
      %v4572 = vsel %vm4425, %v2339, 0
      %v4574 = vsel %vm4425, %v2342, 0
      %v4576 = vsel %vm4425, %v2344, 0
      %v4578 = vsel %vm4425, %v2347, 0
      %v4580 = vsel %vm4425, %v2349, 0
      %v4582 = vsel %vm4425, %v2352, 0
      %v4584 = vsel %vm4425, %v2354, 0
      %v4587 = vsel %vm4425, %v3171, 0
      %v4590 = vsel %vm4425, %v3172, 0
      %v4593 = vsel %vm4425, %v3173, 0
      %v4596 = vsel %vm4425, %v3174, 0
      %v4599 = vsel %vm4425, %v3175, 0
      %v4602 = vsel %vm4425, %v3176, 0
      %v4605 = vsel %vm4425, %v3177, 0
      %v4608 = vsel %vm4425, %v3178, 0
      %v4611 = vsel %vm4425, %v3179, 0
      %v4614 = vsel %vm4425, %v3180, 0
      %v4617 = vsel %vm4425, %v3181, 0
      %v4620 = vsel %vm4425, %v3182, 0
      %v4623 = vsel %vm4425, %v3183, 0
      %v4626 = vsel %vm4425, %v3184, 0
      %v4629 = vsel %vm4425, %v3185, 0
      %v4632 = vsel %vm4425, %v3186, 0
      %v4635 = vsel %vm4425, %v3187, 0
      %v4638 = vsel %vm4425, %v3188, 0
      %v4641 = vsel %vm4425, %v3189, 0
      %v4644 = vsel %vm4425, %v3190, 0
      %v4647 = vsel %vm4425, %v3191, 0
      %v4650 = vsel %vm4425, %v3192, 0
      %v4653 = vsel %vm4425, %v3193, 0
      %v4656 = vsel %vm4425, %v3194, 0
      %v4659 = vsel %vm4425, %v3195, 0
      %v4662 = vsel %vm4425, %v3196, 0
      %v4665 = vsel %vm4425, %v3197, 0
      %v4668 = vsel %vm4425, %v3198, 0
      %v4671 = vsel %vm4425, %v3199, 0
      %v4674 = vsel %vm4425, %v3200, 0
      %v4677 = vsel %vm4425, %v3201, 0
      %v4680 = vsel %vm4425, %v3202, 0
      %v4682 = vsel %vm4425, %v4341, 0
      %v4684 = vsel %vm4425, %v4343, 0
      %v4686 = vsel %vm4425, %v4346, 0
      %v4688 = vsel %vm4425, %v4348, 0
      %v4690 = vsel %vm4425, %v4351, 0
      %v4692 = vsel %vm4425, %v4353, 0
      %v4694 = vsel %vm4425, %v4356, 0
      %v4696 = vsel %vm4425, %v4358, 0
      %v4698 = vsel %vm4425, %v4361, 0
      %v4700 = vsel %vm4425, %v4363, 0
      %v4702 = vsel %vm4425, %v4366, 0
      %v4704 = vsel %vm4425, %v4368, 0
      %v4706 = vsel %vm4425, %v4371, 0
      %v4708 = vsel %vm4425, %v4373, 0
      %v4710 = vsel %vm4425, %v4376, 0
      %v4712 = vsel %vm4425, %v4378, 0
      %v4714 = vsel %vm4425, %v4381, 0
      %v4716 = vsel %vm4425, %v4383, 0
      %v4718 = vsel %vm4425, %v4386, 0
      %v4720 = vsel %vm4425, %v4388, 0
      %v4722 = vsel %vm4425, %v4391, 0
      %v4724 = vsel %vm4425, %v4393, 0
      %v4726 = vsel %vm4425, %v4396, 0
      %v4728 = vsel %vm4425, %v4398, 0
      %v4730 = vsel %vm4425, %v4401, 0
      %v4732 = vsel %vm4425, %v4403, 0
      %v4734 = vsel %vm4425, %v4406, 0
      %v4736 = vsel %vm4425, %v4408, 0
      %v4738 = vsel %vm4425, %v4411, 0
      %v4740 = vsel %vm4425, %v4413, 0
      %v4742 = vsel %vm4425, %v4416, 0
      %v4744 = vsel %vm4425, %v4418, 0
      %vm4746 = vcmask 1043456
      %v4748 = vsel %vm4746, %v282, 0
      %4750 = vmatprep.subr.mxu0 0.0
      %4751 = vmatpush1.msra.mxu0 0.0
      %4752 = vmatprep.subr.mxu0 0.0
      %4753 = vmatpush1.msra.mxu0 0.0
      %4754 = vmatprep.subr.mxu0 0.0
      %4755 = vmatpush1.msra.mxu0 0.0
      %4756 = vmatprep.subr.mxu0 0.0
      %4757 = vmatpush1.msra.mxu0 0.0
      %4758 = vmatprep.subr.mxu0 0.0
      %4759 = vmatpush1.msra.mxu0 0.0
      %4760 = vmatprep.subr.mxu0 0.0
      %4761 = vmatpush1.msra.mxu0 0.0
      %4762 = vmatprep.subr.mxu0 0.0
      %4763 = vmatpush1.msra.mxu0 0.0
      %4764 = vmatprep.subr.mxu0 0.0
      %4765 = vmatpush1.msra.mxu0 0.0
      %4766 = vmatprep.subr.mxu0 0.0
      %4767 = vmatpush1.msra.mxu0 0.0
      %4768 = vmatprep.subr.mxu0 0.0
      %4769 = vmatpush1.msra.mxu0 0.0
      %4770 = vmatprep.subr.mxu0 0.0
      %4771 = vmatpush1.msra.mxu0 0.0
      %4772 = vmatprep.subr.mxu0 0.0
      %4773 = vmatpush1.msra.mxu0 0.0
      %4774 = vmatprep.subr.mxu0 0.0
      %4775 = vmatpush1.msra.mxu0 0.0
      %4776 = vmatprep.subr.mxu0 0.0
      %4777 = vmatpush1.msra.mxu0 0.0
      %4778 = vmatprep.subr.mxu0 0.0
      %4779 = vmatpush1.msra.mxu0 0.0
      %4780 = vmatprep.subr.mxu0 0.0
      %4781 = vmatpush1.msra.mxu0 %v4748
      %4782 = vmatprep.subr.mxu0 0.0
      %4783 = vmatpush2.msra.mxu0 0.0
      %4784 = vmatprep.subr.mxu0 0.0
      %4785 = vmatpush2.msra.mxu0 0.0
      %4786 = vmatprep.subr.mxu0 0.0
      %4787 = vmatpush2.msra.mxu0 0.0
      %4788 = vmatprep.subr.mxu0 0.0
      %4789 = vmatpush2.msra.mxu0 0.0
      %4790 = vmatprep.subr.mxu0 0.0
      %4791 = vmatpush2.msra.mxu0 0.0
      %4792 = vmatprep.subr.mxu0 0.0
      %4793 = vmatpush2.msra.mxu0 0.0
      %4794 = vmatprep.subr.mxu0 0.0
      %4795 = vmatpush2.msra.mxu0 0.0
      %4796 = vmatprep.subr.mxu0 0.0
      %4797 = vmatpush2.msra.mxu0 0.0
      %4798 = vmatprep.subr.mxu0 0.0
      %4799 = vmatpush2.msra.mxu0 0.0
      %4800 = vmatprep.subr.mxu0 0.0
      %4801 = vmatpush2.msra.mxu0 0.0
      %4802 = vmatprep.subr.mxu0 0.0
      %4803 = vmatpush2.msra.mxu0 0.0
      %4804 = vmatprep.subr.mxu0 0.0
      %4805 = vmatpush2.msra.mxu0 0.0
      %4806 = vmatprep.subr.mxu0 0.0
      %4807 = vmatpush2.msra.mxu0 0.0
      %4808 = vmatprep.subr.mxu0 0.0
      %4809 = vmatpush2.msra.mxu0 0.0
      %4810 = vmatprep.subr.mxu0 0.0
      %4811 = vmatpush2.msra.mxu0 0.0
      %4812 = vmatprep.subr.mxu0 0.0
      %4813 = vmatpush2.msra.mxu0 0.0
      %4814 = vmatprep.mubr.f32.mxu0 0.0
      %4815 = vmatmul.mubr.f32.gmra.mxu0 %v4427
      %v4816 = vpop.f32.mrf.mxu0
      %v4817 = vadd.f32 %v4423, %v4816
      %v4818 = vpop.f32.mrf.mxu0
      %4819 = vmatprep.mubr.f32.mxu0 0.0
      %4820 = vmatmul.mubr.f32.gmra.mxu0 %v4430
      %v4821 = vpop.f32.mrf.mxu0
      %v4822 = vadd.f32 %v4423, %v4821
      %v4823 = vpop.f32.mrf.mxu0
      %4824 = vmatprep.mubr.f32.mxu0 0.0
      %4825 = vmatmul.mubr.f32.gmra.mxu0 %v4433
      %v4826 = vpop.f32.mrf.mxu0
      %v4827 = vadd.f32 %v4423, %v4826
      %v4828 = vpop.f32.mrf.mxu0
      %4829 = vmatprep.mubr.f32.mxu0 0.0
      %4830 = vmatmul.mubr.f32.gmra.mxu0 %v4436
      %v4831 = vpop.f32.mrf.mxu0
      %v4832 = vadd.f32 %v4423, %v4831
      %v4833 = vpop.f32.mrf.mxu0
      %4834 = vmatprep.mubr.f32.mxu0 0.0
      %4835 = vmatmul.mubr.f32.gmra.mxu0 %v4439
      %v4836 = vpop.f32.mrf.mxu0
      %v4837 = vadd.f32 %v4423, %v4836
      %v4838 = vpop.f32.mrf.mxu0
      %4839 = vmatprep.mubr.f32.mxu0 0.0
      %4840 = vmatmul.mubr.f32.gmra.mxu0 %v4442
      %v4841 = vpop.f32.mrf.mxu0
      %v4842 = vadd.f32 %v4423, %v4841
      %v4843 = vpop.f32.mrf.mxu0
      %4844 = vmatprep.mubr.f32.mxu0 0.0
      %4845 = vmatmul.mubr.f32.gmra.mxu0 %v4445
      %v4846 = vpop.f32.mrf.mxu0
      %v4847 = vadd.f32 %v4423, %v4846
      %v4848 = vpop.f32.mrf.mxu0
      %4849 = vmatprep.mubr.f32.mxu0 0.0
      %4850 = vmatmul.mubr.f32.gmra.mxu0 %v4448
      %v4851 = vpop.f32.mrf.mxu0
      %v4852 = vadd.f32 %v4423, %v4851
      %v4853 = vpop.f32.mrf.mxu0
      %4854 = vmatprep.mubr.f32.mxu0 0.0
      %4855 = vmatmul.mubr.f32.gmra.mxu0 %v4451
      %v4856 = vpop.f32.mrf.mxu0
      %v4857 = vadd.f32 %v4423, %v4856
      %v4858 = vpop.f32.mrf.mxu0
      %4859 = vmatprep.mubr.f32.mxu0 0.0
      %4860 = vmatmul.mubr.f32.gmra.mxu0 %v4454
      %v4861 = vpop.f32.mrf.mxu0
      %v4862 = vadd.f32 %v4423, %v4861
      %v4863 = vpop.f32.mrf.mxu0
      %4864 = vmatprep.mubr.f32.mxu0 0.0
      %4865 = vmatmul.mubr.f32.gmra.mxu0 %v4457
      %v4866 = vpop.f32.mrf.mxu0
      %v4867 = vadd.f32 %v4423, %v4866
      %v4868 = vpop.f32.mrf.mxu0
      %4869 = vmatprep.mubr.f32.mxu0 0.0
      %4870 = vmatmul.mubr.f32.gmra.mxu0 %v4460
      %v4871 = vpop.f32.mrf.mxu0
      %v4872 = vadd.f32 %v4423, %v4871
      %v4873 = vpop.f32.mrf.mxu0
      %4874 = vmatprep.mubr.f32.mxu0 0.0
      %4875 = vmatmul.mubr.f32.gmra.mxu0 %v4463
      %v4876 = vpop.f32.mrf.mxu0
      %v4877 = vadd.f32 %v4423, %v4876
      %v4878 = vpop.f32.mrf.mxu0
      %4879 = vmatprep.mubr.f32.mxu0 0.0
      %4880 = vmatmul.mubr.f32.gmra.mxu0 %v4466
      %v4881 = vpop.f32.mrf.mxu0
      %v4882 = vadd.f32 %v4423, %v4881
      %v4883 = vpop.f32.mrf.mxu0
      %4884 = vmatprep.mubr.f32.mxu0 0.0
      %4885 = vmatmul.mubr.f32.gmra.mxu0 %v4469
      %v4886 = vpop.f32.mrf.mxu0
      %v4887 = vadd.f32 %v4423, %v4886
      %v4888 = vpop.f32.mrf.mxu0
      %4889 = vmatprep.mubr.f32.mxu0 0.0
      %4890 = vmatmul.mubr.f32.gmra.mxu0 %v4472
      %v4891 = vpop.f32.mrf.mxu0
      %v4892 = vadd.f32 %v4423, %v4891
      %v4893 = vpop.f32.mrf.mxu0
      %4894 = vmatprep.mubr.f32.mxu0 0.0
      %4895 = vmatmul.mubr.f32.gmra.mxu0 %v4475
      %v4896 = vpop.f32.mrf.mxu0
      %v4897 = vadd.f32 %v4423, %v4896
      %v4898 = vpop.f32.mrf.mxu0
      %4899 = vmatprep.mubr.f32.mxu0 0.0
      %4900 = vmatmul.mubr.f32.gmra.mxu0 %v4478
      %v4901 = vpop.f32.mrf.mxu0
      %v4902 = vadd.f32 %v4423, %v4901
      %v4903 = vpop.f32.mrf.mxu0
      %4904 = vmatprep.mubr.f32.mxu0 0.0
      %4905 = vmatmul.mubr.f32.gmra.mxu0 %v4481
      %v4906 = vpop.f32.mrf.mxu0
      %v4907 = vadd.f32 %v4423, %v4906
      %v4908 = vpop.f32.mrf.mxu0
      %4909 = vmatprep.mubr.f32.mxu0 0.0
      %4910 = vmatmul.mubr.f32.gmra.mxu0 %v4484
      %v4911 = vpop.f32.mrf.mxu0
      %v4912 = vadd.f32 %v4423, %v4911
      %v4913 = vpop.f32.mrf.mxu0
      %4914 = vmatprep.mubr.f32.mxu0 0.0
      %4915 = vmatmul.mubr.f32.gmra.mxu0 %v4487
      %v4916 = vpop.f32.mrf.mxu0
      %v4917 = vadd.f32 %v4423, %v4916
      %v4918 = vpop.f32.mrf.mxu0
      %4919 = vmatprep.mubr.f32.mxu0 0.0
      %4920 = vmatmul.mubr.f32.gmra.mxu0 %v4490
      %v4921 = vpop.f32.mrf.mxu0
      %v4922 = vadd.f32 %v4423, %v4921
      %v4923 = vpop.f32.mrf.mxu0
      %4924 = vmatprep.mubr.f32.mxu0 0.0
      %4925 = vmatmul.mubr.f32.gmra.mxu0 %v4493
      %v4926 = vpop.f32.mrf.mxu0
      %v4927 = vadd.f32 %v4423, %v4926
      %v4928 = vpop.f32.mrf.mxu0
      %4929 = vmatprep.mubr.f32.mxu0 0.0
      %4930 = vmatmul.mubr.f32.gmra.mxu0 %v4496
      %v4931 = vpop.f32.mrf.mxu0
      %v4932 = vadd.f32 %v4423, %v4931
      %v4933 = vpop.f32.mrf.mxu0
      %4934 = vmatprep.mubr.f32.mxu0 0.0
      %4935 = vmatmul.mubr.f32.gmra.mxu0 %v4499
      %v4936 = vpop.f32.mrf.mxu0
      %v4937 = vadd.f32 %v4423, %v4936
      %v4938 = vpop.f32.mrf.mxu0
      %4939 = vmatprep.mubr.f32.mxu0 0.0
      %4940 = vmatmul.mubr.f32.gmra.mxu0 %v4502
      %v4941 = vpop.f32.mrf.mxu0
      %v4942 = vadd.f32 %v4423, %v4941
      %v4943 = vpop.f32.mrf.mxu0
      %4944 = vmatprep.mubr.f32.mxu0 0.0
      %4945 = vmatmul.mubr.f32.gmra.mxu0 %v4505
      %v4946 = vpop.f32.mrf.mxu0
      %v4947 = vadd.f32 %v4423, %v4946
      %v4948 = vpop.f32.mrf.mxu0
      %4949 = vmatprep.mubr.f32.mxu0 0.0
      %4950 = vmatmul.mubr.f32.gmra.mxu0 %v4508
      %v4951 = vpop.f32.mrf.mxu0
      %v4952 = vadd.f32 %v4423, %v4951
      %v4953 = vpop.f32.mrf.mxu0
      %4954 = vmatprep.mubr.f32.mxu0 0.0
      %4955 = vmatmul.mubr.f32.gmra.mxu0 %v4511
      %v4956 = vpop.f32.mrf.mxu0
      %v4957 = vadd.f32 %v4423, %v4956
      %v4958 = vpop.f32.mrf.mxu0
      %4959 = vmatprep.mubr.f32.mxu0 0.0
      %4960 = vmatmul.mubr.f32.gmra.mxu0 %v4514
      %v4961 = vpop.f32.mrf.mxu0
      %v4962 = vadd.f32 %v4423, %v4961
      %v4963 = vpop.f32.mrf.mxu0
      %4964 = vmatprep.mubr.f32.mxu0 0.0
      %4965 = vmatmul.mubr.f32.gmra.mxu0 %v4517
      %v4966 = vpop.f32.mrf.mxu0
      %v4967 = vadd.f32 %v4423, %v4966
      %v4968 = vpop.f32.mrf.mxu0
      %4969 = vmatprep.mubr.f32.mxu0 0.0
      %4970 = vmatmul.mubr.f32.gmra.mxu0 %v4520
      %v4971 = vpop.f32.mrf.mxu0
      %v4972 = vadd.f32 %v4423, %v4971
      %v4973 = vpop.f32.mrf.mxu0
      %4974 = vmatprep.mubr.f32.mxu0 0.0
      %4975 = vmatmul.mubr.f32.gmra.mxu0 %v4522
      %v4976 = vpop.f32.mrf.mxu0
      %v4977 = vadd.f32 %v4423, %v4976
      %v4978 = vpop.f32.mrf.mxu0
      %4979 = vmatprep.mubr.f32.mxu0 0.0
      %4980 = vmatmul.mubr.f32.gmra.mxu0 %v4524
      %v4981 = vpop.f32.mrf.mxu0
      %v4982 = vadd.f32 %v4423, %v4981
      %v4983 = vpop.f32.mrf.mxu0
      %4984 = vmatprep.mubr.f32.mxu0 0.0
      %4985 = vmatmul.mubr.f32.gmra.mxu0 %v4526
      %v4986 = vpop.f32.mrf.mxu0
      %v4987 = vadd.f32 %v4423, %v4986
      %v4988 = vpop.f32.mrf.mxu0
      %4989 = vmatprep.mubr.f32.mxu0 0.0
      %4990 = vmatmul.mubr.f32.gmra.mxu0 %v4528
      %v4991 = vpop.f32.mrf.mxu0
      %v4992 = vadd.f32 %v4423, %v4991
      %v4993 = vpop.f32.mrf.mxu0
      %4994 = vmatprep.mubr.f32.mxu0 0.0
      %4995 = vmatmul.mubr.f32.gmra.mxu0 %v4530
      %v4996 = vpop.f32.mrf.mxu0
      %v4997 = vadd.f32 %v4423, %v4996
      %v4998 = vpop.f32.mrf.mxu0
      %4999 = vmatprep.mubr.f32.mxu0 0.0
      %5000 = vmatmul.mubr.f32.gmra.mxu0 %v4532
      %v5001 = vpop.f32.mrf.mxu0
      %v5002 = vadd.f32 %v4423, %v5001
      %v5003 = vpop.f32.mrf.mxu0
      %5004 = vmatprep.mubr.f32.mxu0 0.0
      %5005 = vmatmul.mubr.f32.gmra.mxu0 %v4534
      %v5006 = vpop.f32.mrf.mxu0
      %v5007 = vadd.f32 %v4423, %v5006
      %v5008 = vpop.f32.mrf.mxu0
      %5009 = vmatprep.mubr.f32.mxu0 0.0
      %5010 = vmatmul.mubr.f32.gmra.mxu0 %v4536
      %v5011 = vpop.f32.mrf.mxu0
      %v5012 = vadd.f32 %v4423, %v5011
      %v5013 = vpop.f32.mrf.mxu0
      %5014 = vmatprep.mubr.f32.mxu0 0.0
      %5015 = vmatmul.mubr.f32.gmra.mxu0 %v4538
      %v5016 = vpop.f32.mrf.mxu0
      %v5017 = vadd.f32 %v4423, %v5016
      %v5018 = vpop.f32.mrf.mxu0
      %5019 = vmatprep.mubr.f32.mxu0 0.0
      %5020 = vmatmul.mubr.f32.gmra.mxu0 %v4540
      %v5021 = vpop.f32.mrf.mxu0
      %v5022 = vadd.f32 %v4423, %v5021
      %v5023 = vpop.f32.mrf.mxu0
      %5024 = vmatprep.mubr.f32.mxu0 0.0
      %5025 = vmatmul.mubr.f32.gmra.mxu0 %v4542
      %v5026 = vpop.f32.mrf.mxu0
      %v5027 = vadd.f32 %v4423, %v5026
      %v5028 = vpop.f32.mrf.mxu0
      %5029 = vmatprep.mubr.f32.mxu0 0.0
      %5030 = vmatmul.mubr.f32.gmra.mxu0 %v4544
      %v5031 = vpop.f32.mrf.mxu0
      %v5032 = vadd.f32 %v4423, %v5031
      %v5033 = vpop.f32.mrf.mxu0
      %5034 = vmatprep.mubr.f32.mxu0 0.0
      %5035 = vmatmul.mubr.f32.gmra.mxu0 %v4546
      %v5036 = vpop.f32.mrf.mxu0
      %v5037 = vadd.f32 %v4423, %v5036
      %v5038 = vpop.f32.mrf.mxu0
      %5039 = vmatprep.mubr.f32.mxu0 0.0
      %5040 = vmatmul.mubr.f32.gmra.mxu0 %v4548
      %v5041 = vpop.f32.mrf.mxu0
      %v5042 = vadd.f32 %v4423, %v5041
      %v5043 = vpop.f32.mrf.mxu0
      %5044 = vmatprep.mubr.f32.mxu0 0.0
      %5045 = vmatmul.mubr.f32.gmra.mxu0 %v4550
      %v5046 = vpop.f32.mrf.mxu0
      %v5047 = vadd.f32 %v4423, %v5046
      %v5048 = vpop.f32.mrf.mxu0
      %5049 = vmatprep.mubr.f32.mxu0 0.0
      %5050 = vmatmul.mubr.f32.gmra.mxu0 %v4552
      %v5051 = vpop.f32.mrf.mxu0
      %v5052 = vadd.f32 %v4423, %v5051
      %v5053 = vpop.f32.mrf.mxu0
      %5054 = vmatprep.mubr.f32.mxu0 0.0
      %5055 = vmatmul.mubr.f32.gmra.mxu0 %v4554
      %v5056 = vpop.f32.mrf.mxu0
      %v5057 = vadd.f32 %v4423, %v5056
      %v5058 = vpop.f32.mrf.mxu0
      %5059 = vmatprep.mubr.f32.mxu0 0.0
      %5060 = vmatmul.mubr.f32.gmra.mxu0 %v4556
      %v5061 = vpop.f32.mrf.mxu0
      %v5062 = vadd.f32 %v4423, %v5061
      %v5063 = vpop.f32.mrf.mxu0
      %5064 = vmatprep.mubr.f32.mxu0 0.0
      %5065 = vmatmul.mubr.f32.gmra.mxu0 %v4558
      %v5066 = vpop.f32.mrf.mxu0
      %v5067 = vadd.f32 %v4423, %v5066
      %v5068 = vpop.f32.mrf.mxu0
      %5069 = vmatprep.mubr.f32.mxu0 0.0
      %5070 = vmatmul.mubr.f32.gmra.mxu0 %v4560
      %v5071 = vpop.f32.mrf.mxu0
      %v5072 = vadd.f32 %v4423, %v5071
      %v5073 = vpop.f32.mrf.mxu0
      %5074 = vmatprep.mubr.f32.mxu0 0.0
      %5075 = vmatmul.mubr.f32.gmra.mxu0 %v4562
      %v5076 = vpop.f32.mrf.mxu0
      %v5077 = vadd.f32 %v4423, %v5076
      %v5078 = vpop.f32.mrf.mxu0
      %5079 = vmatprep.mubr.f32.mxu0 0.0
      %5080 = vmatmul.mubr.f32.gmra.mxu0 %v4564
      %v5081 = vpop.f32.mrf.mxu0
      %v5082 = vadd.f32 %v4423, %v5081
      %v5083 = vpop.f32.mrf.mxu0
      %5084 = vmatprep.mubr.f32.mxu0 0.0
      %5085 = vmatmul.mubr.f32.gmra.mxu0 %v4566
      %v5086 = vpop.f32.mrf.mxu0
      %v5087 = vadd.f32 %v4423, %v5086
      %v5088 = vpop.f32.mrf.mxu0
      %5089 = vmatprep.mubr.f32.mxu0 0.0
      %5090 = vmatmul.mubr.f32.gmra.mxu0 %v4568
      %v5091 = vpop.f32.mrf.mxu0
      %v5092 = vadd.f32 %v4423, %v5091
      %v5093 = vpop.f32.mrf.mxu0
      %5094 = vmatprep.mubr.f32.mxu0 0.0
      %5095 = vmatmul.mubr.f32.gmra.mxu0 %v4570
      %v5096 = vpop.f32.mrf.mxu0
      %v5097 = vadd.f32 %v4423, %v5096
      %v5098 = vpop.f32.mrf.mxu0
      %5099 = vmatprep.mubr.f32.mxu0 0.0
      %5100 = vmatmul.mubr.f32.gmra.mxu0 %v4572
      %v5101 = vpop.f32.mrf.mxu0
      %v5102 = vadd.f32 %v4423, %v5101
      %v5103 = vpop.f32.mrf.mxu0
      %5104 = vmatprep.mubr.f32.mxu0 0.0
      %5105 = vmatmul.mubr.f32.gmra.mxu0 %v4574
      %v5106 = vpop.f32.mrf.mxu0
      %v5107 = vadd.f32 %v4423, %v5106
      %v5108 = vpop.f32.mrf.mxu0
      %5109 = vmatprep.mubr.f32.mxu0 0.0
      %5110 = vmatmul.mubr.f32.gmra.mxu0 %v4576
      %v5111 = vpop.f32.mrf.mxu0
      %v5112 = vadd.f32 %v4423, %v5111
      %v5113 = vpop.f32.mrf.mxu0
      %5114 = vmatprep.mubr.f32.mxu0 0.0
      %5115 = vmatmul.mubr.f32.gmra.mxu0 %v4578
      %v5116 = vpop.f32.mrf.mxu0
      %v5117 = vadd.f32 %v4423, %v5116
      %v5118 = vpop.f32.mrf.mxu0
      %5119 = vmatprep.mubr.f32.mxu0 0.0
      %5120 = vmatmul.mubr.f32.gmra.mxu0 %v4580
      %v5121 = vpop.f32.mrf.mxu0
      %v5122 = vadd.f32 %v4423, %v5121
      %v5123 = vpop.f32.mrf.mxu0
      %5124 = vmatprep.mubr.f32.mxu0 0.0
      %5125 = vmatmul.mubr.f32.gmra.mxu0 %v4582
      %v5126 = vpop.f32.mrf.mxu0
      %v5127 = vadd.f32 %v4423, %v5126
      %v5128 = vpop.f32.mrf.mxu0
      %5129 = vmatprep.mubr.f32.mxu0 0.0
      %5130 = vmatmul.mubr.f32.gmra.mxu0 %v4584
      %v5131 = vpop.f32.mrf.mxu0
      %v5132 = vadd.f32 %v4423, %v5131
      %v5133 = vpop.f32.mrf.mxu0
      %5134 = vmatprep.mubr.f32.mxu0 0.0
      %5135 = vmatmul.mubr.f32.gmra.mxu0 %v4587
      %v5136 = vpop.f32.mrf.mxu0
      %v5137 = vadd.f32 %v4423, %v5136
      %v5138 = vpop.f32.mrf.mxu0
      %5139 = vmatprep.mubr.f32.mxu0 0.0
      %5140 = vmatmul.mubr.f32.gmra.mxu0 %v4590
      %v5141 = vpop.f32.mrf.mxu0
      %v5142 = vadd.f32 %v4423, %v5141
      %v5143 = vpop.f32.mrf.mxu0
      %5144 = vmatprep.mubr.f32.mxu0 0.0
      %5145 = vmatmul.mubr.f32.gmra.mxu0 %v4593
      %v5146 = vpop.f32.mrf.mxu0
      %v5147 = vadd.f32 %v4423, %v5146
      %v5148 = vpop.f32.mrf.mxu0
      %5149 = vmatprep.mubr.f32.mxu0 0.0
      %5150 = vmatmul.mubr.f32.gmra.mxu0 %v4596
      %v5151 = vpop.f32.mrf.mxu0
      %v5152 = vadd.f32 %v4423, %v5151
      %v5153 = vpop.f32.mrf.mxu0
      %5154 = vmatprep.mubr.f32.mxu0 0.0
      %5155 = vmatmul.mubr.f32.gmra.mxu0 %v4599
      %v5156 = vpop.f32.mrf.mxu0
      %v5157 = vadd.f32 %v4423, %v5156
      %v5158 = vpop.f32.mrf.mxu0
      %5159 = vmatprep.mubr.f32.mxu0 0.0
      %5160 = vmatmul.mubr.f32.gmra.mxu0 %v4602
      %v5161 = vpop.f32.mrf.mxu0
      %v5162 = vadd.f32 %v4423, %v5161
      %v5163 = vpop.f32.mrf.mxu0
      %5164 = vmatprep.mubr.f32.mxu0 0.0
      %5165 = vmatmul.mubr.f32.gmra.mxu0 %v4605
      %v5166 = vpop.f32.mrf.mxu0
      %v5167 = vadd.f32 %v4423, %v5166
      %v5168 = vpop.f32.mrf.mxu0
      %5169 = vmatprep.mubr.f32.mxu0 0.0
      %5170 = vmatmul.mubr.f32.gmra.mxu0 %v4608
      %v5171 = vpop.f32.mrf.mxu0
      %v5172 = vadd.f32 %v4423, %v5171
      %v5173 = vpop.f32.mrf.mxu0
      %5174 = vmatprep.mubr.f32.mxu0 0.0
      %5175 = vmatmul.mubr.f32.gmra.mxu0 %v4611
      %v5176 = vpop.f32.mrf.mxu0
      %v5177 = vadd.f32 %v4423, %v5176
      %v5178 = vpop.f32.mrf.mxu0
      %5179 = vmatprep.mubr.f32.mxu0 0.0
      %5180 = vmatmul.mubr.f32.gmra.mxu0 %v4614
      %v5181 = vpop.f32.mrf.mxu0
      %v5182 = vadd.f32 %v4423, %v5181
      %v5183 = vpop.f32.mrf.mxu0
      %5184 = vmatprep.mubr.f32.mxu0 0.0
      %5185 = vmatmul.mubr.f32.gmra.mxu0 %v4617
      %v5186 = vpop.f32.mrf.mxu0
      %v5187 = vadd.f32 %v4423, %v5186
      %v5188 = vpop.f32.mrf.mxu0
      %5189 = vmatprep.mubr.f32.mxu0 0.0
      %5190 = vmatmul.mubr.f32.gmra.mxu0 %v4620
      %v5191 = vpop.f32.mrf.mxu0
      %v5192 = vadd.f32 %v4423, %v5191
      %v5193 = vpop.f32.mrf.mxu0
      %5194 = vmatprep.mubr.f32.mxu0 0.0
      %5195 = vmatmul.mubr.f32.gmra.mxu0 %v4623
      %v5196 = vpop.f32.mrf.mxu0
      %v5197 = vadd.f32 %v4423, %v5196
      %v5198 = vpop.f32.mrf.mxu0
      %5199 = vmatprep.mubr.f32.mxu0 0.0
      %5200 = vmatmul.mubr.f32.gmra.mxu0 %v4626
      %v5201 = vpop.f32.mrf.mxu0
      %v5202 = vadd.f32 %v4423, %v5201
      %v5203 = vpop.f32.mrf.mxu0
      %5204 = vmatprep.mubr.f32.mxu0 0.0
      %5205 = vmatmul.mubr.f32.gmra.mxu0 %v4629
      %v5206 = vpop.f32.mrf.mxu0
      %v5207 = vadd.f32 %v4423, %v5206
      %v5208 = vpop.f32.mrf.mxu0
      %5209 = vmatprep.mubr.f32.mxu0 0.0
      %5210 = vmatmul.mubr.f32.gmra.mxu0 %v4632
      %v5211 = vpop.f32.mrf.mxu0
      %v5212 = vadd.f32 %v4423, %v5211
      %v5213 = vpop.f32.mrf.mxu0
      %5214 = vmatprep.mubr.f32.mxu0 0.0
      %5215 = vmatmul.mubr.f32.gmra.mxu0 %v4635
      %v5216 = vpop.f32.mrf.mxu0
      %v5217 = vadd.f32 %v4423, %v5216
      %v5218 = vpop.f32.mrf.mxu0
      %5219 = vmatprep.mubr.f32.mxu0 0.0
      %5220 = vmatmul.mubr.f32.gmra.mxu0 %v4638
      %v5221 = vpop.f32.mrf.mxu0
      %v5222 = vadd.f32 %v4423, %v5221
      %v5223 = vpop.f32.mrf.mxu0
      %5224 = vmatprep.mubr.f32.mxu0 0.0
      %5225 = vmatmul.mubr.f32.gmra.mxu0 %v4641
      %v5226 = vpop.f32.mrf.mxu0
      %v5227 = vadd.f32 %v4423, %v5226
      %v5228 = vpop.f32.mrf.mxu0
      %5229 = vmatprep.mubr.f32.mxu0 0.0
      %5230 = vmatmul.mubr.f32.gmra.mxu0 %v4644
      %v5231 = vpop.f32.mrf.mxu0
      %v5232 = vadd.f32 %v4423, %v5231
      %v5233 = vpop.f32.mrf.mxu0
      %5234 = vmatprep.mubr.f32.mxu0 0.0
      %5235 = vmatmul.mubr.f32.gmra.mxu0 %v4647
      %v5236 = vpop.f32.mrf.mxu0
      %v5237 = vadd.f32 %v4423, %v5236
      %v5238 = vpop.f32.mrf.mxu0
      %5239 = vmatprep.mubr.f32.mxu0 0.0
      %5240 = vmatmul.mubr.f32.gmra.mxu0 %v4650
      %v5241 = vpop.f32.mrf.mxu0
      %v5242 = vadd.f32 %v4423, %v5241
      %v5243 = vpop.f32.mrf.mxu0
      %5244 = vmatprep.mubr.f32.mxu0 0.0
      %5245 = vmatmul.mubr.f32.gmra.mxu0 %v4653
      %v5246 = vpop.f32.mrf.mxu0
      %v5247 = vadd.f32 %v4423, %v5246
      %v5248 = vpop.f32.mrf.mxu0
      %5249 = vmatprep.mubr.f32.mxu0 0.0
      %5250 = vmatmul.mubr.f32.gmra.mxu0 %v4656
      %v5251 = vpop.f32.mrf.mxu0
      %v5252 = vadd.f32 %v4423, %v5251
      %v5253 = vpop.f32.mrf.mxu0
      %5254 = vmatprep.mubr.f32.mxu0 0.0
      %5255 = vmatmul.mubr.f32.gmra.mxu0 %v4659
      %v5256 = vpop.f32.mrf.mxu0
      %v5257 = vadd.f32 %v4423, %v5256
      %v5258 = vpop.f32.mrf.mxu0
      %5259 = vmatprep.mubr.f32.mxu0 0.0
      %5260 = vmatmul.mubr.f32.gmra.mxu0 %v4662
      %v5261 = vpop.f32.mrf.mxu0
      %v5262 = vadd.f32 %v4423, %v5261
      %v5263 = vpop.f32.mrf.mxu0
      %5264 = vmatprep.mubr.f32.mxu0 0.0
      %5265 = vmatmul.mubr.f32.gmra.mxu0 %v4665
      %v5266 = vpop.f32.mrf.mxu0
      %v5267 = vadd.f32 %v4423, %v5266
      %v5268 = vpop.f32.mrf.mxu0
      %5269 = vmatprep.mubr.f32.mxu0 0.0
      %5270 = vmatmul.mubr.f32.gmra.mxu0 %v4668
      %v5271 = vpop.f32.mrf.mxu0
      %v5272 = vadd.f32 %v4423, %v5271
      %v5273 = vpop.f32.mrf.mxu0
      %5274 = vmatprep.mubr.f32.mxu0 0.0
      %5275 = vmatmul.mubr.f32.gmra.mxu0 %v4671
      %v5276 = vpop.f32.mrf.mxu0
      %v5277 = vadd.f32 %v4423, %v5276
      %v5278 = vpop.f32.mrf.mxu0
      %5279 = vmatprep.mubr.f32.mxu0 0.0
      %5280 = vmatmul.mubr.f32.gmra.mxu0 %v4674
      %v5281 = vpop.f32.mrf.mxu0
      %v5282 = vadd.f32 %v4423, %v5281
      %v5283 = vpop.f32.mrf.mxu0
      %5284 = vmatprep.mubr.f32.mxu0 0.0
      %5285 = vmatmul.mubr.f32.gmra.mxu0 %v4677
      %v5286 = vpop.f32.mrf.mxu0
      %v5287 = vadd.f32 %v4423, %v5286
      %v5288 = vpop.f32.mrf.mxu0
      %5289 = vmatprep.mubr.f32.mxu0 0.0
      %5290 = vmatmul.mubr.f32.gmra.mxu0 %v4680
      %v5291 = vpop.f32.mrf.mxu0
      %v5292 = vadd.f32 %v4423, %v5291
      %v5293 = vpop.f32.mrf.mxu0
      %5294 = vmatprep.mubr.f32.mxu0 0.0
      %5295 = vmatmul.mubr.f32.gmra.mxu0 %v4682
      %v5296 = vpop.f32.mrf.mxu0
      %v5297 = vadd.f32 %v4423, %v5296
      %v5298 = vpop.f32.mrf.mxu0
      %5299 = vmatprep.mubr.f32.mxu0 0.0
      %5300 = vmatmul.mubr.f32.gmra.mxu0 %v4684
      %v5301 = vpop.f32.mrf.mxu0
      %v5302 = vadd.f32 %v4423, %v5301
      %v5303 = vpop.f32.mrf.mxu0
      %5304 = vmatprep.mubr.f32.mxu0 0.0
      %5305 = vmatmul.mubr.f32.gmra.mxu0 %v4686
      %v5306 = vpop.f32.mrf.mxu0
      %v5307 = vadd.f32 %v4423, %v5306
      %v5308 = vpop.f32.mrf.mxu0
      %5309 = vmatprep.mubr.f32.mxu0 0.0
      %5310 = vmatmul.mubr.f32.gmra.mxu0 %v4688
      %v5311 = vpop.f32.mrf.mxu0
      %v5312 = vadd.f32 %v4423, %v5311
      %v5313 = vpop.f32.mrf.mxu0
      %5314 = vmatprep.mubr.f32.mxu0 0.0
      %5315 = vmatmul.mubr.f32.gmra.mxu0 %v4690
      %v5316 = vpop.f32.mrf.mxu0
      %v5317 = vadd.f32 %v4423, %v5316
      %v5318 = vpop.f32.mrf.mxu0
      %5319 = vmatprep.mubr.f32.mxu0 0.0
      %5320 = vmatmul.mubr.f32.gmra.mxu0 %v4692
      %v5321 = vpop.f32.mrf.mxu0
      %v5322 = vadd.f32 %v4423, %v5321
      %v5323 = vpop.f32.mrf.mxu0
      %5324 = vmatprep.mubr.f32.mxu0 0.0
      %5325 = vmatmul.mubr.f32.gmra.mxu0 %v4694
      %v5326 = vpop.f32.mrf.mxu0
      %v5327 = vadd.f32 %v4423, %v5326
      %v5328 = vpop.f32.mrf.mxu0
      %5329 = vmatprep.mubr.f32.mxu0 0.0
      %5330 = vmatmul.mubr.f32.gmra.mxu0 %v4696
      %v5331 = vpop.f32.mrf.mxu0
      %v5332 = vadd.f32 %v4423, %v5331
      %v5333 = vpop.f32.mrf.mxu0
      %5334 = vmatprep.mubr.f32.mxu0 0.0
      %5335 = vmatmul.mubr.f32.gmra.mxu0 %v4698
      %v5336 = vpop.f32.mrf.mxu0
      %v5337 = vadd.f32 %v4423, %v5336
      %v5338 = vpop.f32.mrf.mxu0
      %5339 = vmatprep.mubr.f32.mxu0 0.0
      %5340 = vmatmul.mubr.f32.gmra.mxu0 %v4700
      %v5341 = vpop.f32.mrf.mxu0
      %v5342 = vadd.f32 %v4423, %v5341
      %v5343 = vpop.f32.mrf.mxu0
      %5344 = vmatprep.mubr.f32.mxu0 0.0
      %5345 = vmatmul.mubr.f32.gmra.mxu0 %v4702
      %v5346 = vpop.f32.mrf.mxu0
      %v5347 = vadd.f32 %v4423, %v5346
      %v5348 = vpop.f32.mrf.mxu0
      %5349 = vmatprep.mubr.f32.mxu0 0.0
      %5350 = vmatmul.mubr.f32.gmra.mxu0 %v4704
      %v5351 = vpop.f32.mrf.mxu0
      %v5352 = vadd.f32 %v4423, %v5351
      %v5353 = vpop.f32.mrf.mxu0
      %5354 = vmatprep.mubr.f32.mxu0 0.0
      %5355 = vmatmul.mubr.f32.gmra.mxu0 %v4706
      %v5356 = vpop.f32.mrf.mxu0
      %v5357 = vadd.f32 %v4423, %v5356
      %v5358 = vpop.f32.mrf.mxu0
      %5359 = vmatprep.mubr.f32.mxu0 0.0
      %5360 = vmatmul.mubr.f32.gmra.mxu0 %v4708
      %v5361 = vpop.f32.mrf.mxu0
      %v5362 = vadd.f32 %v4423, %v5361
      %v5363 = vpop.f32.mrf.mxu0
      %5364 = vmatprep.mubr.f32.mxu0 0.0
      %5365 = vmatmul.mubr.f32.gmra.mxu0 %v4710
      %v5366 = vpop.f32.mrf.mxu0
      %v5367 = vadd.f32 %v4423, %v5366
      %v5368 = vpop.f32.mrf.mxu0
      %5369 = vmatprep.mubr.f32.mxu0 0.0
      %5370 = vmatmul.mubr.f32.gmra.mxu0 %v4712
      %v5371 = vpop.f32.mrf.mxu0
      %v5372 = vadd.f32 %v4423, %v5371
      %v5373 = vpop.f32.mrf.mxu0
      %5374 = vmatprep.mubr.f32.mxu0 0.0
      %5375 = vmatmul.mubr.f32.gmra.mxu0 %v4714
      %v5376 = vpop.f32.mrf.mxu0
      %v5377 = vadd.f32 %v4423, %v5376
      %v5378 = vpop.f32.mrf.mxu0
      %5379 = vmatprep.mubr.f32.mxu0 0.0
      %5380 = vmatmul.mubr.f32.gmra.mxu0 %v4716
      %v5381 = vpop.f32.mrf.mxu0
      %v5382 = vadd.f32 %v4423, %v5381
      %v5383 = vpop.f32.mrf.mxu0
      %5384 = vmatprep.mubr.f32.mxu0 0.0
      %5385 = vmatmul.mubr.f32.gmra.mxu0 %v4718
      %v5386 = vpop.f32.mrf.mxu0
      %v5387 = vadd.f32 %v4423, %v5386
      %v5388 = vpop.f32.mrf.mxu0
      %5389 = vmatprep.mubr.f32.mxu0 0.0
      %5390 = vmatmul.mubr.f32.gmra.mxu0 %v4720
      %v5391 = vpop.f32.mrf.mxu0
      %v5392 = vadd.f32 %v4423, %v5391
      %v5393 = vpop.f32.mrf.mxu0
      %5394 = vmatprep.mubr.f32.mxu0 0.0
      %5395 = vmatmul.mubr.f32.gmra.mxu0 %v4722
      %v5396 = vpop.f32.mrf.mxu0
      %v5397 = vadd.f32 %v4423, %v5396
      %v5398 = vpop.f32.mrf.mxu0
      %5399 = vmatprep.mubr.f32.mxu0 0.0
      %5400 = vmatmul.mubr.f32.gmra.mxu0 %v4724
      %v5401 = vpop.f32.mrf.mxu0
      %v5402 = vadd.f32 %v4423, %v5401
      %v5403 = vpop.f32.mrf.mxu0
      %5404 = vmatprep.mubr.f32.mxu0 0.0
      %5405 = vmatmul.mubr.f32.gmra.mxu0 %v4726
      %v5406 = vpop.f32.mrf.mxu0
      %v5407 = vadd.f32 %v4423, %v5406
      %v5408 = vpop.f32.mrf.mxu0
      %5409 = vmatprep.mubr.f32.mxu0 0.0
      %5410 = vmatmul.mubr.f32.gmra.mxu0 %v4728
      %v5411 = vpop.f32.mrf.mxu0
      %v5412 = vadd.f32 %v4423, %v5411
      %v5413 = vpop.f32.mrf.mxu0
      %5414 = vmatprep.mubr.f32.mxu0 0.0
      %5415 = vmatmul.mubr.f32.gmra.mxu0 %v4730
      %v5416 = vpop.f32.mrf.mxu0
      %v5417 = vadd.f32 %v4423, %v5416
      %v5418 = vpop.f32.mrf.mxu0
      %5419 = vmatprep.mubr.f32.mxu0 0.0
      %5420 = vmatmul.mubr.f32.gmra.mxu0 %v4732
      %v5421 = vpop.f32.mrf.mxu0
      %v5422 = vadd.f32 %v4423, %v5421
      %v5423 = vpop.f32.mrf.mxu0
      %5424 = vmatprep.mubr.f32.mxu0 0.0
      %5425 = vmatmul.mubr.f32.gmra.mxu0 %v4734
      %v5426 = vpop.f32.mrf.mxu0
      %v5427 = vadd.f32 %v4423, %v5426
      %v5428 = vpop.f32.mrf.mxu0
      %5429 = vmatprep.mubr.f32.mxu0 0.0
      %5430 = vmatmul.mubr.f32.gmra.mxu0 %v4736
      %v5431 = vpop.f32.mrf.mxu0
      %v5432 = vadd.f32 %v4423, %v5431
      %v5433 = vpop.f32.mrf.mxu0
      %5434 = vmatprep.mubr.f32.mxu0 0.0
      %5435 = vmatmul.mubr.f32.gmra.mxu0 %v4738
      %v5436 = vpop.f32.mrf.mxu0
      %v5437 = vadd.f32 %v4423, %v5436
      %v5438 = vpop.f32.mrf.mxu0
      %5439 = vmatprep.mubr.f32.mxu0 0.0
      %5440 = vmatmul.mubr.f32.gmra.mxu0 %v4740
      %v5441 = vpop.f32.mrf.mxu0
      %v5442 = vadd.f32 %v4423, %v5441
      %v5443 = vpop.f32.mrf.mxu0
      %5444 = vmatprep.mubr.f32.mxu0 0.0
      %5445 = vmatmul.mubr.f32.gmra.mxu0 %v4742
      %v5446 = vpop.f32.mrf.mxu0
      %v5447 = vadd.f32 %v4423, %v5446
      %v5448 = vpop.f32.mrf.mxu0
      %5449 = vmatprep.mubr.f32.mxu0 0.0
      %5450 = vmatmul.mubr.f32.gmra.mxu0 %v4744
      %v5451 = vpop.f32.mrf.mxu0
      %v5452 = vadd.f32 %v4423, %v5451
      %v5453 = vpop.f32.mrf.mxu0
      %5454 = vdwg.mxu0
      %5455 = vst.msk [vmem:[%s224] sm:$0xff] %vm4425, %v4817
      %5456 = vst.msk [vmem:[%s224 + $0x8] sm:$0xff] %vm4425, %v4822
      %5457 = vst.msk [vmem:[%s224 + $0x10] sm:$0xff] %vm4425, %v4827
      %5458 = vst.msk [vmem:[%s224 + $0x18] sm:$0xff] %vm4425, %v4832
      %5459 = vst.msk [vmem:[%s224 + $0x20] sm:$0xff] %vm4425, %v4837
      %5460 = vst.msk [vmem:[%s224 + $0x28] sm:$0xff] %vm4425, %v4842
      %5461 = vst.msk [vmem:[%s224 + $0x30] sm:$0xff] %vm4425, %v4847
      %5462 = vst.msk [vmem:[%s224 + $0x38] sm:$0xff] %vm4425, %v4852
      %5463 = vst.msk [vmem:[%s224 + $0x40] sm:$0xff] %vm4425, %v4857
      %5464 = vst.msk [vmem:[%s224 + $0x48] sm:$0xff] %vm4425, %v4862
      %5465 = vst.msk [vmem:[%s224 + $0x50] sm:$0xff] %vm4425, %v4867
      %5466 = vst.msk [vmem:[%s224 + $0x58] sm:$0xff] %vm4425, %v4872
      %5467 = vst.msk [vmem:[%s224 + $0x60] sm:$0xff] %vm4425, %v4877
      %5468 = vst.msk [vmem:[%s224 + $0x68] sm:$0xff] %vm4425, %v4882
      %5469 = vst.msk [vmem:[%s224 + $0x70] sm:$0xff] %vm4425, %v4887
      %5470 = vst.msk [vmem:[%s224 + $0x78] sm:$0xff] %vm4425, %v4892
      %5471 = vst.msk [vmem:[%s224 + $0x80] sm:$0xff] %vm4425, %v4897
      %5472 = vst.msk [vmem:[%s224 + $0x88] sm:$0xff] %vm4425, %v4902
      %5473 = vst.msk [vmem:[%s224 + $0x90] sm:$0xff] %vm4425, %v4907
      %5474 = vst.msk [vmem:[%s224 + $0x98] sm:$0xff] %vm4425, %v4912
      %5475 = vst.msk [vmem:[%s224 + $0xa0] sm:$0xff] %vm4425, %v4917
      %5476 = vst.msk [vmem:[%s224 + $0xa8] sm:$0xff] %vm4425, %v4922
      %5477 = vst.msk [vmem:[%s224 + $0xb0] sm:$0xff] %vm4425, %v4927
      %5478 = vst.msk [vmem:[%s224 + $0xb8] sm:$0xff] %vm4425, %v4932
      %5479 = vst.msk [vmem:[%s224 + $0xc0] sm:$0xff] %vm4425, %v4937
      %5480 = vst.msk [vmem:[%s224 + $0xc8] sm:$0xff] %vm4425, %v4942
      %5481 = vst.msk [vmem:[%s224 + $0xd0] sm:$0xff] %vm4425, %v4947
      %5482 = vst.msk [vmem:[%s224 + $0xd8] sm:$0xff] %vm4425, %v4952
      %5483 = vst.msk [vmem:[%s224 + $0xe0] sm:$0xff] %vm4425, %v4957
      %5484 = vst.msk [vmem:[%s224 + $0xe8] sm:$0xff] %vm4425, %v4962
      %5485 = vst.msk [vmem:[%s224 + $0xf0] sm:$0xff] %vm4425, %v4967
      %5486 = vst.msk [vmem:[%s224 + $0xf8] sm:$0xff] %vm4425, %v4972
      %5487 = vst.msk [vmem:[%s224 + $0x100] sm:$0xff] %vm4425, %v4977
      %5488 = vst.msk [vmem:[%s224 + $0x108] sm:$0xff] %vm4425, %v4982
      %5489 = vst.msk [vmem:[%s224 + $0x110] sm:$0xff] %vm4425, %v4987
      %5490 = vst.msk [vmem:[%s224 + $0x118] sm:$0xff] %vm4425, %v4992
      %5491 = vst.msk [vmem:[%s224 + $0x120] sm:$0xff] %vm4425, %v4997
      %5492 = vst.msk [vmem:[%s224 + $0x128] sm:$0xff] %vm4425, %v5002
      %5493 = vst.msk [vmem:[%s224 + $0x130] sm:$0xff] %vm4425, %v5007
      %5494 = vst.msk [vmem:[%s224 + $0x138] sm:$0xff] %vm4425, %v5012
      %5495 = vst.msk [vmem:[%s224 + $0x140] sm:$0xff] %vm4425, %v5017
      %5496 = vst.msk [vmem:[%s224 + $0x148] sm:$0xff] %vm4425, %v5022
      %5497 = vst.msk [vmem:[%s224 + $0x150] sm:$0xff] %vm4425, %v5027
      %5498 = vst.msk [vmem:[%s224 + $0x158] sm:$0xff] %vm4425, %v5032
      %5499 = vst.msk [vmem:[%s224 + $0x160] sm:$0xff] %vm4425, %v5037
      %5500 = vst.msk [vmem:[%s224 + $0x168] sm:$0xff] %vm4425, %v5042
      %5501 = vst.msk [vmem:[%s224 + $0x170] sm:$0xff] %vm4425, %v5047
      %5502 = vst.msk [vmem:[%s224 + $0x178] sm:$0xff] %vm4425, %v5052
      %5503 = vst.msk [vmem:[%s224 + $0x180] sm:$0xff] %vm4425, %v5057
      %5504 = vst.msk [vmem:[%s224 + $0x188] sm:$0xff] %vm4425, %v5062
      %5505 = vst.msk [vmem:[%s224 + $0x190] sm:$0xff] %vm4425, %v5067
      %5506 = vst.msk [vmem:[%s224 + $0x198] sm:$0xff] %vm4425, %v5072
      %5507 = vst.msk [vmem:[%s224 + $0x1a0] sm:$0xff] %vm4425, %v5077
      %5508 = vst.msk [vmem:[%s224 + $0x1a8] sm:$0xff] %vm4425, %v5082
      %5509 = vst.msk [vmem:[%s224 + $0x1b0] sm:$0xff] %vm4425, %v5087
      %5510 = vst.msk [vmem:[%s224 + $0x1b8] sm:$0xff] %vm4425, %v5092
      %5511 = vst.msk [vmem:[%s224 + $0x1c0] sm:$0xff] %vm4425, %v5097
      %5512 = vst.msk [vmem:[%s224 + $0x1c8] sm:$0xff] %vm4425, %v5102
      %5513 = vst.msk [vmem:[%s224 + $0x1d0] sm:$0xff] %vm4425, %v5107
      %5514 = vst.msk [vmem:[%s224 + $0x1d8] sm:$0xff] %vm4425, %v5112
      %5515 = vst.msk [vmem:[%s224 + $0x1e0] sm:$0xff] %vm4425, %v5117
      %5516 = vst.msk [vmem:[%s224 + $0x1e8] sm:$0xff] %vm4425, %v5122
      %5517 = vst.msk [vmem:[%s224 + $0x1f0] sm:$0xff] %vm4425, %v5127
      %5518 = vst.msk [vmem:[%s224 + $0x1f8] sm:$0xff] %vm4425, %v5132
      %5519 = vst.msk [vmem:[%s224 + $0x200] sm:$0xff] %vm4425, %v5137
      %5520 = vst.msk [vmem:[%s224 + $0x208] sm:$0xff] %vm4425, %v5142
      %5521 = vst.msk [vmem:[%s224 + $0x210] sm:$0xff] %vm4425, %v5147
      %5522 = vst.msk [vmem:[%s224 + $0x218] sm:$0xff] %vm4425, %v5152
      %5523 = vst.msk [vmem:[%s224 + $0x220] sm:$0xff] %vm4425, %v5157
      %5524 = vst.msk [vmem:[%s224 + $0x228] sm:$0xff] %vm4425, %v5162
      %5525 = vst.msk [vmem:[%s224 + $0x230] sm:$0xff] %vm4425, %v5167
      %5526 = vst.msk [vmem:[%s224 + $0x238] sm:$0xff] %vm4425, %v5172
      %5527 = vst.msk [vmem:[%s224 + $0x240] sm:$0xff] %vm4425, %v5177
      %5528 = vst.msk [vmem:[%s224 + $0x248] sm:$0xff] %vm4425, %v5182
      %5529 = vst.msk [vmem:[%s224 + $0x250] sm:$0xff] %vm4425, %v5187
      %5530 = vst.msk [vmem:[%s224 + $0x258] sm:$0xff] %vm4425, %v5192
      %5531 = vst.msk [vmem:[%s224 + $0x260] sm:$0xff] %vm4425, %v5197
      %5532 = vst.msk [vmem:[%s224 + $0x268] sm:$0xff] %vm4425, %v5202
      %5533 = vst.msk [vmem:[%s224 + $0x270] sm:$0xff] %vm4425, %v5207
      %5534 = vst.msk [vmem:[%s224 + $0x278] sm:$0xff] %vm4425, %v5212
      %5535 = vst.msk [vmem:[%s224 + $0x280] sm:$0xff] %vm4425, %v5217
      %5536 = vst.msk [vmem:[%s224 + $0x288] sm:$0xff] %vm4425, %v5222
      %5537 = vst.msk [vmem:[%s224 + $0x290] sm:$0xff] %vm4425, %v5227
      %5538 = vst.msk [vmem:[%s224 + $0x298] sm:$0xff] %vm4425, %v5232
      %5539 = vst.msk [vmem:[%s224 + $0x2a0] sm:$0xff] %vm4425, %v5237
      %5540 = vst.msk [vmem:[%s224 + $0x2a8] sm:$0xff] %vm4425, %v5242
      %5541 = vst.msk [vmem:[%s224 + $0x2b0] sm:$0xff] %vm4425, %v5247
      %5542 = vst.msk [vmem:[%s224 + $0x2b8] sm:$0xff] %vm4425, %v5252
      %5543 = vst.msk [vmem:[%s224 + $0x2c0] sm:$0xff] %vm4425, %v5257
      %5544 = vst.msk [vmem:[%s224 + $0x2c8] sm:$0xff] %vm4425, %v5262
      %5545 = vst.msk [vmem:[%s224 + $0x2d0] sm:$0xff] %vm4425, %v5267
      %5546 = vst.msk [vmem:[%s224 + $0x2d8] sm:$0xff] %vm4425, %v5272
      %5547 = vst.msk [vmem:[%s224 + $0x2e0] sm:$0xff] %vm4425, %v5277
      %5548 = vst.msk [vmem:[%s224 + $0x2e8] sm:$0xff] %vm4425, %v5282
      %5549 = vst.msk [vmem:[%s224 + $0x2f0] sm:$0xff] %vm4425, %v5287
      %5550 = vst.msk [vmem:[%s224 + $0x2f8] sm:$0xff] %vm4425, %v5292
      %5551 = vst.msk [vmem:[%s224 + $0x300] sm:$0xff] %vm4425, %v5297
      %5552 = vst.msk [vmem:[%s224 + $0x308] sm:$0xff] %vm4425, %v5302
      %5553 = vst.msk [vmem:[%s224 + $0x310] sm:$0xff] %vm4425, %v5307
      %5554 = vst.msk [vmem:[%s224 + $0x318] sm:$0xff] %vm4425, %v5312
      %5555 = vst.msk [vmem:[%s224 + $0x320] sm:$0xff] %vm4425, %v5317
      %5556 = vst.msk [vmem:[%s224 + $0x328] sm:$0xff] %vm4425, %v5322
      %5557 = vst.msk [vmem:[%s224 + $0x330] sm:$0xff] %vm4425, %v5327
      %5558 = vst.msk [vmem:[%s224 + $0x338] sm:$0xff] %vm4425, %v5332
      %5559 = vst.msk [vmem:[%s224 + $0x340] sm:$0xff] %vm4425, %v5337
      %5560 = vst.msk [vmem:[%s224 + $0x348] sm:$0xff] %vm4425, %v5342
      %5561 = vst.msk [vmem:[%s224 + $0x350] sm:$0xff] %vm4425, %v5347
      %5562 = vst.msk [vmem:[%s224 + $0x358] sm:$0xff] %vm4425, %v5352
      %5563 = vst.msk [vmem:[%s224 + $0x360] sm:$0xff] %vm4425, %v5357
      %5564 = vst.msk [vmem:[%s224 + $0x368] sm:$0xff] %vm4425, %v5362
      %5565 = vst.msk [vmem:[%s224 + $0x370] sm:$0xff] %vm4425, %v5367
      %5566 = vst.msk [vmem:[%s224 + $0x378] sm:$0xff] %vm4425, %v5372
      %5567 = vst.msk [vmem:[%s224 + $0x380] sm:$0xff] %vm4425, %v5377
      %5568 = vst.msk [vmem:[%s224 + $0x388] sm:$0xff] %vm4425, %v5382
      %5569 = vst.msk [vmem:[%s224 + $0x390] sm:$0xff] %vm4425, %v5387
      %5570 = vst.msk [vmem:[%s224 + $0x398] sm:$0xff] %vm4425, %v5392
      %5571 = vst.msk [vmem:[%s224 + $0x3a0] sm:$0xff] %vm4425, %v5397
      %5572 = vst.msk [vmem:[%s224 + $0x3a8] sm:$0xff] %vm4425, %v5402
      %5573 = vst.msk [vmem:[%s224 + $0x3b0] sm:$0xff] %vm4425, %v5407
      %5574 = vst.msk [vmem:[%s224 + $0x3b8] sm:$0xff] %vm4425, %v5412
      %5575 = vst.msk [vmem:[%s224 + $0x3c0] sm:$0xff] %vm4425, %v5417
      %5576 = vst.msk [vmem:[%s224 + $0x3c8] sm:$0xff] %vm4425, %v5422
      %5577 = vst.msk [vmem:[%s224 + $0x3d0] sm:$0xff] %vm4425, %v5427
      %5578 = vst.msk [vmem:[%s224 + $0x3d8] sm:$0xff] %vm4425, %v5432
      %5579 = vst.msk [vmem:[%s224 + $0x3e0] sm:$0xff] %vm4425, %v5437
      %5580 = vst.msk [vmem:[%s224 + $0x3e8] sm:$0xff] %vm4425, %v5442
      %5581 = vst.msk [vmem:[%s224 + $0x3f0] sm:$0xff] %vm4425, %v5447
      %5582 = vst.msk [vmem:[%s224 + $0x3f8] sm:$0xff] %vm4425, %v5452
      %p5583 = scmp.lt.s32.totalorder %s16, 1
      %s5584 = scalar_select %p5583, %s16, 1
      %s5585 = smul.addr %s5584, 128
      %s5586 = smul.addr %s5585, 8
      %s5587 = scalar_lea.vmem %s5, %s5586
      // Predicated region
      $region41: #{eucb_forward.1} parent=39 // pred_check
        %p5588 = pneg %p144
      $region42: #{eucb_forward.1} parent=39 // pred_check_branch
        %5590 = sbr.rel (%p5588) target = $region44
      $region43: #{eucb_forward.1} parent=39 // pred_region
        _
      $region44: #{eucb_forward.1} parent=39 // pred_fallthru
        _
    $region40: #{eucb_forward.1} parent=5 // pred_fallthru
      _
    %p5591 = scmp.le.s32.totalorder 2, %s11
    // Predicated region
    $region45: #{eucb_forward.1} parent=5 // pred_check
      %p5592 = pneg %p5591
    $region46: #{eucb_forward.1} parent=5 // pred_check_branch
      %5594 = sbr.rel (%p5592) target = $region48
    $region47: #{eucb_forward.1} parent=5 // pred_region
      %s5595 = ssub.s32 %s11, 2
      // Predicated region
      $region49: #{eucb_forward.1} parent=47 // pred_check
        %p5596 = pneg %p150
      $region50: #{eucb_forward.1} parent=47 // pred_check_branch
        %5598 = sbr.rel (%p5596) target = $region52
      $region51: #{eucb_forward.1} parent=47 // pred_region
        %p5599 = scmp.lt.s32.totalorder %s17, 1
        %s5600 = scalar_select %p5599, %s17, 1
        %s5601 = smul.addr %s5600, 128
        %s5602 = smul.addr %s5601, 8
        %s5603 = scalar_lea.vmem %s5, %s5602
      $region52: #{eucb_forward.1} parent=47 // pred_fallthru
        _
    $region48: #{eucb_forward.1} parent=5 // pred_fallthru
      _
  $region6: #{eucb_forward.1} parent=0 // loop_footer
    %s15 = sadd.s32 1, %s11
  $region7: #{eucb_forward.1} parent=0 // loop_footer_branch
    %10 = sbr.rel target = $region3
  $region8: #{eucb_forward.1} parent=0 // loop_exit
    _

</llo_original>
